<compile_context>
chip_gen: v5e
topology: v5e:2x2
jax: 0.10.0
libtpu: 0.0.40
codegen_flags: <defaults>
</compile_context>

<pallas_src>
import numpy as np
import jax
import jax.numpy as jnp
from jax.experimental import pallas as pl
from jax.experimental.pallas import tpu as pltpu


def _choose_q_tile(T):
    """Largest multiple-of-8 divisor of T that is <= 128 (else T itself)."""
    if T <= 128:
        return T
    for cand in range(128, 7, -8):
        if T % cand == 0:
            return cand
    return T


def prepare_params(P):
    """Host-side weight prep: fuse QKV and pre-cast matmul weights to bf16."""
    bf = jnp.bfloat16
    return {
        "wqkv": jnp.concatenate([P["wq"], P["wk"], P["wv"]], axis=1).astype(bf),
        "wfc": P["wfc"].astype(bf),
        "ln1_g": P["ln1_g"].astype(jnp.float32),
        "ln1_b": P["ln1_b"].astype(jnp.float32),
        "w1": P["w1"].astype(bf),
        "b1": P["b1"].astype(jnp.float32),
        "w2": P["w2"].astype(bf),
        "b2": P["b2"].astype(jnp.float32),
        "ln2_g": P["ln2_g"].astype(jnp.float32),
        "ln2_b": P["ln2_b"].astype(jnp.float32),
    }


def make_fft_block(B, T, d_model, n_head, d_k, d_v, d_inner, kernel_size):
    k0, k1 = kernel_size
    assert k0 % 2 == 1 and k1 % 2 == 1, "only odd conv kernel sizes supported"
    inv_temp = float(1.0 / np.power(d_k, 0.5))
    eps = 1e-5

    Hdk = n_head * d_k
    Hdv = n_head * d_v
    n_qkv = 2 * Hdk + Hdv
    TQ = _choose_q_tile(T)
    n_q = T // TQ
    VMEM_LIMIT = 64 * 1024 * 1024

    # ---------------- kernel 1: multi-head self-attention ----------------
    # grid = (B, n_q): batch parallel, q-tiles sequential (scratch reuse).
    def attn_kernel(x_ref, kmask_ref, wqkv_ref, wfc_ref, g_ref, beta_ref,
                    out_ref, attn_ref, q_sc, k_sc, v_sc, o_sc):
        bf = jnp.bfloat16
        f32 = jnp.float32
        qi = pl.program_id(1)

        # Fused QKV projection once per batch element, cached head-major in VMEM.
        @pl.when(qi == 0)
        def _():
            x_full = x_ref[0]                                   # [T, d_model] f32
            qkv = jnp.dot(x_full.astype(bf), wqkv_ref[...],
                          preferred_element_type=f32)           # [T, 2*Hdk+Hdv]
            for h in range(n_head):
                q_sc[h] = qkv[:, h * d_k:(h + 1) * d_k].astype(bf)
                k_sc[h] = qkv[:, Hdk + h * d_k:Hdk + (h + 1) * d_k].astype(bf)
                v_sc[h] = qkv[:, 2 * Hdk + h * d_v:2 * Hdk + (h + 1) * d_v].astype(bf)

        q0 = pl.multiple_of(qi * TQ, TQ)
        q = q_sc[:, pl.ds(q0, TQ), :]                           # [H, TQ, d_k] bf16
        k = k_sc[...]                                           # [H, T,  d_k] bf16
        v = v_sc[...]                                           # [H, T,  d_v] bf16

        # head-batched scores, f32 accumulation on the MXU
        scores = jnp.einsum("hqd,hkd->hqk", q, k,
                            preferred_element_type=f32) * inv_temp   # [H, TQ, T]
        bias = jnp.where(kmask_ref[0] > 0.5, -1e30, 0.0)        # [1, T] additive
        scores = scores + bias

        # softmax over keys (f32)
        m = jnp.max(scores, axis=-1, keepdims=True)
        e = jnp.exp(scores - m)
        s = jnp.sum(e, axis=-1, keepdims=True)
        p = e * pl.reciprocal(s, approx=True)
        p_bf = p.astype(bf)

        for h in range(n_head):                                 # bf16 attn writeback
            attn_ref[h, 0] = p_bf[h]

        o = jnp.einsum("hqk,hkd->hqd", p_bf, v,
                       preferred_element_type=f32)              # [H, TQ, d_v]
        # concat heads along lanes via scratch stores, then ONE output projection
        for h in range(n_head):
            o_sc[:, h * d_v:(h + 1) * d_v] = o[h].astype(bf)
        y = jnp.dot(o_sc[...], wfc_ref[...], preferred_element_type=f32)

        y = y + x_ref[0, pl.ds(q0, TQ), :]                      # residual (f32)
        mean = jnp.mean(y, axis=-1, keepdims=True)
        var = jnp.mean((y - mean) ** 2, axis=-1, keepdims=True)
        y = (y - mean) * jax.lax.rsqrt(var + eps) * g_ref[...] + beta_ref[...]
        out_ref[0] = y

    # ---------------- kernel 2: position-wise feed-forward ----------------
    def ffn_kernel(x_ref, m_ref, w1_ref, b1_ref, w2_ref, b2_ref,
                   g_ref, beta_ref, out_ref):
        bf = jnp.bfloat16
        f32 = jnp.float32
        x = x_ref[0]                      # [T, d_model] f32
        sm = m_ref[0]                     # [T, 1] f32, 1.0 == padded position

        x = jnp.where(sm > 0.5, 0.0, x)   # masked_fill(mask.unsqueeze(-1), 0)
        residual = x

        def conv_same(inp_f32, w_ref, bias, k, d_out):
            # 'same' conv as aligned per-tap matmuls; shift the RESULT rows and
            # zero the out-of-range boundary rows before accumulating.
            pad = (k - 1) // 2
            inp_bf = inp_f32.astype(bf)
            acc = jnp.zeros((T, d_out), f32) + bias              # bias hoisted
            for tap in range(k):
                y = jnp.dot(inp_bf, w_ref[tap], preferred_element_type=f32)
                shift = pad - tap         # out[t] += y[t - shift]
                if shift > 0:
                    y = jnp.concatenate(
                        [jnp.zeros((shift, d_out), f32), y[:T - shift, :]], axis=0)
                elif shift < 0:
                    y = jnp.concatenate(
                        [y[-shift:, :], jnp.zeros((-shift, d_out), f32)], axis=0)
                acc = acc + y
            return acc

        h = conv_same(x, w1_ref, b1_ref[...], k0, d_inner)
        h = jnp.maximum(h, 0.0)                                  # ReLU (f32)
        y = conv_same(h, w2_ref, b2_ref[...], k1, d_model)

        y = y + residual
        mean = jnp.mean(y, axis=-1, keepdims=True)
        var = jnp.mean((y - mean) ** 2, axis=-1, keepdims=True)
        y = (y - mean) * jax.lax.rsqrt(var + eps) * g_ref[...] + beta_ref[...]
        y = jnp.where(sm > 0.5, 0.0, y)                          # final mask fill
        out_ref[0] = y

    full2_a = lambda s: pl.BlockSpec(s, lambda b, qi: (0, 0))
    full2_f = lambda s: pl.BlockSpec(s, lambda b: (0, 0))
    full3_f = lambda s: pl.BlockSpec(s, lambda b: (0, 0, 0))

    attn_call = pl.pallas_call(
        attn_kernel,
        out_shape=(jax.ShapeDtypeStruct((B, T, d_model), jnp.float32),
                   jax.ShapeDtypeStruct((n_head, B, T, T), jnp.bfloat16)),
        grid_spec=pltpu.PrefetchScalarGridSpec(
            num_scalar_prefetch=0,
            grid=(B, n_q),
            in_specs=[
                pl.BlockSpec((1, T, d_model), lambda b, qi: (b, 0, 0)),   # x
                pl.BlockSpec((1, 1, T), lambda b, qi: (b, 0, 0)),         # key-pad mask
                full2_a((d_model, n_qkv)),                                # Wqkv (bf16)
                full2_a((Hdv, d_model)),                                  # Wfc  (bf16)
                full2_a((1, d_model)),                                    # ln1 gamma
                full2_a((1, d_model)),                                    # ln1 beta
            ],
            out_specs=[
                pl.BlockSpec((1, TQ, d_model), lambda b, qi: (b, qi, 0)),
                pl.BlockSpec((n_head, 1, TQ, T), lambda b, qi: (0, b, qi, 0)),
            ],
            scratch_shapes=[
                pltpu.VMEM((n_head, T, d_k), jnp.bfloat16),   # Q (head-major)
                pltpu.VMEM((n_head, T, d_k), jnp.bfloat16),   # K
                pltpu.VMEM((n_head, T, d_v), jnp.bfloat16),   # V
                pltpu.VMEM((TQ, Hdv), jnp.bfloat16),          # concat(head outs)
            ]),
        compiler_params=pltpu.CompilerParams(
            dimension_semantics=("parallel", "arbitrary"),
            vmem_limit_bytes=VMEM_LIMIT),
    )

    ffn_call = pl.pallas_call(
        ffn_kernel,
        out_shape=jax.ShapeDtypeStruct((B, T, d_model), jnp.float32),
        grid_spec=pltpu.PrefetchScalarGridSpec(
            num_scalar_prefetch=0,
            grid=(B,),
            in_specs=[
                pl.BlockSpec((1, T, d_model), lambda b: (b, 0, 0)),       # x
                pl.BlockSpec((1, T, 1), lambda b: (b, 0, 0)),             # seq mask
                full3_f((k0, d_model, d_inner)),                          # W1 (bf16)
                full2_f((1, d_inner)),                                    # b1
                full3_f((k1, d_inner, d_model)),                          # W2 (bf16)
                full2_f((1, d_model)),                                    # b2
                full2_f((1, d_model)),                                    # ln2 gamma
                full2_f((1, d_model)),                                    # ln2 beta
            ],
            out_specs=pl.BlockSpec((1, T, d_model), lambda b: (b, 0, 0))),
        compiler_params=pltpu.CompilerParams(
            dimension_semantics=("parallel",),
            vmem_limit_bytes=VMEM_LIMIT),
    )

    def forward(x, pad_mask, PP):
        # pad_mask: [B, T] (True / 1.0 == padded).  Dropout == identity (eval).
        kmask = pad_mask.astype(jnp.float32).reshape(B, 1, T)
        smask = pad_mask.astype(jnp.float32).reshape(B, T, 1)
        enc1, attn = attn_call(x, kmask, PP["wqkv"], PP["wfc"],
                               PP["ln1_g"], PP["ln1_b"])
        out = ffn_call(enc1, smask, PP["w1"], PP["b1"], PP["w2"], PP["b2"],
                       PP["ln2_g"], PP["ln2_b"])
        # [n_head, B, T, T] -> [n_head*B, T, T] (same ordering as the torch module)
        return out, attn.reshape(n_head * B, T, T)

    return forward


# -------- pure-JAX reference (same bf16-in / f32-accumulate policy) ----------
def reference_forward(x, pad_mask, P, n_head, d_k, d_v, kernel_size):
    B, T, D = x.shape
    k0, k1 = kernel_size
    d_inner = P["b1"].shape[-1]
    bf = jnp.bfloat16
    f32 = jnp.float32
    inv_temp = float(1.0 / np.power(d_k, 0.5))

    def mm(a, b):
        return jnp.dot(a.astype(bf), b.astype(bf), preferred_element_type=f32)

    def ln(y, g, b):
        m = jnp.mean(y, -1, keepdims=True)
        v = jnp.mean((y - m) ** 2, -1, keepdims=True)
        return (y - m) * jax.lax.rsqrt(v + 1e-5) * g + b

    q = mm(x, P["wq"]).astype(bf).reshape(B, T, n_head, d_k).transpose(0, 2, 1, 3)
    k = mm(x, P["wk"]).astype(bf).reshape(B, T, n_head, d_k).transpose(0, 2, 1, 3)
    v = mm(x, P["wv"]).astype(bf).reshape(B, T, n_head, d_v).transpose(0, 2, 1, 3)
    scores = jnp.einsum("bhqd,bhkd->bhqk", q, k,
                        preferred_element_type=f32) * inv_temp
    scores = jnp.where(pad_mask[:, None, None, :], -jnp.inf, scores)
    p = jax.nn.softmax(scores, axis=-1)
    p_bf = p.astype(bf)
    o = jnp.einsum("bhqk,bhkd->bhqd", p_bf, v, preferred_element_type=f32)
    o = o.transpose(0, 2, 1, 3).reshape(B, T, n_head * d_v)
    y = ln(mm(o, P["wfc"]) + x, P["ln1_g"], P["ln1_b"])
    attn = p_bf.transpose(1, 0, 2, 3).reshape(n_head * B, T, T)

    y = jnp.where(pad_mask[..., None], 0.0, y)
    res = y
    pad0 = (k0 - 1) // 2
    yp = jnp.pad(y, ((0, 0), (pad0, pad0), (0, 0)))
    h = jnp.zeros((B, T, d_inner), f32) + P["b1"]
    for tap in range(k0):
        h = h + mm(yp[:, tap:tap + T, :], P["w1"][tap])
    h = jnp.maximum(h, 0.0)
    pad1 = (k1 - 1) // 2
    hp = jnp.pad(h, ((0, 0), (pad1, pad1), (0, 0)))
    y2 = jnp.zeros((B, T, D), f32) + P["b2"]
    for tap in range(k1):
        y2 = y2 + mm(hp[:, tap:tap + T, :], P["w2"][tap])
    y2 = ln(y2 + res, P["ln2_g"], P["ln2_b"])
    y2 = jnp.where(pad_mask[..., None], 0.0, y2)
    return y2, attn


if __name__ == "__main__":
    # Small but lane-dense, q-tiled shapes (T=256 -> two q-tiles of 128).
    B, T = 2, 256
    d_model, n_head, d_k, d_v, d_inner = 128, 2, 64, 64, 256
    kernel_size = (3, 3)
    k0, k1 = kernel_size

    key = jax.random.PRNGKey(0)
    ks = jax.random.split(key, 10)

    def xavier(k, fan_in, fan_out):
        lim = float(np.sqrt(6.0 / (fan_in + fan_out)))
        return jax.random.uniform(k, (fan_in, fan_out), jnp.float32, -lim, lim)

    def uni(k, shape, lim):
        return jax.random.uniform(k, shape, jnp.float32, -lim, lim)

    # Linear weights stored as [in, out]; conv weights as [k, in_ch, out_ch].
    P = {
        "wq": xavier(ks[0], d_model, n_head * d_k),
        "wk": xavier(ks[1], d_model, n_head * d_k),
        "wv": xavier(ks[2], d_model, n_head * d_v),
        "wfc": xavier(ks[3], n_head * d_v, d_model),
        "ln1_g": jnp.ones((1, d_model), jnp.float32),
        "ln1_b": jnp.zeros((1, d_model), jnp.float32),
        "w1": uni(ks[4], (k0, d_model, d_inner), float(np.sqrt(1.0 / (d_model * k0)))),
        "b1": uni(ks[5], (1, d_inner), float(np.sqrt(1.0 / (d_model * k0)))),
        "w2": uni(ks[6], (k1, d_inner, d_model), float(np.sqrt(1.0 / (d_inner * k1)))),
        "b2": uni(ks[7], (1, d_model), float(np.sqrt(1.0 / (d_inner * k1)))),
        "ln2_g": jnp.ones((1, d_model), jnp.float32),
        "ln2_b": jnp.zeros((1, d_model), jnp.float32),
    }

    x = jax.random.normal(ks[8], (B, T, d_model), jnp.float32)

    # padding mask (True == padded), typical FastSpeech usage
    lengths = jnp.array([T, T - 57], dtype=jnp.int32)
    positions = jnp.arange(T, dtype=jnp.int32)
    pad_mask = positions[None, :] >= lengths[:, None]            # [B, T] bool

    fft_block = make_fft_block(B, T, d_model, n_head, d_k, d_v, d_inner, kernel_size)
    PP = prepare_params(P)

    out, attn = fft_block(x, pad_mask, PP)
    out = jax.block_until_ready(out)
    attn = jax.block_until_ready(attn)

    out_ref, attn_ref = reference_forward(x, pad_mask, P, n_head, d_k, d_v, kernel_size)

    np.testing.assert_allclose(np.asarray(out), np.asarray(out_ref),
                               atol=2e-2, rtol=2e-2)
    np.testing.assert_allclose(np.asarray(attn.astype(jnp.float32)),
                               np.asarray(attn_ref.astype(jnp.float32)),
                               atol=1e-2, rtol=1e-2)

    print("KERNEL_OK")
</pallas_src>

<mosaic_0001>
module attributes {stable_mosaic.version = 11 : i64} {
  func.func @attn_kernel(%arg0: i32, %arg1: i32, %arg2: memref<1x256x128xf32, #tpu.memory_space<vmem>>, %arg3: memref<1x1x256xf32, #tpu.memory_space<vmem>>, %arg4: memref<128x384xbf16, #tpu.memory_space<vmem>>, %arg5: memref<128x128xbf16, #tpu.memory_space<vmem>>, %arg6: memref<1x128xf32, #tpu.memory_space<vmem>>, %arg7: memref<1x128xf32, #tpu.memory_space<vmem>>, %arg8: memref<1x128x128xf32, #tpu.memory_space<vmem>>, %arg9: memref<2x1x128x256xbf16, #tpu.memory_space<vmem>>, %arg10: memref<2x256x64xbf16, #tpu.memory_space<vmem>>, %arg11: memref<2x256x64xbf16, #tpu.memory_space<vmem>>, %arg12: memref<2x256x64xbf16, #tpu.memory_space<vmem>>, %arg13: memref<128x128xbf16, #tpu.memory_space<vmem>>) attributes {dimension_semantics = [#tpu.dimension_semantics<parallel>, #tpu.dimension_semantics<arbitrary>], iteration_bounds = array<i64: 2, 2>, scalar_prefetch = 0 : i64, scratch_operands = 4 : i64, tpu.core_type = #tpu.core_type<tc>, window_params = [{transform_indices = @transform_0, window_bounds = array<i64: 1, 256, 128>}, {transform_indices = @transform_1, window_bounds = array<i64: 1, 1, 256>}, {pipeline_mode = #tpu.pipeline_mode<synchronous>, transform_indices = @transform_2, window_bounds = array<i64: 128, 384>}, {pipeline_mode = #tpu.pipeline_mode<synchronous>, transform_indices = @transform_3, window_bounds = array<i64: 128, 128>}, {pipeline_mode = #tpu.pipeline_mode<synchronous>, transform_indices = @transform_4, window_bounds = array<i64: 1, 128>}, {pipeline_mode = #tpu.pipeline_mode<synchronous>, transform_indices = @transform_5, window_bounds = array<i64: 1, 128>}, {transform_indices = @transform_6, window_bounds = array<i64: 1, 128, 128>}, {transform_indices = @transform_7, window_bounds = array<i64: 2, 1, 128, 256>}]} {
    %c0_i32 = arith.constant 0 : i32
    %0 = arith.cmpi eq, %arg1, %c0_i32 : i32
    %1 = arith.extui %0 : i1 to i32
    %c0_i32_0 = arith.constant 0 : i32
    %2 = arith.cmpi ne, %1, %c0_i32_0 : i32
    scf.if %2 {
      %c0_47 = arith.constant 0 : index
      %c0_48 = arith.constant 0 : index
      %c0_49 = arith.constant 0 : index
      %86 = vector.load %arg2[%c0_47, %c0_48, %c0_49] : memref<1x256x128xf32, #tpu.memory_space<vmem>>, vector<1x256x128xf32>
      %87 = vector.shape_cast %86 : vector<1x256x128xf32> to vector<256x128xf32>
      %88 = arith.truncf %87 : vector<256x128xf32> to vector<256x128xbf16>
      %c0_50 = arith.constant 0 : index
      %c0_51 = arith.constant 0 : index
      %89 = vector.load %arg4[%c0_50, %c0_51] : memref<128x384xbf16, #tpu.memory_space<vmem>>, vector<128x384xbf16>
      %cst_52 = arith.constant dense<0.000000e+00> : vector<256x384xf32>
      %90 = tpu.matmul %88, %89, %cst_52 {dimension_numbers = #tpu.dot_dimension_numbers<[1], [0], [0], [1], [0, 0, 1, 1], [], []>} : vector<256x128xbf16>, vector<128x384xbf16>, vector<256x384xf32> -> vector<256x384xf32>
      %91 = vector.extract_strided_slice %90 {offsets = [0, 0], sizes = [256, 64], strides = [1, 1]} : vector<256x384xf32> to vector<256x64xf32>
      %92 = arith.truncf %91 : vector<256x64xf32> to vector<256x64xbf16>
      %c0_53 = arith.constant 0 : index
      %c0_54 = arith.constant 0 : index
      %c0_55 = arith.constant 0 : index
      %93 = vector.load %arg10[%c0_53, %c0_54, %c0_55] : memref<2x256x64xbf16, #tpu.memory_space<vmem>>, vector<1x256x64xbf16>
      %94 = vector.shape_cast %93 : vector<1x256x64xbf16> to vector<256x64xbf16>
      %95 = vector.shape_cast %92 : vector<256x64xbf16> to vector<1x256x64xbf16>
      tpu.vector_store %arg10[%c0_53, %c0_54, %c0_55], %95 {strides = array<i32>} : memref<2x256x64xbf16, #tpu.memory_space<vmem>>, vector<1x256x64xbf16>,
      %96 = vector.extract_strided_slice %90 {offsets = [0, 128], sizes = [256, 64], strides = [1, 1]} : vector<256x384xf32> to vector<256x64xf32>
      %97 = arith.truncf %96 : vector<256x64xf32> to vector<256x64xbf16>
      %c0_56 = arith.constant 0 : index
      %c0_57 = arith.constant 0 : index
      %c0_58 = arith.constant 0 : index
      %98 = vector.load %arg11[%c0_56, %c0_57, %c0_58] : memref<2x256x64xbf16, #tpu.memory_space<vmem>>, vector<1x256x64xbf16>
      %99 = vector.shape_cast %98 : vector<1x256x64xbf16> to vector<256x64xbf16>
      %100 = vector.shape_cast %97 : vector<256x64xbf16> to vector<1x256x64xbf16>
      tpu.vector_store %arg11[%c0_56, %c0_57, %c0_58], %100 {strides = array<i32>} : memref<2x256x64xbf16, #tpu.memory_space<vmem>>, vector<1x256x64xbf16>,
      %101 = vector.extract_strided_slice %90 {offsets = [0, 256], sizes = [256, 64], strides = [1, 1]} : vector<256x384xf32> to vector<256x64xf32>
      %102 = arith.truncf %101 : vector<256x64xf32> to vector<256x64xbf16>
      %c0_59 = arith.constant 0 : index
      %c0_60 = arith.constant 0 : index
      %c0_61 = arith.constant 0 : index
      %103 = vector.load %arg12[%c0_59, %c0_60, %c0_61] : memref<2x256x64xbf16, #tpu.memory_space<vmem>>, vector<1x256x64xbf16>
      %104 = vector.shape_cast %103 : vector<1x256x64xbf16> to vector<256x64xbf16>
      %105 = vector.shape_cast %102 : vector<256x64xbf16> to vector<1x256x64xbf16>
      tpu.vector_store %arg12[%c0_59, %c0_60, %c0_61], %105 {strides = array<i32>} : memref<2x256x64xbf16, #tpu.memory_space<vmem>>, vector<1x256x64xbf16>,
      %106 = vector.extract_strided_slice %90 {offsets = [0, 64], sizes = [256, 64], strides = [1, 1]} : vector<256x384xf32> to vector<256x64xf32>
      %107 = arith.truncf %106 : vector<256x64xf32> to vector<256x64xbf16>
      %c1_62 = arith.constant 1 : index
      %c0_63 = arith.constant 0 : index
      %c0_64 = arith.constant 0 : index
      %108 = vector.load %arg10[%c1_62, %c0_63, %c0_64] : memref<2x256x64xbf16, #tpu.memory_space<vmem>>, vector<1x256x64xbf16>
      %109 = vector.shape_cast %108 : vector<1x256x64xbf16> to vector<256x64xbf16>
      %110 = vector.shape_cast %107 : vector<256x64xbf16> to vector<1x256x64xbf16>
      tpu.vector_store %arg10[%c1_62, %c0_63, %c0_64], %110 {strides = array<i32>} : memref<2x256x64xbf16, #tpu.memory_space<vmem>>, vector<1x256x64xbf16>,
      %111 = vector.extract_strided_slice %90 {offsets = [0, 192], sizes = [256, 64], strides = [1, 1]} : vector<256x384xf32> to vector<256x64xf32>
      %112 = arith.truncf %111 : vector<256x64xf32> to vector<256x64xbf16>
      %c1_65 = arith.constant 1 : index
      %c0_66 = arith.constant 0 : index
      %c0_67 = arith.constant 0 : index
      %113 = vector.load %arg11[%c1_65, %c0_66, %c0_67] : memref<2x256x64xbf16, #tpu.memory_space<vmem>>, vector<1x256x64xbf16>
      %114 = vector.shape_cast %113 : vector<1x256x64xbf16> to vector<256x64xbf16>
      %115 = vector.shape_cast %112 : vector<256x64xbf16> to vector<1x256x64xbf16>
      tpu.vector_store %arg11[%c1_65, %c0_66, %c0_67], %115 {strides = array<i32>} : memref<2x256x64xbf16, #tpu.memory_space<vmem>>, vector<1x256x64xbf16>,
      %116 = vector.extract_strided_slice %90 {offsets = [0, 320], sizes = [256, 64], strides = [1, 1]} : vector<256x384xf32> to vector<256x64xf32>
      %117 = arith.truncf %116 : vector<256x64xf32> to vector<256x64xbf16>
      %c1_68 = arith.constant 1 : index
      %c0_69 = arith.constant 0 : index
      %c0_70 = arith.constant 0 : index
      %118 = vector.load %arg12[%c1_68, %c0_69, %c0_70] : memref<2x256x64xbf16, #tpu.memory_space<vmem>>, vector<1x256x64xbf16>
      %119 = vector.shape_cast %118 : vector<1x256x64xbf16> to vector<256x64xbf16>
      %120 = vector.shape_cast %117 : vector<256x64xbf16> to vector<1x256x64xbf16>
      tpu.vector_store %arg12[%c1_68, %c0_69, %c0_70], %120 {strides = array<i32>} : memref<2x256x64xbf16, #tpu.memory_space<vmem>>, vector<1x256x64xbf16>,
    } else {
    }
    %c128_i32 = arith.constant 128 : i32
    %3 = arith.muli %arg1, %c128_i32 : i32
    %4 = tpu.assume_multiple %3, 128 : i32
    %c0 = arith.constant 0 : index
    %5 = arith.index_cast %4 : i32 to index
    %c0_1 = arith.constant 0 : index
    %6 = vector.load %arg10[%c0, %5, %c0_1] : memref<2x256x64xbf16, #tpu.memory_space<vmem>>, vector<2x128x64xbf16>
    %c0_2 = arith.constant 0 : index
    %c0_3 = arith.constant 0 : index
    %c0_4 = arith.constant 0 : index
    %7 = vector.load %arg11[%c0_2, %c0_3, %c0_4] : memref<2x256x64xbf16, #tpu.memory_space<vmem>>, vector<2x256x64xbf16>
    %c0_5 = arith.constant 0 : index
    %c0_6 = arith.constant 0 : index
    %c0_7 = arith.constant 0 : index
    %8 = vector.load %arg12[%c0_5, %c0_6, %c0_7] : memref<2x256x64xbf16, #tpu.memory_space<vmem>>, vector<2x256x64xbf16>
    "tpu.trace_start"() <{level = 10 : i32, message = "hqd,hkd->hqk"}> : () -> ()
    %cst = arith.constant dense<0.000000e+00> : vector<2x128x256xf32>
    %9 = tpu.matmul %6, %7, %cst {dimension_numbers = #tpu.dot_dimension_numbers<[2], [2], [1], [1], [0, 0, 0, 1, 1, 1], [0], [0]>} : vector<2x128x64xbf16>, vector<2x256x64xbf16>, vector<2x128x256xf32> -> vector<2x128x256xf32>
    "tpu.trace_stop"() : () -> ()
    %cst_8 = arith.constant 1.250000e-01 : f32
    %10 = vector.broadcast %cst_8 : f32 to vector<2x128x256xf32>
    %11 = arith.mulf %9, %10 : vector<2x128x256xf32>
    %c0_9 = arith.constant 0 : index
    %c0_10 = arith.constant 0 : index
    %c0_11 = arith.constant 0 : index
    %12 = vector.load %arg3[%c0_9, %c0_10, %c0_11] : memref<1x1x256xf32, #tpu.memory_space<vmem>>, vector<1x1x256xf32>
    %13 = vector.shape_cast %12 : vector<1x1x256xf32> to vector<1x256xf32>
    %cst_12 = arith.constant 5.000000e-01 : f32
    %14 = vector.broadcast %cst_12 : f32 to vector<1x256xf32>
    %15 = arith.cmpf ogt, %13, %14 : vector<1x256xf32>
    %cst_13 = arith.constant -1.000000e+30 : f32
    %cst_14 = arith.constant 0.000000e+00 : f32
    %16 = vector.broadcast %cst_13 : f32 to vector<1x256xf32>
    %17 = vector.broadcast %cst_14 : f32 to vector<1x256xf32>
    %18 = arith.select %15, %16, %17 : vector<1x256xi1>, vector<1x256xf32>
    %19 = vector.shape_cast %18 : vector<1x256xf32> to vector<1x1x256xf32>
    %20 = vector.broadcast %19 : vector<1x1x256xf32> to vector<2x128x256xf32>
    %21 = arith.addf %11, %20 : vector<2x128x256xf32>
    %cst_15 = arith.constant dense<0xFF800000> : vector<2x128xf32>
    %22 = vector.multi_reduction <maximumf>, %21, %cst_15 [2] : vector<2x128x256xf32> to vector<2x128xf32>
    %23 = vector.shape_cast %22 : vector<2x128xf32> to vector<2x128x1xf32>
    %24 = vector.broadcast %23 : vector<2x128x1xf32> to vector<2x128x256xf32>
    %25 = arith.subf %21, %24 : vector<2x128x256xf32>
    %26 = math.exp %25 : vector<2x128x256xf32>
    %cst_16 = arith.constant dense<0.000000e+00> : vector<2x128xf32>
    %27 = vector.multi_reduction <add>, %26, %cst_16 [2] : vector<2x128x256xf32> to vector<2x128xf32>
    %28 = vector.shape_cast %27 : vector<2x128xf32> to vector<2x128x1xf32>
    %29 = tpu.reciprocal %28 {approx = true} : vector<2x128x1xf32> -> vector<2x128x1xf32>
    %30 = vector.broadcast %29 : vector<2x128x1xf32> to vector<2x128x256xf32>
    %31 = arith.mulf %26, %30 : vector<2x128x256xf32>
    %32 = arith.truncf %31 : vector<2x128x256xf32> to vector<2x128x256xbf16>
    %33 = vector.extract_strided_slice %32 {offsets = [0, 0, 0], sizes = [1, 128, 256], strides = [1, 1, 1]} : vector<2x128x256xbf16> to vector<1x128x256xbf16>
    %34 = vector.shape_cast %33 : vector<1x128x256xbf16> to vector<128x256xbf16>
    %c0_17 = arith.constant 0 : index
    %c0_18 = arith.constant 0 : index
    %c0_19 = arith.constant 0 : index
    %c0_20 = arith.constant 0 : index
    %35 = vector.load %arg9[%c0_17, %c0_18, %c0_19, %c0_20] : memref<2x1x128x256xbf16, #tpu.memory_space<vmem>>, vector<1x1x128x256xbf16>
    %36 = vector.shape_cast %35 : vector<1x1x128x256xbf16> to vector<128x256xbf16>
    %37 = vector.shape_cast %34 : vector<128x256xbf16> to vector<1x1x128x256xbf16>
    tpu.vector_store %arg9[%c0_17, %c0_18, %c0_19, %c0_20], %37 {strides = array<i32>} : memref<2x1x128x256xbf16, #tpu.memory_space<vmem>>, vector<1x1x128x256xbf16>,
    %38 = vector.extract_strided_slice %32 {offsets = [1, 0, 0], sizes = [1, 128, 256], strides = [1, 1, 1]} : vector<2x128x256xbf16> to vector<1x128x256xbf16>
    %39 = vector.shape_cast %38 : vector<1x128x256xbf16> to vector<128x256xbf16>
    %c1 = arith.constant 1 : index
    %c0_21 = arith.constant 0 : index
    %c0_22 = arith.constant 0 : index
    %c0_23 = arith.constant 0 : index
    %40 = vector.load %arg9[%c1, %c0_21, %c0_22, %c0_23] : memref<2x1x128x256xbf16, #tpu.memory_space<vmem>>, vector<1x1x128x256xbf16>
    %41 = vector.shape_cast %40 : vector<1x1x128x256xbf16> to vector<128x256xbf16>
    %42 = vector.shape_cast %39 : vector<128x256xbf16> to vector<1x1x128x256xbf16>
    tpu.vector_store %arg9[%c1, %c0_21, %c0_22, %c0_23], %42 {strides = array<i32>} : memref<2x1x128x256xbf16, #tpu.memory_space<vmem>>, vector<1x1x128x256xbf16>,
    "tpu.trace_start"() <{level = 10 : i32, message = "hqk,hkd->hqd"}> : () -> ()
    %cst_24 = arith.constant dense<0.000000e+00> : vector<2x128x64xf32>
    %43 = tpu.matmul %32, %8, %cst_24 {dimension_numbers = #tpu.dot_dimension_numbers<[2], [1], [1], [2], [0, 0, 0, 1, 1, 2], [0], [0]>} : vector<2x128x256xbf16>, vector<2x256x64xbf16>, vector<2x128x64xf32> -> vector<2x128x64xf32>
    "tpu.trace_stop"() : () -> ()
    %44 = vector.extract_strided_slice %43 {offsets = [0, 0, 0], sizes = [1, 128, 64], strides = [1, 1, 1]} : vector<2x128x64xf32> to vector<1x128x64xf32>
    %45 = vector.shape_cast %44 : vector<1x128x64xf32> to vector<128x64xf32>
    %46 = arith.truncf %45 : vector<128x64xf32> to vector<128x64xbf16>
    %c0_25 = arith.constant 0 : index
    %c0_26 = arith.constant 0 : index
    %47 = vector.load %arg13[%c0_25, %c0_26] : memref<128x128xbf16, #tpu.memory_space<vmem>>, vector<128x64xbf16>
    tpu.vector_store %arg13[%c0_25, %c0_26], %46 {strides = array<i32>} : memref<128x128xbf16, #tpu.memory_space<vmem>>, vector<128x64xbf16>,
    %48 = vector.extract_strided_slice %43 {offsets = [1, 0, 0], sizes = [1, 128, 64], strides = [1, 1, 1]} : vector<2x128x64xf32> to vector<1x128x64xf32>
    %49 = vector.shape_cast %48 : vector<1x128x64xf32> to vector<128x64xf32>
    %50 = arith.truncf %49 : vector<128x64xf32> to vector<128x64xbf16>
    %c0_27 = arith.constant 0 : index
    %c64 = arith.constant 64 : index
    %51 = vector.load %arg13[%c0_27, %c64] : memref<128x128xbf16, #tpu.memory_space<vmem>>, vector<128x64xbf16>
    tpu.vector_store %arg13[%c0_27, %c64], %50 {strides = array<i32>} : memref<128x128xbf16, #tpu.memory_space<vmem>>, vector<128x64xbf16>,
    %c0_28 = arith.constant 0 : index
    %c0_29 = arith.constant 0 : index
    %52 = vector.load %arg13[%c0_28, %c0_29] : memref<128x128xbf16, #tpu.memory_space<vmem>>, vector<128x128xbf16>
    %c0_30 = arith.constant 0 : index
    %c0_31 = arith.constant 0 : index
    %53 = vector.load %arg5[%c0_30, %c0_31] : memref<128x128xbf16, #tpu.memory_space<vmem>>, vector<128x128xbf16>
    %cst_32 = arith.constant dense<0.000000e+00> : vector<128x128xf32>
    %54 = tpu.matmul %52, %53, %cst_32 {dimension_numbers = #tpu.dot_dimension_numbers<[1], [0], [0], [1], [0, 0, 1, 1], [], []>} : vector<128x128xbf16>, vector<128x128xbf16>, vector<128x128xf32> -> vector<128x128xf32>
    %c0_33 = arith.constant 0 : index
    %55 = arith.index_cast %4 : i32 to index
    %c0_34 = arith.constant 0 : index
    %56 = vector.load %arg2[%c0_33, %55, %c0_34] : memref<1x256x128xf32, #tpu.memory_space<vmem>>, vector<1x128x128xf32>
    %57 = vector.shape_cast %56 : vector<1x128x128xf32> to vector<128x128xf32>
    %58 = arith.addf %54, %57 : vector<128x128xf32>
    %cst_35 = arith.constant dense<0.000000e+00> : vector<128xf32>
    %59 = vector.multi_reduction <add>, %58, %cst_35 [1] : vector<128x128xf32> to vector<128xf32>
    %60 = vector.shape_cast %59 : vector<128xf32> to vector<128x1xf32>
    %cst_36 = arith.constant 1.280000e+02 : f32
    %61 = vector.broadcast %cst_36 : f32 to vector<128x1xf32>
    %62 = arith.divf %60, %61 : vector<128x1xf32>
    %63 = vector.broadcast %62 : vector<128x1xf32> to vector<128x128xf32>
    %64 = arith.subf %58, %63 : vector<128x128xf32>
    %65 = arith.mulf %64, %64 : vector<128x128xf32>
    %cst_37 = arith.constant dense<0.000000e+00> : vector<128xf32>
    %66 = vector.multi_reduction <add>, %65, %cst_37 [1] : vector<128x128xf32> to vector<128xf32>
    %67 = vector.shape_cast %66 : vector<128xf32> to vector<128x1xf32>
    %cst_38 = arith.constant 1.280000e+02 : f32
    %68 = vector.broadcast %cst_38 : f32 to vector<128x1xf32>
    %69 = arith.divf %67, %68 : vector<128x1xf32>
    %70 = vector.broadcast %62 : vector<128x1xf32> to vector<128x128xf32>
    %71 = arith.subf %58, %70 : vector<128x128xf32>
    %cst_39 = arith.constant 9.99999974E-6 : f32
    %72 = vector.broadcast %cst_39 : f32 to vector<128x1xf32>
    %73 = arith.addf %69, %72 : vector<128x1xf32>
    %74 = math.rsqrt %73 : vector<128x1xf32>
    %75 = vector.broadcast %74 : vector<128x1xf32> to vector<128x128xf32>
    %76 = arith.mulf %71, %75 : vector<128x128xf32>
    %c0_40 = arith.constant 0 : index
    %c0_41 = arith.constant 0 : index
    %77 = vector.load %arg6[%c0_40, %c0_41] : memref<1x128xf32, #tpu.memory_space<vmem>>, vector<1x128xf32>
    %78 = vector.broadcast %77 : vector<1x128xf32> to vector<128x128xf32>
    %79 = arith.mulf %76, %78 : vector<128x128xf32>
    %c0_42 = arith.constant 0 : index
    %c0_43 = arith.constant 0 : index
    %80 = vector.load %arg7[%c0_42, %c0_43] : memref<1x128xf32, #tpu.memory_space<vmem>>, vector<1x128xf32>
    %81 = vector.broadcast %80 : vector<1x128xf32> to vector<128x128xf32>
    %82 = arith.addf %79, %81 : vector<128x128xf32>
    %c0_44 = arith.constant 0 : index
    %c0_45 = arith.constant 0 : index
    %c0_46 = arith.constant 0 : index
    %83 = vector.load %arg8[%c0_44, %c0_45, %c0_46] : memref<1x128x128xf32, #tpu.memory_space<vmem>>, vector<1x128x128xf32>
    %84 = vector.shape_cast %83 : vector<1x128x128xf32> to vector<128x128xf32>
    %85 = vector.shape_cast %82 : vector<128x128xf32> to vector<1x128x128xf32>
    tpu.vector_store %arg8[%c0_44, %c0_45, %c0_46], %85 {strides = array<i32>} : memref<1x128x128xf32, #tpu.memory_space<vmem>>, vector<1x128x128xf32>,
    return
  }
  func.func @transform_0(%arg0: i32, %arg1: i32) -> (i32, i32, i32) {
    %c0_i32 = arith.constant 0 : i32
    %c0_i32_0 = arith.constant 0 : i32
    %c0_i32_1 = arith.constant 0 : i32
    return %arg0, %c0_i32, %c0_i32_0 : i32, i32, i32
  }
  func.func @transform_1(%arg0: i32, %arg1: i32) -> (i32, i32, i32) {
    %c0_i32 = arith.constant 0 : i32
    %c0_i32_0 = arith.constant 0 : i32
    %c0_i32_1 = arith.constant 0 : i32
    return %arg0, %c0_i32, %c0_i32_0 : i32, i32, i32
  }
  func.func @transform_2(%arg0: i32, %arg1: i32) -> (i32, i32) {
    %c0_i32 = arith.constant 0 : i32
    %c0_i32_0 = arith.constant 0 : i32
    %c0_i32_1 = arith.constant 0 : i32
    return %c0_i32, %c0_i32_0 : i32, i32
  }
  func.func @transform_3(%arg0: i32, %arg1: i32) -> (i32, i32) {
    %c0_i32 = arith.constant 0 : i32
    %c0_i32_0 = arith.constant 0 : i32
    %c0_i32_1 = arith.constant 0 : i32
    return %c0_i32, %c0_i32_0 : i32, i32
  }
  func.func @transform_4(%arg0: i32, %arg1: i32) -> (i32, i32) {
    %c0_i32 = arith.constant 0 : i32
    %c0_i32_0 = arith.constant 0 : i32
    %c0_i32_1 = arith.constant 0 : i32
    return %c0_i32, %c0_i32_0 : i32, i32
  }
  func.func @transform_5(%arg0: i32, %arg1: i32) -> (i32, i32) {
    %c0_i32 = arith.constant 0 : i32
    %c0_i32_0 = arith.constant 0 : i32
    %c0_i32_1 = arith.constant 0 : i32
    return %c0_i32, %c0_i32_0 : i32, i32
  }
  func.func @transform_6(%arg0: i32, %arg1: i32) -> (i32, i32, i32) {
    %c0_i32 = arith.constant 0 : i32
    %c0_i32_0 = arith.constant 0 : i32
    return %arg0, %arg1, %c0_i32 : i32, i32, i32
  }
  func.func @transform_7(%arg0: i32, %arg1: i32) -> (i32, i32, i32, i32) {
    %c0_i32 = arith.constant 0 : i32
    %c0_i32_0 = arith.constant 0 : i32
    %c0_i32_1 = arith.constant 0 : i32
    return %c0_i32, %arg0, %arg1, %c0_i32_0 : i32, i32, i32, i32
  }
}

</mosaic_0001>

<llo_original>
// kernel: tpu_custom_call.1
$region0: #{tpu_custom_call.1}
  #allocation0 [shape = 'u32[]', space=smem, size = 0x4, offset = 0x4, fixed_abs, tag = 'smem constant byte address 0x4 - core index']
  #allocation1 [shape = 'u32[72,128]{1,0:T(1,128)}', space=vmem, size = 0x9000, scoped, tag = 'internal scratch']
  #allocation2 [shape = 'bf16[2,256,64]{2,1,0:T(8,128)(2,1)}', space=vmem, size = 0x20000, scoped, tag = 'scratch operand']
  #allocation3 [shape = 'bf16[2,256,64]{2,1,0:T(8,128)(2,1)}', space=vmem, size = 0x20000, scoped, tag = 'scratch operand']
  #allocation4 [shape = 'bf16[2,256,64]{2,1,0:T(8,128)(2,1)}', space=vmem, size = 0x20000, scoped, tag = 'scratch operand']
  #allocation5 [shape = 'bf16[128,128]{1,0:T(8,128)(2,1)}', space=vmem, size = 0x8000, scoped, tag = 'scratch operand']
  #allocation17 [shape = 's32[]', space=sflag, size = 0x4, offset = 0, fixed_abs, tag = 'sflag constant byte address 0x0 - dummy sync flag']
  %s0 = inlined_call_operand.hbm [shape: f32[2,256,128], index: 0, kind: input, shape index: {}]
  %s1 = inlined_call_operand.hbm [shape: f32[2,1,256], index: 1, kind: input, shape index: {}]
  %s2 = inlined_call_operand.hbm [shape: bf16[128,384], index: 2, kind: input, shape index: {}]
  %s3 = inlined_call_operand.hbm [shape: bf16[128,128], index: 3, kind: input, shape index: {}]
  %s4 = inlined_call_operand.vmem [shape: f32[1,128], index: 4, kind: input, shape index: {}]
  %s5 = inlined_call_operand.vmem [shape: f32[1,128], index: 5, kind: input, shape index: {}]
  %s6 = inlined_call_operand.hbm [shape: f32[2,256,128], index: 6, kind: output, shape index: {0}]
  %s7 = inlined_call_operand.hbm [shape: bf16[2,2,256,256], index: 7, kind: output, shape index: {1}]
  %8 = xla_tuple %s6, %s7
  %s9 = sld [smem:[#allocation0]]
  $region85: #{tpu_custom_call.1} parent=0
    _
  %s11 = ssub.s32 1, %s9
  %s12 = scalar_select 0, %s11, %s9
  $region1: #{tpu_custom_call.1} parent=0
    #allocation6 [shape = 'u8[262144]{0}', space=vmem, size = 0x40000, scoped, tag = 'input window, operand 0']
    #allocation7 [shape = 's32[2]{0}', space=sflag, size = 0x8, scoped, tag = 'scoped memory for tpu_custom_call.1']
    #allocation8 [shape = 's32[2]{0}', space=sflag, size = 0x8, scoped, tag = 'scoped memory for tpu_custom_call.1']
    #allocation9 [shape = 'u8[2048]{0}', space=vmem, size = 0x800, scoped, tag = 'input window, operand 1']
    #allocation10 [shape = 's32[2]{0}', space=sflag, size = 0x8, scoped, tag = 'scoped memory for tpu_custom_call.1']
    #allocation11 [shape = 'u8[98304]{0}', space=vmem, size = 0x18000, scoped, tag = 'input window, operand 2, single buffered']
    #allocation12 [shape = 'u8[32768]{0}', space=vmem, size = 0x8000, scoped, tag = 'input window, operand 3, single buffered']
    #allocation13 [shape = 's32[1]{0}', space=sflag, size = 0x4, scoped, tag = 'scoped memory for tpu_custom_call.1']
    #allocation14 [shape = 'u8[131072]{0}', space=vmem, size = 0x20000, scoped, tag = 'output window, operand 0']
    #allocation15 [shape = 'u8[262144]{0}', space=vmem, size = 0x40000, scoped, tag = 'output window, operand 1']
    #allocation16 [shape = 's32[2]{0}', space=sflag, size = 0x8, scoped, tag = 'scoped memory for tpu_custom_call.1']
    %13 = vsyncpa [#allocation7], 0
    %s14 = scalar_lea.sflag [#allocation7], 1
    %15 = vsyncpa %s14, 0
    %16 = vsyncpa [#allocation10], 0
    %s17 = scalar_lea.sflag [#allocation10], 1
    %18 = vsyncpa %s17, 0
    %19 = vsyncpa [#allocation13], 0
    %20 = vsyncpa [#allocation8], 0
    %s21 = scalar_lea.sflag [#allocation8], 1
    %22 = vsyncpa %s21, 0
    %23 = vsyncpa [#allocation16], 0
    %s24 = scalar_lea.sflag [#allocation16], 1
    %25 = vsyncpa %s24, 0
    loop: start=0, step=1, limit=6
    $region2: #{tpu_custom_call.1} parent=1 // loop_pre_header
      _
    $region3: #{tpu_custom_call.1} parent=1 // loop_header
      %s27 = sphi 0, %s31
      %p28 = scmp.ge.s32.totalorder %s27, 6
      %s34 = sphi 0, %s46
      %s35 = sphi 0, %s42
      %s36 = sphi 0, %s34
      %s37 = sphi 0, %s35
      %s38 = sphi 0, %s36
      %s39 = sphi 0, %s37
      %s49 = sphi 0, %s51
      %s52 = sphi 0, %s49
      %s53 = sphi 0, %s52
      %s69 = sphi 0, %s53
      %s75 = sphi 0, %s77
      %s78 = sphi 0, %s75
      %s79 = sphi 0, %s78
      %s95 = sphi 0, %s79
      %s99 = sphi 0, %s99
      %s101 = sphi 0, %s99
      %s102 = sphi 0, %s101
      %s116 = sphi 0, %s102
      %s120 = sphi 0, %s120
      %s122 = sphi 0, %s120
      %s123 = sphi 0, %s122
      %s137 = sphi 0, %s123
      %s141 = sphi 0, %s141
      %s143 = sphi 0, %s141
      %s144 = sphi 0, %s143
      %s158 = sphi 0, %s144
      %s162 = sphi 0, %s162
      %s164 = sphi 0, %s162
      %s165 = sphi 0, %s164
      %s179 = sphi 0, %s165
      %s187 = sphi 0, %s189
      %s190 = sphi 0, %s187
      %s191 = sphi 0, %s190
      %s207 = sphi 0, %s191
      %s215 = sphi 0, %s217
      %s218 = sphi 0, %s215
      %s219 = sphi 0, %s218
      %s235 = sphi 0, %s219
    $region4: #{tpu_custom_call.1} parent=1 // loop_header_branch
      %30 = sbr.rel (%p28) target = $region8
    $region5: #{tpu_custom_call.1} parent=1 // loop_body
      %s32 = ssub.s32 %s27, 1
      %s33 = ssub.s32 %s27, 2
      %s40 = sadd.s32 1, %s35
      %p41 = scmp.ge.s32.totalorder %s40, 2
      %s42 = scalar_select %p41, 0, %s40
      %s43 = sadd.s32 1, %s34
      %s44 = scalar_select %p41, %s43, %s34
      %p45 = scmp.ge.s32.totalorder %s44, 2
      %s46 = scalar_select %p45, 0, %s44
      %s47 = ssub.s32 %s34, %s46
      %p48 = scmp.eq.s32.totalorder %s47, 0
      %s50 = sadd.s32 %s49, 1
      %s51 = scalar_select %p48, %s49, %s50
      %p54 = pneg %p48
      %p55 = scmp.eq.s32.totalorder %s27, 3
      %p56 = por %p54, %p55
      %p57 = scmp.ne.s32.totalorder %s49, %s52
      %p58 = scmp.eq.s32.totalorder %s27, 0
      %p59 = por %p57, %p58
      %p60 = scmp.ne.s32.totalorder %s49, %s52
      %p61 = scmp.eq.s32.totalorder %s32, 3
      %p62 = por %p60, %p61
      %p63 = scmp.ne.s32.totalorder %s52, %s53
      %p64 = scmp.eq.s32.totalorder %s32, 0
      %p65 = por %p63, %p64
      %p66 = scmp.ne.s32.totalorder %s52, %s53
      %p67 = scmp.eq.s32.totalorder %s33, 3
      %p68 = por %p66, %p67
      %p70 = scmp.ne.s32.totalorder %s53, %s69
      %p71 = scmp.eq.s32.totalorder %s33, 0
      %p72 = por %p70, %p71
      %s73 = ssub.s32 %s34, %s46
      %p74 = scmp.eq.s32.totalorder %s73, 0
      %s76 = sadd.s32 %s75, 1
      %s77 = scalar_select %p74, %s75, %s76
      %p80 = pneg %p74
      %p81 = scmp.eq.s32.totalorder %s27, 3
      %p82 = por %p80, %p81
      %p83 = scmp.ne.s32.totalorder %s75, %s78
      %p84 = scmp.eq.s32.totalorder %s27, 0
      %p85 = por %p83, %p84
      %p86 = scmp.ne.s32.totalorder %s75, %s78
      %p87 = scmp.eq.s32.totalorder %s32, 3
      %p88 = por %p86, %p87
      %p89 = scmp.ne.s32.totalorder %s78, %s79
      %p90 = scmp.eq.s32.totalorder %s32, 0
      %p91 = por %p89, %p90
      %p92 = scmp.ne.s32.totalorder %s78, %s79
      %p93 = scmp.eq.s32.totalorder %s33, 3
      %p94 = por %p92, %p93
      %p96 = scmp.ne.s32.totalorder %s79, %s95
      %p97 = scmp.eq.s32.totalorder %s33, 0
      %p98 = por %p96, %p97
      %s100 = sadd.s32 %s99, 1
      %p103 = scmp.eq.s32.totalorder %s27, 3
      %p104 = scmp.ne.s32.totalorder %s99, %s101
      %p105 = scmp.eq.s32.totalorder %s27, 0
      %p106 = por %p104, %p105
      %p107 = scmp.ne.s32.totalorder %s99, %s101
      %p108 = scmp.eq.s32.totalorder %s32, 3
      %p109 = por %p107, %p108
      %p110 = scmp.ne.s32.totalorder %s101, %s102
      %p111 = scmp.eq.s32.totalorder %s32, 0
      %p112 = por %p110, %p111
      %p113 = scmp.ne.s32.totalorder %s101, %s102
      %p114 = scmp.eq.s32.totalorder %s33, 3
      %p115 = por %p113, %p114
      %p117 = scmp.ne.s32.totalorder %s102, %s116
      %p118 = scmp.eq.s32.totalorder %s33, 0
      %p119 = por %p117, %p118
      %s121 = sadd.s32 %s120, 1
      %p124 = scmp.eq.s32.totalorder %s27, 3
      %p125 = scmp.ne.s32.totalorder %s120, %s122
      %p126 = scmp.eq.s32.totalorder %s27, 0
      %p127 = por %p125, %p126
      %p128 = scmp.ne.s32.totalorder %s120, %s122
      %p129 = scmp.eq.s32.totalorder %s32, 3
      %p130 = por %p128, %p129
      %p131 = scmp.ne.s32.totalorder %s122, %s123
      %p132 = scmp.eq.s32.totalorder %s32, 0
      %p133 = por %p131, %p132
      %p134 = scmp.ne.s32.totalorder %s122, %s123
      %p135 = scmp.eq.s32.totalorder %s33, 3
      %p136 = por %p134, %p135
      %p138 = scmp.ne.s32.totalorder %s123, %s137
      %p139 = scmp.eq.s32.totalorder %s33, 0
      %p140 = por %p138, %p139
      %s142 = sadd.s32 %s141, 1
      %p145 = scmp.eq.s32.totalorder %s27, 3
      %p146 = scmp.ne.s32.totalorder %s141, %s143
      %p147 = scmp.eq.s32.totalorder %s27, 0
      %p148 = por %p146, %p147
      %p149 = scmp.ne.s32.totalorder %s141, %s143
      %p150 = scmp.eq.s32.totalorder %s32, 3
      %p151 = por %p149, %p150
      %p152 = scmp.ne.s32.totalorder %s143, %s144
      %p153 = scmp.eq.s32.totalorder %s32, 0
      %p154 = por %p152, %p153
      %p155 = scmp.ne.s32.totalorder %s143, %s144
      %p156 = scmp.eq.s32.totalorder %s33, 3
      %p157 = por %p155, %p156
      %p159 = scmp.ne.s32.totalorder %s144, %s158
      %p160 = scmp.eq.s32.totalorder %s33, 0
      %p161 = por %p159, %p160
      %s163 = sadd.s32 %s162, 1
      %p166 = scmp.eq.s32.totalorder %s27, 3
      %p167 = scmp.ne.s32.totalorder %s162, %s164
      %p168 = scmp.eq.s32.totalorder %s27, 0
      %p169 = por %p167, %p168
      %p170 = scmp.ne.s32.totalorder %s162, %s164
      %p171 = scmp.eq.s32.totalorder %s32, 3
      %p172 = por %p170, %p171
      %p173 = scmp.ne.s32.totalorder %s164, %s165
      %p174 = scmp.eq.s32.totalorder %s32, 0
      %p175 = por %p173, %p174
      %p176 = scmp.ne.s32.totalorder %s164, %s165
      %p177 = scmp.eq.s32.totalorder %s33, 3
      %p178 = por %p176, %p177
      %p180 = scmp.ne.s32.totalorder %s165, %s179
      %p181 = scmp.eq.s32.totalorder %s33, 0
      %p182 = por %p180, %p181
      %s183 = ssub.s32 %s34, %s46
      %s184 = ssub.s32 %s35, %s42
      %s185 = sor.u32 %s183, %s184
      %p186 = scmp.eq.s32.totalorder %s185, 0
      %s188 = sadd.s32 %s187, 1
      %s189 = scalar_select %p186, %s187, %s188
      %p192 = pneg %p186
      %p193 = scmp.eq.s32.totalorder %s27, 3
      %p194 = por %p192, %p193
      %p195 = scmp.ne.s32.totalorder %s187, %s190
      %p196 = scmp.eq.s32.totalorder %s27, 0
      %p197 = por %p195, %p196
      %p198 = scmp.ne.s32.totalorder %s187, %s190
      %p199 = scmp.eq.s32.totalorder %s32, 3
      %p200 = por %p198, %p199
      %p201 = scmp.ne.s32.totalorder %s190, %s191
      %p202 = scmp.eq.s32.totalorder %s32, 0
      %p203 = por %p201, %p202
      %p204 = scmp.ne.s32.totalorder %s190, %s191
      %p205 = scmp.eq.s32.totalorder %s33, 3
      %p206 = por %p204, %p205
      %p208 = scmp.ne.s32.totalorder %s191, %s207
      %p209 = scmp.eq.s32.totalorder %s33, 0
      %p210 = por %p208, %p209
      %s211 = ssub.s32 %s34, %s46
      %s212 = ssub.s32 %s35, %s42
      %s213 = sor.u32 %s211, %s212
      %p214 = scmp.eq.s32.totalorder %s213, 0
      %s216 = sadd.s32 %s215, 1
      %s217 = scalar_select %p214, %s215, %s216
      %p220 = pneg %p214
      %p221 = scmp.eq.s32.totalorder %s27, 3
      %p222 = por %p220, %p221
      %p223 = scmp.ne.s32.totalorder %s215, %s218
      %p224 = scmp.eq.s32.totalorder %s27, 0
      %p225 = por %p223, %p224
      %p226 = scmp.ne.s32.totalorder %s215, %s218
      %p227 = scmp.eq.s32.totalorder %s32, 3
      %p228 = por %p226, %p227
      %p229 = scmp.ne.s32.totalorder %s218, %s219
      %p230 = scmp.eq.s32.totalorder %s32, 0
      %p231 = por %p229, %p230
      %p232 = scmp.ne.s32.totalorder %s218, %s219
      %p233 = scmp.eq.s32.totalorder %s33, 3
      %p234 = por %p232, %p233
      %p236 = scmp.ne.s32.totalorder %s219, %s235
      %p237 = scmp.eq.s32.totalorder %s33, 0
      %p238 = por %p236, %p237
      %p239 = scmp.le.s32.totalorder 1, %s27
      %p240 = scmp.lt.s32.totalorder %s27, 5
      %p241 = pnand %p239, %p240
      %p242 = pneg %p241
      // Predicated region
      $region9: #{tpu_custom_call.1} parent=5 // pred_check
        _
      $region10: #{tpu_custom_call.1} parent=5 // pred_check_branch
        %244 = sbr.rel (%p241) target = $region12
      $region11: #{tpu_custom_call.1} parent=5 // pred_region
        %s245 = ssub.s32 %s27, 1
        // Predicated region
        $region13: #{tpu_custom_call.1} parent=11 // pred_check
          %p246 = pneg %p112
        $region14: #{tpu_custom_call.1} parent=11 // pred_check_branch
          %248 = sbr.rel (%p246) target = $region16
        $region15: #{tpu_custom_call.1} parent=11 // pred_region
          %250 = vsyncadd [#allocation10], 0
          %s251 = sshll.u32 %s2, 4
          %s252 = int_to_ptr.hbm [resolvable:$true] %s251
          %s253 = sshll.u32 [#allocation11], 4
          %s254 = int_to_ptr.vmem [resolvable:$true] %s253
          %259 = dma.hbm_to_vmem [thread:$0]  %s252, 3072, %s254, [#allocation10], 192, 192, 12
        $region16: #{tpu_custom_call.1} parent=11 // pred_fallthru
          _
        // Predicated region
        $region17: #{tpu_custom_call.1} parent=11 // pred_check
          %p260 = pneg %p133
        $region18: #{tpu_custom_call.1} parent=11 // pred_check_branch
          %262 = sbr.rel (%p260) target = $region20
        $region19: #{tpu_custom_call.1} parent=11 // pred_region
          %264 = vsyncadd [#allocation13], 0
          %s265 = sshll.u32 %s3, 4
          %s266 = int_to_ptr.hbm [resolvable:$true] %s265
          %s267 = sshll.u32 [#allocation12], 4
          %s268 = int_to_ptr.vmem [resolvable:$true] %s267
          %273 = dma.hbm_to_vmem [thread:$0]  %s266, 1024, %s268, [#allocation13], 64, 64, 4
        $region20: #{tpu_custom_call.1} parent=11 // pred_fallthru
          _
        // Predicated region
        $region21: #{tpu_custom_call.1} parent=11 // pred_check
          %p274 = pneg %p154
        $region22: #{tpu_custom_call.1} parent=11 // pred_check_branch
          %276 = sbr.rel (%p274) target = $region24
        $region23: #{tpu_custom_call.1} parent=11 // pred_region
          _
        $region24: #{tpu_custom_call.1} parent=11 // pred_fallthru
          _
        // Predicated region
        $region25: #{tpu_custom_call.1} parent=11 // pred_check
          %p277 = pneg %p175
        $region26: #{tpu_custom_call.1} parent=11 // pred_check_branch
          %279 = sbr.rel (%p277) target = $region28
        $region27: #{tpu_custom_call.1} parent=11 // pred_region
          _
        $region28: #{tpu_custom_call.1} parent=11 // pred_fallthru
          _
      $region12: #{tpu_custom_call.1} parent=5 // pred_fallthru
        _
      %p280 = scmp.lt.s32.totalorder %s27, 4
      // Predicated region
      $region29: #{tpu_custom_call.1} parent=5 // pred_check
        %p281 = pneg %p280
      $region30: #{tpu_custom_call.1} parent=5 // pred_check_branch
        %283 = sbr.rel (%p281) target = $region32
      $region31: #{tpu_custom_call.1} parent=5 // pred_region
        // Predicated region
        $region33: #{tpu_custom_call.1} parent=31 // pred_check
          %p284 = pneg %p59
        $region34: #{tpu_custom_call.1} parent=31 // pred_check_branch
          %286 = sbr.rel (%p284) target = $region36
        $region35: #{tpu_custom_call.1} parent=31 // pred_region
          %s287 = sand.u32 %s49, 1
          %s288 = scalar_lea.sflag [#allocation7], %s287
          %s289 = sand.u32 %s49, 1
          %s290 = smul.addr %s289, 256
          %s291 = scalar_lea.vmem [#allocation6], %s290
          %293 = vsyncadd %s288, 0
          %s294 = smul.addr %s34, 32
          %s295 = smul.addr %s294, 8
          %s296 = scalar_lea.hbm %s0, %s295
          %s297 = sshll.u32 %s296, 4
          %s298 = int_to_ptr.hbm [resolvable:$true] %s297
          %s299 = sshll.u32 %s291, 4
          %s300 = int_to_ptr.vmem [resolvable:$true] %s299
          %305 = dma.hbm_to_vmem [thread:$0]  %s298, 4096, %s300, %s288, 128, 128, 8
        $region36: #{tpu_custom_call.1} parent=31 // pred_fallthru
          _
        // Predicated region
        $region37: #{tpu_custom_call.1} parent=31 // pred_check
          %p306 = pneg %p85
        $region38: #{tpu_custom_call.1} parent=31 // pred_check_branch
          %308 = sbr.rel (%p306) target = $region40
        $region39: #{tpu_custom_call.1} parent=31 // pred_region
          %s309 = sand.u32 %s27, 1
          %s310 = scalar_lea.sflag [#allocation10], %s309
          %s311 = sand.u32 %s75, 1
          %s312 = smul.addr %s311, 2
          %s313 = scalar_lea.vmem [#allocation9], %s312
          %315 = vsyncadd %s310, 0
          %s316 = smul.addr %s34, 2
          %s317 = scalar_lea.hbm %s1, %s316
          %s319 = sshll.u32 %s317, 4
          %s320 = int_to_ptr.hbm [resolvable:$true] %s319
          %s321 = sshll.u32 %s313, 4
          %s322 = int_to_ptr.vmem [resolvable:$true] %s321
          %324 = dma.hbm_to_vmem [thread:$0]  %s320, 32, %s322, %s310
        $region40: #{tpu_custom_call.1} parent=31 // pred_fallthru
          _
      $region32: #{tpu_custom_call.1} parent=5 // pred_fallthru
        _
      %p325 = scmp.le.s32.totalorder 1, %s27
      %p326 = scmp.lt.s32.totalorder %s27, 5
      %p327 = pnand %p325, %p326
      %p328 = pneg %p327
      // Predicated region
      $region41: #{tpu_custom_call.1} parent=5 // pred_check
        _
      $region42: #{tpu_custom_call.1} parent=5 // pred_check_branch
        %330 = sbr.rel (%p327) target = $region44
      $region43: #{tpu_custom_call.1} parent=5 // pred_region
        %s331 = ssub.s32 %s27, 1
        %s332 = sand.u32 %s52, 1
        %s333 = scalar_lea.sflag [#allocation7], %s332
        %s334 = sand.u32 %s52, 1
        %s335 = smul.addr %s334, 256
        %s336 = scalar_lea.vmem [#allocation6], %s335
        // Predicated region
        $region45: #{tpu_custom_call.1} parent=43 // pred_check
          %p337 = pneg %p65
        $region46: #{tpu_custom_call.1} parent=43 // pred_check_branch
          %339 = sbr.rel (%p337) target = $region48
        $region47: #{tpu_custom_call.1} parent=43 // pred_region
          %341 = dma.done %s333, 4096
        $region48: #{tpu_custom_call.1} parent=43 // pred_fallthru
          _
        %s342 = sand.u32 %s32, 1
        %s343 = scalar_lea.sflag [#allocation10], %s342
        %s344 = sand.u32 %s78, 1
        %s345 = smul.addr %s344, 2
        %s346 = scalar_lea.vmem [#allocation9], %s345
        // Predicated region
        $region49: #{tpu_custom_call.1} parent=43 // pred_check
          %p347 = pneg %p91
        $region50: #{tpu_custom_call.1} parent=43 // pred_check_branch
          %349 = sbr.rel (%p347) target = $region52
        $region51: #{tpu_custom_call.1} parent=43 // pred_region
          %351 = dma.done %s343, 32
        $region52: #{tpu_custom_call.1} parent=43 // pred_fallthru
          _
        // Predicated region
        $region53: #{tpu_custom_call.1} parent=43 // pred_check
          %p352 = pneg %p112
        $region54: #{tpu_custom_call.1} parent=43 // pred_check_branch
          %354 = sbr.rel (%p352) target = $region56
        $region55: #{tpu_custom_call.1} parent=43 // pred_region
          %356 = dma.done [#allocation10], 3072
        $region56: #{tpu_custom_call.1} parent=43 // pred_fallthru
          _
        // Predicated region
        $region57: #{tpu_custom_call.1} parent=43 // pred_check
          %p357 = pneg %p133
        $region58: #{tpu_custom_call.1} parent=43 // pred_check_branch
          %359 = sbr.rel (%p357) target = $region60
        $region59: #{tpu_custom_call.1} parent=43 // pred_region
          %361 = dma.done [#allocation13], 1024
        $region60: #{tpu_custom_call.1} parent=43 // pred_fallthru
          _
        %s362 = sand.u32 %s52, 1
        %s363 = scalar_lea.sflag [#allocation7], %s362
        %s364 = sand.u32 %s52, 1
        %s365 = smul.addr %s364, 256
        %s366 = scalar_lea.vmem [#allocation6], %s365
        %p367 = pneg %p65
        %p368 = pneg %p62
        %s369 = sand.u32 %s32, 1
        %s370 = scalar_lea.sflag [#allocation10], %s369
        %s371 = sand.u32 %s78, 1
        %s372 = smul.addr %s371, 2
        %s373 = scalar_lea.vmem [#allocation9], %s372
        %p374 = pneg %p91
        %p375 = pneg %p88
        %p376 = pneg %p112
        %p377 = pneg %p109
        %p378 = pneg %p133
        %p379 = pneg %p130
        %p380 = pneg %p154
        %p381 = pneg %p151
        %p382 = pneg %p175
        %p383 = pneg %p172
        %p384 = pneg %p203
        %p385 = pneg %p200
        %s386 = sand.u32 %s190, 1
        %s387 = scalar_lea.sflag [#allocation8], %s386
        %s388 = sand.u32 %s190, 1
        %s389 = smul.addr %s388, 128
        %s390 = scalar_lea.vmem [#allocation14], %s389
        %p391 = pneg %p231
        %p392 = pneg %p228
        %s393 = sand.u32 %s218, 1
        %s394 = scalar_lea.sflag [#allocation16], %s393
        %s395 = sand.u32 %s218, 1
        %s396 = smul.addr %s395, 256
        %s397 = scalar_lea.vmem [#allocation15], %s396
        %s398 = smul.u32 16, %s37
        %s399 = smul.u32 16, %s37
        %p400 = scmp.eq.s32.totalorder %s37, 0
        // Predicated region
        $region61: #{tpu_custom_call.1} parent=43 // pred_check
          %p401 = pneg %p400
        $region62: #{tpu_custom_call.1} parent=43 // pred_check_branch
          %403 = sbr.rel (%p401) target = $region64
        $region63: #{tpu_custom_call.1} parent=43 // pred_region
          %v404 = vld [vmem:[%s336] sm:$0xff]
          %v405 = vld [vmem:[%s336 + $0x8] sm:$0xff]
          %v406 = vld [vmem:[%s336 + $0x10] sm:$0xff]
          %v407 = vld [vmem:[%s336 + $0x18] sm:$0xff]
          %v408 = vld [vmem:[%s336 + $0x20] sm:$0xff]
          %v409 = vld [vmem:[%s336 + $0x28] sm:$0xff]
          %v410 = vld [vmem:[%s336 + $0x30] sm:$0xff]
          %v411 = vld [vmem:[%s336 + $0x38] sm:$0xff]
          %v412 = vld [vmem:[%s336 + $0x40] sm:$0xff]
          %v413 = vld [vmem:[%s336 + $0x48] sm:$0xff]
          %v414 = vld [vmem:[%s336 + $0x50] sm:$0xff]
          %v415 = vld [vmem:[%s336 + $0x58] sm:$0xff]
          %v416 = vld [vmem:[%s336 + $0x60] sm:$0xff]
          %v417 = vld [vmem:[%s336 + $0x68] sm:$0xff]
          %v418 = vld [vmem:[%s336 + $0x70] sm:$0xff]
          %v419 = vld [vmem:[%s336 + $0x78] sm:$0xff]
          %v420 = vld [vmem:[%s336 + $0x80] sm:$0xff]
          %v421 = vld [vmem:[%s336 + $0x88] sm:$0xff]
          %v422 = vld [vmem:[%s336 + $0x90] sm:$0xff]
          %v423 = vld [vmem:[%s336 + $0x98] sm:$0xff]
          %v424 = vld [vmem:[%s336 + $0xa0] sm:$0xff]
          %v425 = vld [vmem:[%s336 + $0xa8] sm:$0xff]
          %v426 = vld [vmem:[%s336 + $0xb0] sm:$0xff]
          %v427 = vld [vmem:[%s336 + $0xb8] sm:$0xff]
          %v428 = vld [vmem:[%s336 + $0xc0] sm:$0xff]
          %v429 = vld [vmem:[%s336 + $0xc8] sm:$0xff]
          %v430 = vld [vmem:[%s336 + $0xd0] sm:$0xff]
          %v431 = vld [vmem:[%s336 + $0xd8] sm:$0xff]
          %v432 = vld [vmem:[%s336 + $0xe0] sm:$0xff]
          %v433 = vld [vmem:[%s336 + $0xe8] sm:$0xff]
          %v434 = vld [vmem:[%s336 + $0xf0] sm:$0xff]
          %v435 = vld [vmem:[%s336 + $0xf8] sm:$0xff]
          %v436 = vpack.c.bf16 %v405, %v404
          %v437 = vpack.c.bf16 %v407, %v406
          %v438 = vpack.c.bf16 %v409, %v408
          %v439 = vpack.c.bf16 %v411, %v410
          %v440 = vpack.c.bf16 %v413, %v412
          %v441 = vpack.c.bf16 %v415, %v414
          %v442 = vpack.c.bf16 %v417, %v416
          %v443 = vpack.c.bf16 %v419, %v418
          %v444 = vpack.c.bf16 %v421, %v420
          %v445 = vpack.c.bf16 %v423, %v422
          %v446 = vpack.c.bf16 %v425, %v424
          %v447 = vpack.c.bf16 %v427, %v426
          %v448 = vpack.c.bf16 %v429, %v428
          %v449 = vpack.c.bf16 %v431, %v430
          %v450 = vpack.c.bf16 %v433, %v432
          %v451 = vpack.c.bf16 %v435, %v434
          %v452 = vld [vmem:[#allocation11] sm:$0xff]
          %v453 = vld [vmem:[#allocation11 + $0x8] sm:$0xf]
          %v454 = vld [vmem:[#allocation11 + $0xc] sm:$0xff]
          %v455 = vld [vmem:[#allocation11 + $0x14] sm:$0xf]
          %v456 = vld [vmem:[#allocation11 + $0x18] sm:$0xff]
          %v457 = vld [vmem:[#allocation11 + $0x20] sm:$0xf]
          %v458 = vld [vmem:[#allocation11 + $0x24] sm:$0xff]
          %v459 = vld [vmem:[#allocation11 + $0x2c] sm:$0xf]
          %v460 = vld [vmem:[#allocation11 + $0x30] sm:$0xff]
          %v461 = vld [vmem:[#allocation11 + $0x38] sm:$0xf]
          %v462 = vld [vmem:[#allocation11 + $0x3c] sm:$0xff]
          %v463 = vld [vmem:[#allocation11 + $0x44] sm:$0xf]
          %v464 = vld [vmem:[#allocation11 + $0x48] sm:$0xff]
          %v465 = vld [vmem:[#allocation11 + $0x50] sm:$0xf]
          %v466 = vld [vmem:[#allocation11 + $0x54] sm:$0xff]
          %v467 = vld [vmem:[#allocation11 + $0x5c] sm:$0xf]
          %v468 = vld [vmem:[#allocation11 + $0x60] sm:$0xff]
          %v469 = vld [vmem:[#allocation11 + $0x68] sm:$0xf]
          %v470 = vld [vmem:[#allocation11 + $0x6c] sm:$0xff]
          %v471 = vld [vmem:[#allocation11 + $0x74] sm:$0xf]
          %v472 = vld [vmem:[#allocation11 + $0x78] sm:$0xff]
          %v473 = vld [vmem:[#allocation11 + $0x80] sm:$0xf]
          %v474 = vld [vmem:[#allocation11 + $0x84] sm:$0xff]
          %v475 = vld [vmem:[#allocation11 + $0x8c] sm:$0xf]
          %v476 = vld [vmem:[#allocation11 + $0x90] sm:$0xff]
          %v477 = vld [vmem:[#allocation11 + $0x98] sm:$0xf]
          %v478 = vld [vmem:[#allocation11 + $0x9c] sm:$0xff]
          %v479 = vld [vmem:[#allocation11 + $0xa4] sm:$0xf]
          %v480 = vld [vmem:[#allocation11 + $0xa8] sm:$0xff]
          %v481 = vld [vmem:[#allocation11 + $0xb0] sm:$0xf]
          %v482 = vld [vmem:[#allocation11 + $0xb4] sm:$0xff]
          %v483 = vld [vmem:[#allocation11 + $0xbc] sm:$0xf]
          %v516 = vunpack.c.l.b16 %v452
          %v517 = vunpack.c.h.b16 %v452
          %v518 = vunpack.c.l.b16 %v453
          %v519 = vunpack.c.l.b16 %v454
          %v520 = vunpack.c.h.b16 %v454
          %v521 = vunpack.c.l.b16 %v455
          %v522 = vunpack.c.l.b16 %v456
          %v523 = vunpack.c.h.b16 %v456
          %v524 = vunpack.c.l.b16 %v457
          %v525 = vunpack.c.l.b16 %v458
          %v526 = vunpack.c.h.b16 %v458
          %v527 = vunpack.c.l.b16 %v459
          %v528 = vunpack.c.l.b16 %v460
          %v529 = vunpack.c.h.b16 %v460
          %v530 = vunpack.c.l.b16 %v461
          %v531 = vunpack.c.l.b16 %v462
          %v532 = vunpack.c.h.b16 %v462
          %v533 = vunpack.c.l.b16 %v463
          %v534 = vunpack.c.l.b16 %v464
          %v535 = vunpack.c.h.b16 %v464
          %v536 = vunpack.c.l.b16 %v465
          %v537 = vunpack.c.l.b16 %v466
          %v538 = vunpack.c.h.b16 %v466
          %v539 = vunpack.c.l.b16 %v467
          %v540 = vunpack.c.l.b16 %v468
          %v541 = vunpack.c.h.b16 %v468
          %v542 = vunpack.c.l.b16 %v469
          %v543 = vunpack.c.l.b16 %v470
          %v544 = vunpack.c.h.b16 %v470
          %v545 = vunpack.c.l.b16 %v471
          %v546 = vunpack.c.l.b16 %v472
          %v547 = vunpack.c.h.b16 %v472
          %v548 = vunpack.c.l.b16 %v473
          %v549 = vunpack.c.l.b16 %v474
          %v550 = vunpack.c.h.b16 %v474
          %v551 = vunpack.c.l.b16 %v475
          %v552 = vunpack.c.l.b16 %v476
          %v553 = vunpack.c.h.b16 %v476
          %v554 = vunpack.c.l.b16 %v477
          %v555 = vunpack.c.l.b16 %v478
          %v556 = vunpack.c.h.b16 %v478
          %v557 = vunpack.c.l.b16 %v479
          %v558 = vunpack.c.l.b16 %v480
          %v559 = vunpack.c.h.b16 %v480
          %v560 = vunpack.c.l.b16 %v481
          %v561 = vunpack.c.l.b16 %v482
          %v562 = vunpack.c.h.b16 %v482
          %v563 = vunpack.c.l.b16 %v483
          %v564 = vpack.c.b16 %v519, %v516
          %v565 = vpack.c.b16 %v520, %v517
          %v566 = vpack.c.b16 %v521, %v518
          %v567 = vpack.c.b16 %v525, %v522
          %v568 = vpack.c.b16 %v526, %v523
          %v569 = vpack.c.b16 %v527, %v524
          %v570 = vpack.c.b16 %v531, %v528
          %v571 = vpack.c.b16 %v532, %v529
          %v572 = vpack.c.b16 %v533, %v530
          %v573 = vpack.c.b16 %v537, %v534
          %v574 = vpack.c.b16 %v538, %v535
          %v575 = vpack.c.b16 %v539, %v536
          %v576 = vpack.c.b16 %v543, %v540
          %v577 = vpack.c.b16 %v544, %v541
          %v578 = vpack.c.b16 %v545, %v542
          %v579 = vpack.c.b16 %v549, %v546
          %v580 = vpack.c.b16 %v550, %v547
          %v581 = vpack.c.b16 %v551, %v548
          %v582 = vpack.c.b16 %v555, %v552
          %v583 = vpack.c.b16 %v556, %v553
          %v584 = vpack.c.b16 %v557, %v554
          %v585 = vpack.c.b16 %v561, %v558
          %v586 = vpack.c.b16 %v562, %v559
          %v587 = vpack.c.b16 %v563, %v560
          %612 = vmatpush.bf16.msra.mxu0 %v585
          %613 = vmatpush.bf16.msra.mxu0 %v582
          %614 = vmatpush.bf16.msra.mxu0 %v579
          %615 = vmatpush.bf16.msra.mxu0 %v576
          %616 = vmatpush.bf16.msra.mxu0 %v573
          %617 = vmatpush.bf16.msra.mxu0 %v570
          %618 = vmatpush.bf16.msra.mxu0 %v567
          %619 = vmatpush.bf16.msra.mxu0 %v564
          %620 = vmatmul.bf16.gmra.mxu0 %v436
          %v621 = vpop.f32.mrf.mxu0
          %v622 = vadd.f32 0.0, %v621
          %v623 = vpop.f32.mrf.mxu0
          %v624 = vadd.f32 0.0, %v623
          %625 = vmatmul.bf16.gmra.mxu0 %v437
          %v626 = vpop.f32.mrf.mxu0
          %v627 = vadd.f32 0.0, %v626
          %v628 = vpop.f32.mrf.mxu0
          %v629 = vadd.f32 0.0, %v628
          %630 = vmatmul.bf16.gmra.mxu0 %v438
          %v631 = vpop.f32.mrf.mxu0
          %v632 = vadd.f32 0.0, %v631
          %v633 = vpop.f32.mrf.mxu0
          %v634 = vadd.f32 0.0, %v633
          %635 = vmatmul.bf16.gmra.mxu0 %v439
          %v636 = vpop.f32.mrf.mxu0
          %v637 = vadd.f32 0.0, %v636
          %v638 = vpop.f32.mrf.mxu0
          %v639 = vadd.f32 0.0, %v638
          %640 = vmatmul.bf16.gmra.mxu0 %v440
          %v641 = vpop.f32.mrf.mxu0
          %v642 = vadd.f32 0.0, %v641
          %v643 = vpop.f32.mrf.mxu0
          %v644 = vadd.f32 0.0, %v643
          %645 = vmatmul.bf16.gmra.mxu0 %v441
          %v646 = vpop.f32.mrf.mxu0
          %v647 = vadd.f32 0.0, %v646
          %v648 = vpop.f32.mrf.mxu0
          %v649 = vadd.f32 0.0, %v648
          %650 = vmatmul.bf16.gmra.mxu0 %v442
          %v651 = vpop.f32.mrf.mxu0
          %v652 = vadd.f32 0.0, %v651
          %v653 = vpop.f32.mrf.mxu0
          %v654 = vadd.f32 0.0, %v653
          %655 = vmatmul.bf16.gmra.mxu0 %v443
          %v656 = vpop.f32.mrf.mxu0
          %v657 = vadd.f32 0.0, %v656
          %v658 = vpop.f32.mrf.mxu0
          %v659 = vadd.f32 0.0, %v658
          %660 = vmatmul.bf16.gmra.mxu0 %v444
          %v661 = vpop.f32.mrf.mxu0
          %v662 = vadd.f32 0.0, %v661
          %v663 = vpop.f32.mrf.mxu0
          %v664 = vadd.f32 0.0, %v663
          %665 = vmatmul.bf16.gmra.mxu0 %v445
          %v666 = vpop.f32.mrf.mxu0
          %v667 = vadd.f32 0.0, %v666
          %v668 = vpop.f32.mrf.mxu0
          %v669 = vadd.f32 0.0, %v668
          %670 = vmatmul.bf16.gmra.mxu0 %v446
          %v671 = vpop.f32.mrf.mxu0
          %v672 = vadd.f32 0.0, %v671
          %v673 = vpop.f32.mrf.mxu0
          %v674 = vadd.f32 0.0, %v673
          %675 = vmatmul.bf16.gmra.mxu0 %v447
          %v676 = vpop.f32.mrf.mxu0
          %v677 = vadd.f32 0.0, %v676
          %v678 = vpop.f32.mrf.mxu0
          %v679 = vadd.f32 0.0, %v678
          %680 = vmatmul.bf16.gmra.mxu0 %v448
          %v681 = vpop.f32.mrf.mxu0
          %v682 = vadd.f32 0.0, %v681
          %v683 = vpop.f32.mrf.mxu0
          %v684 = vadd.f32 0.0, %v683
          %685 = vmatmul.bf16.gmra.mxu0 %v449
          %v686 = vpop.f32.mrf.mxu0
          %v687 = vadd.f32 0.0, %v686
          %v688 = vpop.f32.mrf.mxu0
          %v689 = vadd.f32 0.0, %v688
          %690 = vmatmul.bf16.gmra.mxu0 %v450
          %v691 = vpop.f32.mrf.mxu0
          %v692 = vadd.f32 0.0, %v691
          %v693 = vpop.f32.mrf.mxu0
          %v694 = vadd.f32 0.0, %v693
          %695 = vmatmul.bf16.gmra.mxu0 %v451
          %v696 = vpop.f32.mrf.mxu0
          %v697 = vadd.f32 0.0, %v696
          %v698 = vpop.f32.mrf.mxu0
          %v699 = vadd.f32 0.0, %v698
          %700 = vdwg.mxu0
          %701 = vmatpush.bf16.msra.mxu0 %v586
          %702 = vmatpush.bf16.msra.mxu0 %v583
          %703 = vmatpush.bf16.msra.mxu0 %v580
          %704 = vmatpush.bf16.msra.mxu0 %v577
          %705 = vmatpush.bf16.msra.mxu0 %v574
          %706 = vmatpush.bf16.msra.mxu0 %v571
          %707 = vmatpush.bf16.msra.mxu0 %v568
          %708 = vmatpush.bf16.msra.mxu0 %v565
          %709 = vmatmul.bf16.gmra.mxu0 %v436
          %v710 = vpop.f32.mrf.mxu0
          %v711 = vadd.f32 0.0, %v710
          %v712 = vpop.f32.mrf.mxu0
          %v713 = vadd.f32 0.0, %v712
          %714 = vmatmul.bf16.gmra.mxu0 %v437
          %v715 = vpop.f32.mrf.mxu0
          %v716 = vadd.f32 0.0, %v715
          %v717 = vpop.f32.mrf.mxu0
          %v718 = vadd.f32 0.0, %v717
          %719 = vmatmul.bf16.gmra.mxu0 %v438
          %v720 = vpop.f32.mrf.mxu0
          %v721 = vadd.f32 0.0, %v720
          %v722 = vpop.f32.mrf.mxu0
          %v723 = vadd.f32 0.0, %v722
          %724 = vmatmul.bf16.gmra.mxu0 %v439
          %v725 = vpop.f32.mrf.mxu0
          %v726 = vadd.f32 0.0, %v725
          %v727 = vpop.f32.mrf.mxu0
          %v728 = vadd.f32 0.0, %v727
          %729 = vmatmul.bf16.gmra.mxu0 %v440
          %v730 = vpop.f32.mrf.mxu0
          %v731 = vadd.f32 0.0, %v730
          %v732 = vpop.f32.mrf.mxu0
          %v733 = vadd.f32 0.0, %v732
          %734 = vmatmul.bf16.gmra.mxu0 %v441
          %v735 = vpop.f32.mrf.mxu0
          %v736 = vadd.f32 0.0, %v735
          %v737 = vpop.f32.mrf.mxu0
          %v738 = vadd.f32 0.0, %v737
          %739 = vmatmul.bf16.gmra.mxu0 %v442
          %v740 = vpop.f32.mrf.mxu0
          %v741 = vadd.f32 0.0, %v740
          %v742 = vpop.f32.mrf.mxu0
          %v743 = vadd.f32 0.0, %v742
          %744 = vmatmul.bf16.gmra.mxu0 %v443
          %v745 = vpop.f32.mrf.mxu0
          %v746 = vadd.f32 0.0, %v745
          %v747 = vpop.f32.mrf.mxu0
          %v748 = vadd.f32 0.0, %v747
          %749 = vmatmul.bf16.gmra.mxu0 %v444
          %v750 = vpop.f32.mrf.mxu0
          %v751 = vadd.f32 0.0, %v750
          %v752 = vpop.f32.mrf.mxu0
          %v753 = vadd.f32 0.0, %v752
          %754 = vmatmul.bf16.gmra.mxu0 %v445
          %v755 = vpop.f32.mrf.mxu0
          %v756 = vadd.f32 0.0, %v755
          %v757 = vpop.f32.mrf.mxu0
          %v758 = vadd.f32 0.0, %v757
          %759 = vmatmul.bf16.gmra.mxu0 %v446
          %v760 = vpop.f32.mrf.mxu0
          %v761 = vadd.f32 0.0, %v760
          %v762 = vpop.f32.mrf.mxu0
          %v763 = vadd.f32 0.0, %v762
          %764 = vmatmul.bf16.gmra.mxu0 %v447
          %v765 = vpop.f32.mrf.mxu0
          %v766 = vadd.f32 0.0, %v765
          %v767 = vpop.f32.mrf.mxu0
          %v768 = vadd.f32 0.0, %v767
          %769 = vmatmul.bf16.gmra.mxu0 %v448
          %v770 = vpop.f32.mrf.mxu0
          %v771 = vadd.f32 0.0, %v770
          %v772 = vpop.f32.mrf.mxu0
          %v773 = vadd.f32 0.0, %v772
          %774 = vmatmul.bf16.gmra.mxu0 %v449
          %v775 = vpop.f32.mrf.mxu0
          %v776 = vadd.f32 0.0, %v775
          %v777 = vpop.f32.mrf.mxu0
          %v778 = vadd.f32 0.0, %v777
          %779 = vmatmul.bf16.gmra.mxu0 %v450
          %v780 = vpop.f32.mrf.mxu0
          %v781 = vadd.f32 0.0, %v780
          %v782 = vpop.f32.mrf.mxu0
          %v783 = vadd.f32 0.0, %v782
          %784 = vmatmul.bf16.gmra.mxu0 %v451
          %v785 = vpop.f32.mrf.mxu0
          %v786 = vadd.f32 0.0, %v785
          %v787 = vpop.f32.mrf.mxu0
          %v788 = vadd.f32 0.0, %v787
          %789 = vdwg.mxu0
          %790 = vmatpush.bf16.msra.mxu0 %v587
          %791 = vmatpush.bf16.msra.mxu0 %v584
          %792 = vmatpush.bf16.msra.mxu0 %v581
          %793 = vmatpush.bf16.msra.mxu0 %v578
          %794 = vmatpush.bf16.msra.mxu0 %v575
          %795 = vmatpush.bf16.msra.mxu0 %v572
          %796 = vmatpush.bf16.msra.mxu0 %v569
          %797 = vmatpush.bf16.msra.mxu0 %v566
          %798 = vmatmul.bf16.gmra.mxu0 %v436
          %v799 = vpop.f32.mrf.mxu0
          %v800 = vadd.f32 0.0, %v799
          %v801 = vpop.f32.mrf.mxu0
          %v802 = vadd.f32 0.0, %v801
          %803 = vmatmul.bf16.gmra.mxu0 %v437
          %v804 = vpop.f32.mrf.mxu0
          %v805 = vadd.f32 0.0, %v804
          %v806 = vpop.f32.mrf.mxu0
          %v807 = vadd.f32 0.0, %v806
          %808 = vmatmul.bf16.gmra.mxu0 %v438
          %v809 = vpop.f32.mrf.mxu0
          %v810 = vadd.f32 0.0, %v809
          %v811 = vpop.f32.mrf.mxu0
          %v812 = vadd.f32 0.0, %v811
          %813 = vmatmul.bf16.gmra.mxu0 %v439
          %v814 = vpop.f32.mrf.mxu0
          %v815 = vadd.f32 0.0, %v814
          %v816 = vpop.f32.mrf.mxu0
          %v817 = vadd.f32 0.0, %v816
          %818 = vmatmul.bf16.gmra.mxu0 %v440
          %v819 = vpop.f32.mrf.mxu0
          %v820 = vadd.f32 0.0, %v819
          %v821 = vpop.f32.mrf.mxu0
          %v822 = vadd.f32 0.0, %v821
          %823 = vmatmul.bf16.gmra.mxu0 %v441
          %v824 = vpop.f32.mrf.mxu0
          %v825 = vadd.f32 0.0, %v824
          %v826 = vpop.f32.mrf.mxu0
          %v827 = vadd.f32 0.0, %v826
          %828 = vmatmul.bf16.gmra.mxu0 %v442
          %v829 = vpop.f32.mrf.mxu0
          %v830 = vadd.f32 0.0, %v829
          %v831 = vpop.f32.mrf.mxu0
          %v832 = vadd.f32 0.0, %v831
          %833 = vmatmul.bf16.gmra.mxu0 %v443
          %v834 = vpop.f32.mrf.mxu0
          %v835 = vadd.f32 0.0, %v834
          %v836 = vpop.f32.mrf.mxu0
          %v837 = vadd.f32 0.0, %v836
          %838 = vmatmul.bf16.gmra.mxu0 %v444
          %v839 = vpop.f32.mrf.mxu0
          %v840 = vadd.f32 0.0, %v839
          %v841 = vpop.f32.mrf.mxu0
          %v842 = vadd.f32 0.0, %v841
          %843 = vmatmul.bf16.gmra.mxu0 %v445
          %v844 = vpop.f32.mrf.mxu0
          %v845 = vadd.f32 0.0, %v844
          %v846 = vpop.f32.mrf.mxu0
          %v847 = vadd.f32 0.0, %v846
          %848 = vmatmul.bf16.gmra.mxu0 %v446
          %v849 = vpop.f32.mrf.mxu0
          %v850 = vadd.f32 0.0, %v849
          %v851 = vpop.f32.mrf.mxu0
          %v852 = vadd.f32 0.0, %v851
          %853 = vmatmul.bf16.gmra.mxu0 %v447
          %v854 = vpop.f32.mrf.mxu0
          %v855 = vadd.f32 0.0, %v854
          %v856 = vpop.f32.mrf.mxu0
          %v857 = vadd.f32 0.0, %v856
          %858 = vmatmul.bf16.gmra.mxu0 %v448
          %v859 = vpop.f32.mrf.mxu0
          %v860 = vadd.f32 0.0, %v859
          %v861 = vpop.f32.mrf.mxu0
          %v862 = vadd.f32 0.0, %v861
          %863 = vmatmul.bf16.gmra.mxu0 %v449
          %v864 = vpop.f32.mrf.mxu0
          %v865 = vadd.f32 0.0, %v864
          %v866 = vpop.f32.mrf.mxu0
          %v867 = vadd.f32 0.0, %v866
          %868 = vmatmul.bf16.gmra.mxu0 %v450
          %v869 = vpop.f32.mrf.mxu0
          %v870 = vadd.f32 0.0, %v869
          %v871 = vpop.f32.mrf.mxu0
          %v872 = vadd.f32 0.0, %v871
          %873 = vmatmul.bf16.gmra.mxu0 %v451
          %v874 = vpop.f32.mrf.mxu0
          %v875 = vadd.f32 0.0, %v874
          %v876 = vpop.f32.mrf.mxu0
          %v877 = vadd.f32 0.0, %v876
          %878 = vdwg.mxu0
          %v879 = vpack.c.bf16 %v622, %v622
          %v880 = vpack.c.bf16 %v624, %v624
          %v881 = vpack.c.bf16 %v627, %v627
          %v882 = vpack.c.bf16 %v629, %v629
          %v883 = vpack.c.bf16 %v632, %v632
          %v884 = vpack.c.bf16 %v634, %v634
          %v885 = vpack.c.bf16 %v637, %v637
          %v886 = vpack.c.bf16 %v639, %v639
          %v887 = vpack.c.bf16 %v642, %v642
          %v888 = vpack.c.bf16 %v644, %v644
          %v889 = vpack.c.bf16 %v647, %v647
          %v890 = vpack.c.bf16 %v649, %v649
          %v891 = vpack.c.bf16 %v652, %v652
          %v892 = vpack.c.bf16 %v654, %v654
          %v893 = vpack.c.bf16 %v657, %v657
          %v894 = vpack.c.bf16 %v659, %v659
          %v895 = vpack.c.bf16 %v662, %v662
          %v896 = vpack.c.bf16 %v664, %v664
          %v897 = vpack.c.bf16 %v667, %v667
          %v898 = vpack.c.bf16 %v669, %v669
          %v899 = vpack.c.bf16 %v672, %v672
          %v900 = vpack.c.bf16 %v674, %v674
          %v901 = vpack.c.bf16 %v677, %v677
          %v902 = vpack.c.bf16 %v679, %v679
          %v903 = vpack.c.bf16 %v682, %v682
          %v904 = vpack.c.bf16 %v684, %v684
          %v905 = vpack.c.bf16 %v687, %v687
          %v906 = vpack.c.bf16 %v689, %v689
          %v907 = vpack.c.bf16 %v692, %v692
          %v908 = vpack.c.bf16 %v694, %v694
          %v909 = vpack.c.bf16 %v697, %v697
          %v910 = vpack.c.bf16 %v699, %v699
          %vm911 = vcmask 519168
          %912 = vst.msk [vmem:[#allocation2] sm:$0xf] %vm911, %v879
          %913 = vst.msk [vmem:[#allocation2 + $0x4] sm:$0xf] %vm911, %v880
          %914 = vst.msk [vmem:[#allocation2 + $0x8] sm:$0xf] %vm911, %v881
          %915 = vst.msk [vmem:[#allocation2 + $0xc] sm:$0xf] %vm911, %v882
          %916 = vst.msk [vmem:[#allocation2 + $0x10] sm:$0xf] %vm911, %v883
          %917 = vst.msk [vmem:[#allocation2 + $0x14] sm:$0xf] %vm911, %v884
          %918 = vst.msk [vmem:[#allocation2 + $0x18] sm:$0xf] %vm911, %v885
          %919 = vst.msk [vmem:[#allocation2 + $0x1c] sm:$0xf] %vm911, %v886
          %920 = vst.msk [vmem:[#allocation2 + $0x20] sm:$0xf] %vm911, %v887
          %921 = vst.msk [vmem:[#allocation2 + $0x24] sm:$0xf] %vm911, %v888
          %922 = vst.msk [vmem:[#allocation2 + $0x28] sm:$0xf] %vm911, %v889
          %923 = vst.msk [vmem:[#allocation2 + $0x2c] sm:$0xf] %vm911, %v890
          %924 = vst.msk [vmem:[#allocation2 + $0x30] sm:$0xf] %vm911, %v891
          %925 = vst.msk [vmem:[#allocation2 + $0x34] sm:$0xf] %vm911, %v892
          %926 = vst.msk [vmem:[#allocation2 + $0x38] sm:$0xf] %vm911, %v893
          %927 = vst.msk [vmem:[#allocation2 + $0x3c] sm:$0xf] %vm911, %v894
          %928 = vst.msk [vmem:[#allocation2 + $0x40] sm:$0xf] %vm911, %v895
          %929 = vst.msk [vmem:[#allocation2 + $0x44] sm:$0xf] %vm911, %v896
          %930 = vst.msk [vmem:[#allocation2 + $0x48] sm:$0xf] %vm911, %v897
          %931 = vst.msk [vmem:[#allocation2 + $0x4c] sm:$0xf] %vm911, %v898
          %932 = vst.msk [vmem:[#allocation2 + $0x50] sm:$0xf] %vm911, %v899
          %933 = vst.msk [vmem:[#allocation2 + $0x54] sm:$0xf] %vm911, %v900
          %934 = vst.msk [vmem:[#allocation2 + $0x58] sm:$0xf] %vm911, %v901
          %935 = vst.msk [vmem:[#allocation2 + $0x5c] sm:$0xf] %vm911, %v902
          %936 = vst.msk [vmem:[#allocation2 + $0x60] sm:$0xf] %vm911, %v903
          %937 = vst.msk [vmem:[#allocation2 + $0x64] sm:$0xf] %vm911, %v904
          %938 = vst.msk [vmem:[#allocation2 + $0x68] sm:$0xf] %vm911, %v905
          %939 = vst.msk [vmem:[#allocation2 + $0x6c] sm:$0xf] %vm911, %v906
          %940 = vst.msk [vmem:[#allocation2 + $0x70] sm:$0xf] %vm911, %v907
          %941 = vst.msk [vmem:[#allocation2 + $0x74] sm:$0xf] %vm911, %v908
          %942 = vst.msk [vmem:[#allocation2 + $0x78] sm:$0xf] %vm911, %v909
          %943 = vst.msk [vmem:[#allocation2 + $0x7c] sm:$0xf] %vm911, %v910
          %v944 = vpack.c.bf16 %v711, %v711
          %v945 = vpack.c.bf16 %v713, %v713
          %v946 = vpack.c.bf16 %v716, %v716
          %v947 = vpack.c.bf16 %v718, %v718
          %v948 = vpack.c.bf16 %v721, %v721
          %v949 = vpack.c.bf16 %v723, %v723
          %v950 = vpack.c.bf16 %v726, %v726
          %v951 = vpack.c.bf16 %v728, %v728
          %v952 = vpack.c.bf16 %v731, %v731
          %v953 = vpack.c.bf16 %v733, %v733
          %v954 = vpack.c.bf16 %v736, %v736
          %v955 = vpack.c.bf16 %v738, %v738
          %v956 = vpack.c.bf16 %v741, %v741
          %v957 = vpack.c.bf16 %v743, %v743
          %v958 = vpack.c.bf16 %v746, %v746
          %v959 = vpack.c.bf16 %v748, %v748
          %v960 = vpack.c.bf16 %v751, %v751
          %v961 = vpack.c.bf16 %v753, %v753
          %v962 = vpack.c.bf16 %v756, %v756
          %v963 = vpack.c.bf16 %v758, %v758
          %v964 = vpack.c.bf16 %v761, %v761
          %v965 = vpack.c.bf16 %v763, %v763
          %v966 = vpack.c.bf16 %v766, %v766
          %v967 = vpack.c.bf16 %v768, %v768
          %v968 = vpack.c.bf16 %v771, %v771
          %v969 = vpack.c.bf16 %v773, %v773
          %v970 = vpack.c.bf16 %v776, %v776
          %v971 = vpack.c.bf16 %v778, %v778
          %v972 = vpack.c.bf16 %v781, %v781
          %v973 = vpack.c.bf16 %v783, %v783
          %v974 = vpack.c.bf16 %v786, %v786
          %v975 = vpack.c.bf16 %v788, %v788
          %976 = vst.msk [vmem:[#allocation3] sm:$0xf] %vm911, %v944
          %977 = vst.msk [vmem:[#allocation3 + $0x4] sm:$0xf] %vm911, %v945
          %978 = vst.msk [vmem:[#allocation3 + $0x8] sm:$0xf] %vm911, %v946
          %979 = vst.msk [vmem:[#allocation3 + $0xc] sm:$0xf] %vm911, %v947
          %980 = vst.msk [vmem:[#allocation3 + $0x10] sm:$0xf] %vm911, %v948
          %981 = vst.msk [vmem:[#allocation3 + $0x14] sm:$0xf] %vm911, %v949
          %982 = vst.msk [vmem:[#allocation3 + $0x18] sm:$0xf] %vm911, %v950
          %983 = vst.msk [vmem:[#allocation3 + $0x1c] sm:$0xf] %vm911, %v951
          %984 = vst.msk [vmem:[#allocation3 + $0x20] sm:$0xf] %vm911, %v952
          %985 = vst.msk [vmem:[#allocation3 + $0x24] sm:$0xf] %vm911, %v953
          %986 = vst.msk [vmem:[#allocation3 + $0x28] sm:$0xf] %vm911, %v954
          %987 = vst.msk [vmem:[#allocation3 + $0x2c] sm:$0xf] %vm911, %v955
          %988 = vst.msk [vmem:[#allocation3 + $0x30] sm:$0xf] %vm911, %v956
          %989 = vst.msk [vmem:[#allocation3 + $0x34] sm:$0xf] %vm911, %v957
          %990 = vst.msk [vmem:[#allocation3 + $0x38] sm:$0xf] %vm911, %v958
          %991 = vst.msk [vmem:[#allocation3 + $0x3c] sm:$0xf] %vm911, %v959
          %992 = vst.msk [vmem:[#allocation3 + $0x40] sm:$0xf] %vm911, %v960
          %993 = vst.msk [vmem:[#allocation3 + $0x44] sm:$0xf] %vm911, %v961
          %994 = vst.msk [vmem:[#allocation3 + $0x48] sm:$0xf] %vm911, %v962
          %995 = vst.msk [vmem:[#allocation3 + $0x4c] sm:$0xf] %vm911, %v963
          %996 = vst.msk [vmem:[#allocation3 + $0x50] sm:$0xf] %vm911, %v964
          %997 = vst.msk [vmem:[#allocation3 + $0x54] sm:$0xf] %vm911, %v965
          %998 = vst.msk [vmem:[#allocation3 + $0x58] sm:$0xf] %vm911, %v966
          %999 = vst.msk [vmem:[#allocation3 + $0x5c] sm:$0xf] %vm911, %v967
          %1000 = vst.msk [vmem:[#allocation3 + $0x60] sm:$0xf] %vm911, %v968
          %1001 = vst.msk [vmem:[#allocation3 + $0x64] sm:$0xf] %vm911, %v969
          %1002 = vst.msk [vmem:[#allocation3 + $0x68] sm:$0xf] %vm911, %v970
          %1003 = vst.msk [vmem:[#allocation3 + $0x6c] sm:$0xf] %vm911, %v971
          %1004 = vst.msk [vmem:[#allocation3 + $0x70] sm:$0xf] %vm911, %v972
          %1005 = vst.msk [vmem:[#allocation3 + $0x74] sm:$0xf] %vm911, %v973
          %1006 = vst.msk [vmem:[#allocation3 + $0x78] sm:$0xf] %vm911, %v974
          %1007 = vst.msk [vmem:[#allocation3 + $0x7c] sm:$0xf] %vm911, %v975
          %v1008 = vpack.c.bf16 %v800, %v800
          %v1009 = vpack.c.bf16 %v802, %v802
          %v1010 = vpack.c.bf16 %v805, %v805
          %v1011 = vpack.c.bf16 %v807, %v807
          %v1012 = vpack.c.bf16 %v810, %v810
          %v1013 = vpack.c.bf16 %v812, %v812
          %v1014 = vpack.c.bf16 %v815, %v815
          %v1015 = vpack.c.bf16 %v817, %v817
          %v1016 = vpack.c.bf16 %v820, %v820
          %v1017 = vpack.c.bf16 %v822, %v822
          %v1018 = vpack.c.bf16 %v825, %v825
          %v1019 = vpack.c.bf16 %v827, %v827
          %v1020 = vpack.c.bf16 %v830, %v830
          %v1021 = vpack.c.bf16 %v832, %v832
          %v1022 = vpack.c.bf16 %v835, %v835
          %v1023 = vpack.c.bf16 %v837, %v837
          %v1024 = vpack.c.bf16 %v840, %v840
          %v1025 = vpack.c.bf16 %v842, %v842
          %v1026 = vpack.c.bf16 %v845, %v845
          %v1027 = vpack.c.bf16 %v847, %v847
          %v1028 = vpack.c.bf16 %v850, %v850
          %v1029 = vpack.c.bf16 %v852, %v852
          %v1030 = vpack.c.bf16 %v855, %v855
          %v1031 = vpack.c.bf16 %v857, %v857
          %v1032 = vpack.c.bf16 %v860, %v860
          %v1033 = vpack.c.bf16 %v862, %v862
          %v1034 = vpack.c.bf16 %v865, %v865
          %v1035 = vpack.c.bf16 %v867, %v867
          %v1036 = vpack.c.bf16 %v870, %v870
          %v1037 = vpack.c.bf16 %v872, %v872
          %v1038 = vpack.c.bf16 %v875, %v875
          %v1039 = vpack.c.bf16 %v877, %v877
          %1040 = vst.msk [vmem:[#allocation4] sm:$0xf] %vm911, %v1008
          %1041 = vst.msk [vmem:[#allocation4 + $0x4] sm:$0xf] %vm911, %v1009
          %1042 = vst.msk [vmem:[#allocation4 + $0x8] sm:$0xf] %vm911, %v1010
          %1043 = vst.msk [vmem:[#allocation4 + $0xc] sm:$0xf] %vm911, %v1011
          %1044 = vst.msk [vmem:[#allocation4 + $0x10] sm:$0xf] %vm911, %v1012
          %1045 = vst.msk [vmem:[#allocation4 + $0x14] sm:$0xf] %vm911, %v1013
          %1046 = vst.msk [vmem:[#allocation4 + $0x18] sm:$0xf] %vm911, %v1014
          %1047 = vst.msk [vmem:[#allocation4 + $0x1c] sm:$0xf] %vm911, %v1015
          %1048 = vst.msk [vmem:[#allocation4 + $0x20] sm:$0xf] %vm911, %v1016
          %1049 = vst.msk [vmem:[#allocation4 + $0x24] sm:$0xf] %vm911, %v1017
          %1050 = vst.msk [vmem:[#allocation4 + $0x28] sm:$0xf] %vm911, %v1018
          %1051 = vst.msk [vmem:[#allocation4 + $0x2c] sm:$0xf] %vm911, %v1019
          %1052 = vst.msk [vmem:[#allocation4 + $0x30] sm:$0xf] %vm911, %v1020
          %1053 = vst.msk [vmem:[#allocation4 + $0x34] sm:$0xf] %vm911, %v1021
          %1054 = vst.msk [vmem:[#allocation4 + $0x38] sm:$0xf] %vm911, %v1022
          %1055 = vst.msk [vmem:[#allocation4 + $0x3c] sm:$0xf] %vm911, %v1023
          %1056 = vst.msk [vmem:[#allocation4 + $0x40] sm:$0xf] %vm911, %v1024
          %1057 = vst.msk [vmem:[#allocation4 + $0x44] sm:$0xf] %vm911, %v1025
          %1058 = vst.msk [vmem:[#allocation4 + $0x48] sm:$0xf] %vm911, %v1026
          %1059 = vst.msk [vmem:[#allocation4 + $0x4c] sm:$0xf] %vm911, %v1027
          %1060 = vst.msk [vmem:[#allocation4 + $0x50] sm:$0xf] %vm911, %v1028
          %1061 = vst.msk [vmem:[#allocation4 + $0x54] sm:$0xf] %vm911, %v1029
          %1062 = vst.msk [vmem:[#allocation4 + $0x58] sm:$0xf] %vm911, %v1030
          %1063 = vst.msk [vmem:[#allocation4 + $0x5c] sm:$0xf] %vm911, %v1031
          %1064 = vst.msk [vmem:[#allocation4 + $0x60] sm:$0xf] %vm911, %v1032
          %1065 = vst.msk [vmem:[#allocation4 + $0x64] sm:$0xf] %vm911, %v1033
          %1066 = vst.msk [vmem:[#allocation4 + $0x68] sm:$0xf] %vm911, %v1034
          %1067 = vst.msk [vmem:[#allocation4 + $0x6c] sm:$0xf] %vm911, %v1035
          %1068 = vst.msk [vmem:[#allocation4 + $0x70] sm:$0xf] %vm911, %v1036
          %1069 = vst.msk [vmem:[#allocation4 + $0x74] sm:$0xf] %vm911, %v1037
          %1070 = vst.msk [vmem:[#allocation4 + $0x78] sm:$0xf] %vm911, %v1038
          %1071 = vst.msk [vmem:[#allocation4 + $0x7c] sm:$0xf] %vm911, %v1039
          %1104 = vrot.lane.b32.xlu0 %v879, 64
          %v1105 = vpop.permute.xlu0 %1104
          %1106 = vrot.lane.b32.xlu0 %v880, 64
          %v1107 = vpop.permute.xlu0 %1106
          %1108 = vrot.lane.b32.xlu0 %v881, 64
          %v1109 = vpop.permute.xlu0 %1108
          %1110 = vrot.lane.b32.xlu0 %v882, 64
          %v1111 = vpop.permute.xlu0 %1110
          %1112 = vrot.lane.b32.xlu0 %v883, 64
          %v1113 = vpop.permute.xlu0 %1112
          %1114 = vrot.lane.b32.xlu0 %v884, 64
          %v1115 = vpop.permute.xlu0 %1114
          %1116 = vrot.lane.b32.xlu0 %v885, 64
          %v1117 = vpop.permute.xlu0 %1116
          %1118 = vrot.lane.b32.xlu0 %v886, 64
          %v1119 = vpop.permute.xlu0 %1118
          %1120 = vrot.lane.b32.xlu0 %v887, 64
          %v1121 = vpop.permute.xlu0 %1120
          %1122 = vrot.lane.b32.xlu0 %v888, 64
          %v1123 = vpop.permute.xlu0 %1122
          %1124 = vrot.lane.b32.xlu0 %v889, 64
          %v1125 = vpop.permute.xlu0 %1124
          %1126 = vrot.lane.b32.xlu0 %v890, 64
          %v1127 = vpop.permute.xlu0 %1126
          %1128 = vrot.lane.b32.xlu0 %v891, 64
          %v1129 = vpop.permute.xlu0 %1128
          %1130 = vrot.lane.b32.xlu0 %v892, 64
          %v1131 = vpop.permute.xlu0 %1130
          %1132 = vrot.lane.b32.xlu0 %v893, 64
          %v1133 = vpop.permute.xlu0 %1132
          %1134 = vrot.lane.b32.xlu0 %v894, 64
          %v1135 = vpop.permute.xlu0 %1134
          %1136 = vrot.lane.b32.xlu0 %v895, 64
          %v1137 = vpop.permute.xlu0 %1136
          %1138 = vrot.lane.b32.xlu0 %v896, 64
          %v1139 = vpop.permute.xlu0 %1138
          %1140 = vrot.lane.b32.xlu0 %v897, 64
          %v1141 = vpop.permute.xlu0 %1140
          %1142 = vrot.lane.b32.xlu0 %v898, 64
          %v1143 = vpop.permute.xlu0 %1142
          %1144 = vrot.lane.b32.xlu0 %v899, 64
          %v1145 = vpop.permute.xlu0 %1144
          %1146 = vrot.lane.b32.xlu0 %v900, 64
          %v1147 = vpop.permute.xlu0 %1146
          %1148 = vrot.lane.b32.xlu0 %v901, 64
          %v1149 = vpop.permute.xlu0 %1148
          %1150 = vrot.lane.b32.xlu0 %v902, 64
          %v1151 = vpop.permute.xlu0 %1150
          %1152 = vrot.lane.b32.xlu0 %v903, 64
          %v1153 = vpop.permute.xlu0 %1152
          %1154 = vrot.lane.b32.xlu0 %v904, 64
          %v1155 = vpop.permute.xlu0 %1154
          %1156 = vrot.lane.b32.xlu0 %v905, 64
          %v1157 = vpop.permute.xlu0 %1156
          %1158 = vrot.lane.b32.xlu0 %v906, 64
          %v1159 = vpop.permute.xlu0 %1158
          %1160 = vrot.lane.b32.xlu0 %v907, 64
          %v1161 = vpop.permute.xlu0 %1160
          %1162 = vrot.lane.b32.xlu0 %v908, 64
          %v1163 = vpop.permute.xlu0 %1162
          %1164 = vrot.lane.b32.xlu0 %v909, 64
          %v1165 = vpop.permute.xlu0 %1164
          %1166 = vrot.lane.b32.xlu0 %v910, 64
          %v1167 = vpop.permute.xlu0 %1166
          %s1200 = scalar_lea.vmem [#allocation2], 128
          %1201 = vst.msk [vmem:[%s1200] sm:$0xf] %vm911, %v1105
          %1202 = vst.msk [vmem:[%s1200 + $0x4] sm:$0xf] %vm911, %v1107
          %1203 = vst.msk [vmem:[%s1200 + $0x8] sm:$0xf] %vm911, %v1109
          %1204 = vst.msk [vmem:[%s1200 + $0xc] sm:$0xf] %vm911, %v1111
          %1205 = vst.msk [vmem:[%s1200 + $0x10] sm:$0xf] %vm911, %v1113
          %1206 = vst.msk [vmem:[%s1200 + $0x14] sm:$0xf] %vm911, %v1115
          %1207 = vst.msk [vmem:[%s1200 + $0x18] sm:$0xf] %vm911, %v1117
          %1208 = vst.msk [vmem:[%s1200 + $0x1c] sm:$0xf] %vm911, %v1119
          %1209 = vst.msk [vmem:[%s1200 + $0x20] sm:$0xf] %vm911, %v1121
          %1210 = vst.msk [vmem:[%s1200 + $0x24] sm:$0xf] %vm911, %v1123
          %1211 = vst.msk [vmem:[%s1200 + $0x28] sm:$0xf] %vm911, %v1125
          %1212 = vst.msk [vmem:[%s1200 + $0x2c] sm:$0xf] %vm911, %v1127
          %1213 = vst.msk [vmem:[%s1200 + $0x30] sm:$0xf] %vm911, %v1129
          %1214 = vst.msk [vmem:[%s1200 + $0x34] sm:$0xf] %vm911, %v1131
          %1215 = vst.msk [vmem:[%s1200 + $0x38] sm:$0xf] %vm911, %v1133
          %1216 = vst.msk [vmem:[%s1200 + $0x3c] sm:$0xf] %vm911, %v1135
          %1217 = vst.msk [vmem:[%s1200 + $0x40] sm:$0xf] %vm911, %v1137
          %1218 = vst.msk [vmem:[%s1200 + $0x44] sm:$0xf] %vm911, %v1139
          %1219 = vst.msk [vmem:[%s1200 + $0x48] sm:$0xf] %vm911, %v1141
          %1220 = vst.msk [vmem:[%s1200 + $0x4c] sm:$0xf] %vm911, %v1143
          %1221 = vst.msk [vmem:[%s1200 + $0x50] sm:$0xf] %vm911, %v1145
          %1222 = vst.msk [vmem:[%s1200 + $0x54] sm:$0xf] %vm911, %v1147
          %1223 = vst.msk [vmem:[%s1200 + $0x58] sm:$0xf] %vm911, %v1149
          %1224 = vst.msk [vmem:[%s1200 + $0x5c] sm:$0xf] %vm911, %v1151
          %1225 = vst.msk [vmem:[%s1200 + $0x60] sm:$0xf] %vm911, %v1153
          %1226 = vst.msk [vmem:[%s1200 + $0x64] sm:$0xf] %vm911, %v1155
          %1227 = vst.msk [vmem:[%s1200 + $0x68] sm:$0xf] %vm911, %v1157
          %1228 = vst.msk [vmem:[%s1200 + $0x6c] sm:$0xf] %vm911, %v1159
          %1229 = vst.msk [vmem:[%s1200 + $0x70] sm:$0xf] %vm911, %v1161
          %1230 = vst.msk [vmem:[%s1200 + $0x74] sm:$0xf] %vm911, %v1163
          %1231 = vst.msk [vmem:[%s1200 + $0x78] sm:$0xf] %vm911, %v1165
          %1232 = vst.msk [vmem:[%s1200 + $0x7c] sm:$0xf] %vm911, %v1167
          %1265 = vrot.lane.b32.xlu0 %v944, 64
          %v1266 = vpop.permute.xlu0 %1265
          %1267 = vrot.lane.b32.xlu0 %v945, 64
          %v1268 = vpop.permute.xlu0 %1267
          %1269 = vrot.lane.b32.xlu0 %v946, 64
          %v1270 = vpop.permute.xlu0 %1269
          %1271 = vrot.lane.b32.xlu0 %v947, 64
          %v1272 = vpop.permute.xlu0 %1271
          %1273 = vrot.lane.b32.xlu0 %v948, 64
          %v1274 = vpop.permute.xlu0 %1273
          %1275 = vrot.lane.b32.xlu0 %v949, 64
          %v1276 = vpop.permute.xlu0 %1275
          %1277 = vrot.lane.b32.xlu0 %v950, 64
          %v1278 = vpop.permute.xlu0 %1277
          %1279 = vrot.lane.b32.xlu0 %v951, 64
          %v1280 = vpop.permute.xlu0 %1279
          %1281 = vrot.lane.b32.xlu0 %v952, 64
          %v1282 = vpop.permute.xlu0 %1281
          %1283 = vrot.lane.b32.xlu0 %v953, 64
          %v1284 = vpop.permute.xlu0 %1283
          %1285 = vrot.lane.b32.xlu0 %v954, 64
          %v1286 = vpop.permute.xlu0 %1285
          %1287 = vrot.lane.b32.xlu0 %v955, 64
          %v1288 = vpop.permute.xlu0 %1287
          %1289 = vrot.lane.b32.xlu0 %v956, 64
          %v1290 = vpop.permute.xlu0 %1289
          %1291 = vrot.lane.b32.xlu0 %v957, 64
          %v1292 = vpop.permute.xlu0 %1291
          %1293 = vrot.lane.b32.xlu0 %v958, 64
          %v1294 = vpop.permute.xlu0 %1293
          %1295 = vrot.lane.b32.xlu0 %v959, 64
          %v1296 = vpop.permute.xlu0 %1295
          %1297 = vrot.lane.b32.xlu0 %v960, 64
          %v1298 = vpop.permute.xlu0 %1297
          %1299 = vrot.lane.b32.xlu0 %v961, 64
          %v1300 = vpop.permute.xlu0 %1299
          %1301 = vrot.lane.b32.xlu0 %v962, 64
          %v1302 = vpop.permute.xlu0 %1301
          %1303 = vrot.lane.b32.xlu0 %v963, 64
          %v1304 = vpop.permute.xlu0 %1303
          %1305 = vrot.lane.b32.xlu0 %v964, 64
          %v1306 = vpop.permute.xlu0 %1305
          %1307 = vrot.lane.b32.xlu0 %v965, 64
          %v1308 = vpop.permute.xlu0 %1307
          %1309 = vrot.lane.b32.xlu0 %v966, 64
          %v1310 = vpop.permute.xlu0 %1309
          %1311 = vrot.lane.b32.xlu0 %v967, 64
          %v1312 = vpop.permute.xlu0 %1311
          %1313 = vrot.lane.b32.xlu0 %v968, 64
          %v1314 = vpop.permute.xlu0 %1313
          %1315 = vrot.lane.b32.xlu0 %v969, 64
          %v1316 = vpop.permute.xlu0 %1315
          %1317 = vrot.lane.b32.xlu0 %v970, 64
          %v1318 = vpop.permute.xlu0 %1317
          %1319 = vrot.lane.b32.xlu0 %v971, 64
          %v1320 = vpop.permute.xlu0 %1319
          %1321 = vrot.lane.b32.xlu0 %v972, 64
          %v1322 = vpop.permute.xlu0 %1321
          %1323 = vrot.lane.b32.xlu0 %v973, 64
          %v1324 = vpop.permute.xlu0 %1323
          %1325 = vrot.lane.b32.xlu0 %v974, 64
          %v1326 = vpop.permute.xlu0 %1325
          %1327 = vrot.lane.b32.xlu0 %v975, 64
          %v1328 = vpop.permute.xlu0 %1327
          %s1361 = scalar_lea.vmem [#allocation3], 128
          %1362 = vst.msk [vmem:[%s1361] sm:$0xf] %vm911, %v1266
          %1363 = vst.msk [vmem:[%s1361 + $0x4] sm:$0xf] %vm911, %v1268
          %1364 = vst.msk [vmem:[%s1361 + $0x8] sm:$0xf] %vm911, %v1270
          %1365 = vst.msk [vmem:[%s1361 + $0xc] sm:$0xf] %vm911, %v1272
          %1366 = vst.msk [vmem:[%s1361 + $0x10] sm:$0xf] %vm911, %v1274
          %1367 = vst.msk [vmem:[%s1361 + $0x14] sm:$0xf] %vm911, %v1276
          %1368 = vst.msk [vmem:[%s1361 + $0x18] sm:$0xf] %vm911, %v1278
          %1369 = vst.msk [vmem:[%s1361 + $0x1c] sm:$0xf] %vm911, %v1280
          %1370 = vst.msk [vmem:[%s1361 + $0x20] sm:$0xf] %vm911, %v1282
          %1371 = vst.msk [vmem:[%s1361 + $0x24] sm:$0xf] %vm911, %v1284
          %1372 = vst.msk [vmem:[%s1361 + $0x28] sm:$0xf] %vm911, %v1286
          %1373 = vst.msk [vmem:[%s1361 + $0x2c] sm:$0xf] %vm911, %v1288
          %1374 = vst.msk [vmem:[%s1361 + $0x30] sm:$0xf] %vm911, %v1290
          %1375 = vst.msk [vmem:[%s1361 + $0x34] sm:$0xf] %vm911, %v1292
          %1376 = vst.msk [vmem:[%s1361 + $0x38] sm:$0xf] %vm911, %v1294
          %1377 = vst.msk [vmem:[%s1361 + $0x3c] sm:$0xf] %vm911, %v1296
          %1378 = vst.msk [vmem:[%s1361 + $0x40] sm:$0xf] %vm911, %v1298
          %1379 = vst.msk [vmem:[%s1361 + $0x44] sm:$0xf] %vm911, %v1300
          %1380 = vst.msk [vmem:[%s1361 + $0x48] sm:$0xf] %vm911, %v1302
          %1381 = vst.msk [vmem:[%s1361 + $0x4c] sm:$0xf] %vm911, %v1304
          %1382 = vst.msk [vmem:[%s1361 + $0x50] sm:$0xf] %vm911, %v1306
          %1383 = vst.msk [vmem:[%s1361 + $0x54] sm:$0xf] %vm911, %v1308
          %1384 = vst.msk [vmem:[%s1361 + $0x58] sm:$0xf] %vm911, %v1310
          %1385 = vst.msk [vmem:[%s1361 + $0x5c] sm:$0xf] %vm911, %v1312
          %1386 = vst.msk [vmem:[%s1361 + $0x60] sm:$0xf] %vm911, %v1314
          %1387 = vst.msk [vmem:[%s1361 + $0x64] sm:$0xf] %vm911, %v1316
          %1388 = vst.msk [vmem:[%s1361 + $0x68] sm:$0xf] %vm911, %v1318
          %1389 = vst.msk [vmem:[%s1361 + $0x6c] sm:$0xf] %vm911, %v1320
          %1390 = vst.msk [vmem:[%s1361 + $0x70] sm:$0xf] %vm911, %v1322
          %1391 = vst.msk [vmem:[%s1361 + $0x74] sm:$0xf] %vm911, %v1324
          %1392 = vst.msk [vmem:[%s1361 + $0x78] sm:$0xf] %vm911, %v1326
          %1393 = vst.msk [vmem:[%s1361 + $0x7c] sm:$0xf] %vm911, %v1328
          %1426 = vrot.lane.b32.xlu0 %v1008, 64
          %v1427 = vpop.permute.xlu0 %1426
          %1428 = vrot.lane.b32.xlu0 %v1009, 64
          %v1429 = vpop.permute.xlu0 %1428
          %1430 = vrot.lane.b32.xlu0 %v1010, 64
          %v1431 = vpop.permute.xlu0 %1430
          %1432 = vrot.lane.b32.xlu0 %v1011, 64
          %v1433 = vpop.permute.xlu0 %1432
          %1434 = vrot.lane.b32.xlu0 %v1012, 64
          %v1435 = vpop.permute.xlu0 %1434
          %1436 = vrot.lane.b32.xlu0 %v1013, 64
          %v1437 = vpop.permute.xlu0 %1436
          %1438 = vrot.lane.b32.xlu0 %v1014, 64
          %v1439 = vpop.permute.xlu0 %1438
          %1440 = vrot.lane.b32.xlu0 %v1015, 64
          %v1441 = vpop.permute.xlu0 %1440
          %1442 = vrot.lane.b32.xlu0 %v1016, 64
          %v1443 = vpop.permute.xlu0 %1442
          %1444 = vrot.lane.b32.xlu0 %v1017, 64
          %v1445 = vpop.permute.xlu0 %1444
          %1446 = vrot.lane.b32.xlu0 %v1018, 64
          %v1447 = vpop.permute.xlu0 %1446
          %1448 = vrot.lane.b32.xlu0 %v1019, 64
          %v1449 = vpop.permute.xlu0 %1448
          %1450 = vrot.lane.b32.xlu0 %v1020, 64
          %v1451 = vpop.permute.xlu0 %1450
          %1452 = vrot.lane.b32.xlu0 %v1021, 64
          %v1453 = vpop.permute.xlu0 %1452
          %1454 = vrot.lane.b32.xlu0 %v1022, 64
          %v1455 = vpop.permute.xlu0 %1454
          %1456 = vrot.lane.b32.xlu0 %v1023, 64
          %v1457 = vpop.permute.xlu0 %1456
          %1458 = vrot.lane.b32.xlu0 %v1024, 64
          %v1459 = vpop.permute.xlu0 %1458
          %1460 = vrot.lane.b32.xlu0 %v1025, 64
          %v1461 = vpop.permute.xlu0 %1460
          %1462 = vrot.lane.b32.xlu0 %v1026, 64
          %v1463 = vpop.permute.xlu0 %1462
          %1464 = vrot.lane.b32.xlu0 %v1027, 64
          %v1465 = vpop.permute.xlu0 %1464
          %1466 = vrot.lane.b32.xlu0 %v1028, 64
          %v1467 = vpop.permute.xlu0 %1466
          %1468 = vrot.lane.b32.xlu0 %v1029, 64
          %v1469 = vpop.permute.xlu0 %1468
          %1470 = vrot.lane.b32.xlu0 %v1030, 64
          %v1471 = vpop.permute.xlu0 %1470
          %1472 = vrot.lane.b32.xlu0 %v1031, 64
          %v1473 = vpop.permute.xlu0 %1472
          %1474 = vrot.lane.b32.xlu0 %v1032, 64
          %v1475 = vpop.permute.xlu0 %1474
          %1476 = vrot.lane.b32.xlu0 %v1033, 64
          %v1477 = vpop.permute.xlu0 %1476
          %1478 = vrot.lane.b32.xlu0 %v1034, 64
          %v1479 = vpop.permute.xlu0 %1478
          %1480 = vrot.lane.b32.xlu0 %v1035, 64
          %v1481 = vpop.permute.xlu0 %1480
          %1482 = vrot.lane.b32.xlu0 %v1036, 64
          %v1483 = vpop.permute.xlu0 %1482
          %1484 = vrot.lane.b32.xlu0 %v1037, 64
          %v1485 = vpop.permute.xlu0 %1484
          %1486 = vrot.lane.b32.xlu0 %v1038, 64
          %v1487 = vpop.permute.xlu0 %1486
          %1488 = vrot.lane.b32.xlu0 %v1039, 64
          %v1489 = vpop.permute.xlu0 %1488
          %s1522 = scalar_lea.vmem [#allocation4], 128
          %1523 = vst.msk [vmem:[%s1522] sm:$0xf] %vm911, %v1427
          %1524 = vst.msk [vmem:[%s1522 + $0x4] sm:$0xf] %vm911, %v1429
          %1525 = vst.msk [vmem:[%s1522 + $0x8] sm:$0xf] %vm911, %v1431
          %1526 = vst.msk [vmem:[%s1522 + $0xc] sm:$0xf] %vm911, %v1433
          %1527 = vst.msk [vmem:[%s1522 + $0x10] sm:$0xf] %vm911, %v1435
          %1528 = vst.msk [vmem:[%s1522 + $0x14] sm:$0xf] %vm911, %v1437
          %1529 = vst.msk [vmem:[%s1522 + $0x18] sm:$0xf] %vm911, %v1439
          %1530 = vst.msk [vmem:[%s1522 + $0x1c] sm:$0xf] %vm911, %v1441
          %1531 = vst.msk [vmem:[%s1522 + $0x20] sm:$0xf] %vm911, %v1443
          %1532 = vst.msk [vmem:[%s1522 + $0x24] sm:$0xf] %vm911, %v1445
          %1533 = vst.msk [vmem:[%s1522 + $0x28] sm:$0xf] %vm911, %v1447
          %1534 = vst.msk [vmem:[%s1522 + $0x2c] sm:$0xf] %vm911, %v1449
          %1535 = vst.msk [vmem:[%s1522 + $0x30] sm:$0xf] %vm911, %v1451
          %1536 = vst.msk [vmem:[%s1522 + $0x34] sm:$0xf] %vm911, %v1453
          %1537 = vst.msk [vmem:[%s1522 + $0x38] sm:$0xf] %vm911, %v1455
          %1538 = vst.msk [vmem:[%s1522 + $0x3c] sm:$0xf] %vm911, %v1457
          %1539 = vst.msk [vmem:[%s1522 + $0x40] sm:$0xf] %vm911, %v1459
          %1540 = vst.msk [vmem:[%s1522 + $0x44] sm:$0xf] %vm911, %v1461
          %1541 = vst.msk [vmem:[%s1522 + $0x48] sm:$0xf] %vm911, %v1463
          %1542 = vst.msk [vmem:[%s1522 + $0x4c] sm:$0xf] %vm911, %v1465
          %1543 = vst.msk [vmem:[%s1522 + $0x50] sm:$0xf] %vm911, %v1467
          %1544 = vst.msk [vmem:[%s1522 + $0x54] sm:$0xf] %vm911, %v1469
          %1545 = vst.msk [vmem:[%s1522 + $0x58] sm:$0xf] %vm911, %v1471
          %1546 = vst.msk [vmem:[%s1522 + $0x5c] sm:$0xf] %vm911, %v1473
          %1547 = vst.msk [vmem:[%s1522 + $0x60] sm:$0xf] %vm911, %v1475
          %1548 = vst.msk [vmem:[%s1522 + $0x64] sm:$0xf] %vm911, %v1477
          %1549 = vst.msk [vmem:[%s1522 + $0x68] sm:$0xf] %vm911, %v1479
          %1550 = vst.msk [vmem:[%s1522 + $0x6c] sm:$0xf] %vm911, %v1481
          %1551 = vst.msk [vmem:[%s1522 + $0x70] sm:$0xf] %vm911, %v1483
          %1552 = vst.msk [vmem:[%s1522 + $0x74] sm:$0xf] %vm911, %v1485
          %1553 = vst.msk [vmem:[%s1522 + $0x78] sm:$0xf] %vm911, %v1487
          %1554 = vst.msk [vmem:[%s1522 + $0x7c] sm:$0xf] %vm911, %v1489
        $region64: #{tpu_custom_call.1} parent=43 // pred_fallthru
          _
        %s1555 = smul.u32 %s37, 128
        %s1556 = sshra.s32 %s1555, 3
        %s1557 = sand.u32 %s1555, 7
        %s1558 = smul.addr %s1556, 4
        %s1559 = scalar_lea.vmem [#allocation2], %s1558
        %v1560 = vld [vmem:[%s1559] sm:$0xf]
        %v1561 = vld [vmem:[%s1559 + $0x4] sm:$0xf]
        %v1562 = vld [vmem:[%s1559 + $0x8] sm:$0xf]
        %v1563 = vld [vmem:[%s1559 + $0xc] sm:$0xf]
        %v1564 = vld [vmem:[%s1559 + $0x10] sm:$0xf]
        %v1565 = vld [vmem:[%s1559 + $0x14] sm:$0xf]
        %v1566 = vld [vmem:[%s1559 + $0x18] sm:$0xf]
        %v1567 = vld [vmem:[%s1559 + $0x1c] sm:$0xf]
        %v1568 = vld [vmem:[%s1559 + $0x20] sm:$0xf]
        %v1569 = vld [vmem:[%s1559 + $0x24] sm:$0xf]
        %v1570 = vld [vmem:[%s1559 + $0x28] sm:$0xf]
        %v1571 = vld [vmem:[%s1559 + $0x2c] sm:$0xf]
        %v1572 = vld [vmem:[%s1559 + $0x30] sm:$0xf]
        %v1573 = vld [vmem:[%s1559 + $0x34] sm:$0xf]
        %v1574 = vld [vmem:[%s1559 + $0x38] sm:$0xf]
        %v1575 = vld [vmem:[%s1559 + $0x3c] sm:$0xf]
        %v1576 = vld [vmem:[%s1559 + $0x80] sm:$0xf]
        %v1577 = vld [vmem:[%s1559 + $0x84] sm:$0xf]
        %v1578 = vld [vmem:[%s1559 + $0x88] sm:$0xf]
        %v1579 = vld [vmem:[%s1559 + $0x8c] sm:$0xf]
        %v1580 = vld [vmem:[%s1559 + $0x90] sm:$0xf]
        %v1581 = vld [vmem:[%s1559 + $0x94] sm:$0xf]
        %v1582 = vld [vmem:[%s1559 + $0x98] sm:$0xf]
        %v1583 = vld [vmem:[%s1559 + $0x9c] sm:$0xf]
        %v1584 = vld [vmem:[%s1559 + $0xa0] sm:$0xf]
        %v1585 = vld [vmem:[%s1559 + $0xa4] sm:$0xf]
        %v1586 = vld [vmem:[%s1559 + $0xa8] sm:$0xf]
        %v1587 = vld [vmem:[%s1559 + $0xac] sm:$0xf]
        %v1588 = vld [vmem:[%s1559 + $0xb0] sm:$0xf]
        %v1589 = vld [vmem:[%s1559 + $0xb4] sm:$0xf]
        %v1590 = vld [vmem:[%s1559 + $0xb8] sm:$0xf]
        %v1591 = vld [vmem:[%s1559 + $0xbc] sm:$0xf]
        %v1592 = vld [vmem:[#allocation3] sm:$0xf]
        %v1593 = vld [vmem:[#allocation3 + $0x4] sm:$0xf]
        %v1594 = vld [vmem:[#allocation3 + $0x8] sm:$0xf]
        %v1595 = vld [vmem:[#allocation3 + $0xc] sm:$0xf]
        %v1596 = vld [vmem:[#allocation3 + $0x10] sm:$0xf]
        %v1597 = vld [vmem:[#allocation3 + $0x14] sm:$0xf]
        %v1598 = vld [vmem:[#allocation3 + $0x18] sm:$0xf]
        %v1599 = vld [vmem:[#allocation3 + $0x1c] sm:$0xf]
        %v1600 = vld [vmem:[#allocation3 + $0x20] sm:$0xf]
        %v1601 = vld [vmem:[#allocation3 + $0x24] sm:$0xf]
        %v1602 = vld [vmem:[#allocation3 + $0x28] sm:$0xf]
        %v1603 = vld [vmem:[#allocation3 + $0x2c] sm:$0xf]
        %v1604 = vld [vmem:[#allocation3 + $0x30] sm:$0xf]
        %v1605 = vld [vmem:[#allocation3 + $0x34] sm:$0xf]
        %v1606 = vld [vmem:[#allocation3 + $0x38] sm:$0xf]
        %v1607 = vld [vmem:[#allocation3 + $0x3c] sm:$0xf]
        %v1608 = vld [vmem:[#allocation3 + $0x40] sm:$0xf]
        %v1609 = vld [vmem:[#allocation3 + $0x44] sm:$0xf]
        %v1610 = vld [vmem:[#allocation3 + $0x48] sm:$0xf]
        %v1611 = vld [vmem:[#allocation3 + $0x4c] sm:$0xf]
        %v1612 = vld [vmem:[#allocation3 + $0x50] sm:$0xf]
        %v1613 = vld [vmem:[#allocation3 + $0x54] sm:$0xf]
        %v1614 = vld [vmem:[#allocation3 + $0x58] sm:$0xf]
        %v1615 = vld [vmem:[#allocation3 + $0x5c] sm:$0xf]
        %v1616 = vld [vmem:[#allocation3 + $0x60] sm:$0xf]
        %v1617 = vld [vmem:[#allocation3 + $0x64] sm:$0xf]
        %v1618 = vld [vmem:[#allocation3 + $0x68] sm:$0xf]
        %v1619 = vld [vmem:[#allocation3 + $0x6c] sm:$0xf]
        %v1620 = vld [vmem:[#allocation3 + $0x70] sm:$0xf]
        %v1621 = vld [vmem:[#allocation3 + $0x74] sm:$0xf]
        %v1622 = vld [vmem:[#allocation3 + $0x78] sm:$0xf]
        %v1623 = vld [vmem:[#allocation3 + $0x7c] sm:$0xf]
        %v1624 = vld [vmem:[#allocation3 + $0x80] sm:$0xf]
        %v1625 = vld [vmem:[#allocation3 + $0x84] sm:$0xf]
        %v1626 = vld [vmem:[#allocation3 + $0x88] sm:$0xf]
        %v1627 = vld [vmem:[#allocation3 + $0x8c] sm:$0xf]
        %v1628 = vld [vmem:[#allocation3 + $0x90] sm:$0xf]
        %v1629 = vld [vmem:[#allocation3 + $0x94] sm:$0xf]
        %v1630 = vld [vmem:[#allocation3 + $0x98] sm:$0xf]
        %v1631 = vld [vmem:[#allocation3 + $0x9c] sm:$0xf]
        %v1632 = vld [vmem:[#allocation3 + $0xa0] sm:$0xf]
        %v1633 = vld [vmem:[#allocation3 + $0xa4] sm:$0xf]
        %v1634 = vld [vmem:[#allocation3 + $0xa8] sm:$0xf]
        %v1635 = vld [vmem:[#allocation3 + $0xac] sm:$0xf]
        %v1636 = vld [vmem:[#allocation3 + $0xb0] sm:$0xf]
        %v1637 = vld [vmem:[#allocation3 + $0xb4] sm:$0xf]
        %v1638 = vld [vmem:[#allocation3 + $0xb8] sm:$0xf]
        %v1639 = vld [vmem:[#allocation3 + $0xbc] sm:$0xf]
        %v1640 = vld [vmem:[#allocation3 + $0xc0] sm:$0xf]
        %v1641 = vld [vmem:[#allocation3 + $0xc4] sm:$0xf]
        %v1642 = vld [vmem:[#allocation3 + $0xc8] sm:$0xf]
        %v1643 = vld [vmem:[#allocation3 + $0xcc] sm:$0xf]
        %v1644 = vld [vmem:[#allocation3 + $0xd0] sm:$0xf]
        %v1645 = vld [vmem:[#allocation3 + $0xd4] sm:$0xf]
        %v1646 = vld [vmem:[#allocation3 + $0xd8] sm:$0xf]
        %v1647 = vld [vmem:[#allocation3 + $0xdc] sm:$0xf]
        %v1648 = vld [vmem:[#allocation3 + $0xe0] sm:$0xf]
        %v1649 = vld [vmem:[#allocation3 + $0xe4] sm:$0xf]
        %v1650 = vld [vmem:[#allocation3 + $0xe8] sm:$0xf]
        %v1651 = vld [vmem:[#allocation3 + $0xec] sm:$0xf]
        %v1652 = vld [vmem:[#allocation3 + $0xf0] sm:$0xf]
        %v1653 = vld [vmem:[#allocation3 + $0xf4] sm:$0xf]
        %v1654 = vld [vmem:[#allocation3 + $0xf8] sm:$0xf]
        %v1655 = vld [vmem:[#allocation3 + $0xfc] sm:$0xf]
        %v1656 = vld [vmem:[#allocation4] sm:$0xf]
        %v1657 = vld [vmem:[#allocation4 + $0x4] sm:$0xf]
        %v1658 = vld [vmem:[#allocation4 + $0x8] sm:$0xf]
        %v1659 = vld [vmem:[#allocation4 + $0xc] sm:$0xf]
        %v1660 = vld [vmem:[#allocation4 + $0x10] sm:$0xf]
        %v1661 = vld [vmem:[#allocation4 + $0x14] sm:$0xf]
        %v1662 = vld [vmem:[#allocation4 + $0x18] sm:$0xf]
        %v1663 = vld [vmem:[#allocation4 + $0x1c] sm:$0xf]
        %v1664 = vld [vmem:[#allocation4 + $0x20] sm:$0xf]
        %v1665 = vld [vmem:[#allocation4 + $0x24] sm:$0xf]
        %v1666 = vld [vmem:[#allocation4 + $0x28] sm:$0xf]
        %v1667 = vld [vmem:[#allocation4 + $0x2c] sm:$0xf]
        %v1668 = vld [vmem:[#allocation4 + $0x30] sm:$0xf]
        %v1669 = vld [vmem:[#allocation4 + $0x34] sm:$0xf]
        %v1670 = vld [vmem:[#allocation4 + $0x38] sm:$0xf]
        %v1671 = vld [vmem:[#allocation4 + $0x3c] sm:$0xf]
        %v1672 = vld [vmem:[#allocation4 + $0x40] sm:$0xf]
        %v1673 = vld [vmem:[#allocation4 + $0x44] sm:$0xf]
        %v1674 = vld [vmem:[#allocation4 + $0x48] sm:$0xf]
        %v1675 = vld [vmem:[#allocation4 + $0x4c] sm:$0xf]
        %v1676 = vld [vmem:[#allocation4 + $0x50] sm:$0xf]
        %v1677 = vld [vmem:[#allocation4 + $0x54] sm:$0xf]
        %v1678 = vld [vmem:[#allocation4 + $0x58] sm:$0xf]
        %v1679 = vld [vmem:[#allocation4 + $0x5c] sm:$0xf]
        %v1680 = vld [vmem:[#allocation4 + $0x60] sm:$0xf]
        %v1681 = vld [vmem:[#allocation4 + $0x64] sm:$0xf]
        %v1682 = vld [vmem:[#allocation4 + $0x68] sm:$0xf]
        %v1683 = vld [vmem:[#allocation4 + $0x6c] sm:$0xf]
        %v1684 = vld [vmem:[#allocation4 + $0x70] sm:$0xf]
        %v1685 = vld [vmem:[#allocation4 + $0x74] sm:$0xf]
        %v1686 = vld [vmem:[#allocation4 + $0x78] sm:$0xf]
        %v1687 = vld [vmem:[#allocation4 + $0x7c] sm:$0xf]
        %v1688 = vld [vmem:[#allocation4 + $0x80] sm:$0xf]
        %v1689 = vld [vmem:[#allocation4 + $0x84] sm:$0xf]
        %v1690 = vld [vmem:[#allocation4 + $0x88] sm:$0xf]
        %v1691 = vld [vmem:[#allocation4 + $0x8c] sm:$0xf]
        %v1692 = vld [vmem:[#allocation4 + $0x90] sm:$0xf]
        %v1693 = vld [vmem:[#allocation4 + $0x94] sm:$0xf]
        %v1694 = vld [vmem:[#allocation4 + $0x98] sm:$0xf]
        %v1695 = vld [vmem:[#allocation4 + $0x9c] sm:$0xf]
        %v1696 = vld [vmem:[#allocation4 + $0xa0] sm:$0xf]
        %v1697 = vld [vmem:[#allocation4 + $0xa4] sm:$0xf]
        %v1698 = vld [vmem:[#allocation4 + $0xa8] sm:$0xf]
        %v1699 = vld [vmem:[#allocation4 + $0xac] sm:$0xf]
        %v1700 = vld [vmem:[#allocation4 + $0xb0] sm:$0xf]
        %v1701 = vld [vmem:[#allocation4 + $0xb4] sm:$0xf]
        %v1702 = vld [vmem:[#allocation4 + $0xb8] sm:$0xf]
        %v1703 = vld [vmem:[#allocation4 + $0xbc] sm:$0xf]
        %v1704 = vld [vmem:[#allocation4 + $0xc0] sm:$0xf]
        %v1705 = vld [vmem:[#allocation4 + $0xc4] sm:$0xf]
        %v1706 = vld [vmem:[#allocation4 + $0xc8] sm:$0xf]
        %v1707 = vld [vmem:[#allocation4 + $0xcc] sm:$0xf]
        %v1708 = vld [vmem:[#allocation4 + $0xd0] sm:$0xf]
        %v1709 = vld [vmem:[#allocation4 + $0xd4] sm:$0xf]
        %v1710 = vld [vmem:[#allocation4 + $0xd8] sm:$0xf]
        %v1711 = vld [vmem:[#allocation4 + $0xdc] sm:$0xf]
        %v1712 = vld [vmem:[#allocation4 + $0xe0] sm:$0xf]
        %v1713 = vld [vmem:[#allocation4 + $0xe4] sm:$0xf]
        %v1714 = vld [vmem:[#allocation4 + $0xe8] sm:$0xf]
        %v1715 = vld [vmem:[#allocation4 + $0xec] sm:$0xf]
        %v1716 = vld [vmem:[#allocation4 + $0xf0] sm:$0xf]
        %v1717 = vld [vmem:[#allocation4 + $0xf4] sm:$0xf]
        %v1718 = vld [vmem:[#allocation4 + $0xf8] sm:$0xf]
        %v1719 = vld [vmem:[#allocation4 + $0xfc] sm:$0xf]
        %v1736 = vunpack.c.l.b16 %v1560
        %v1737 = vunpack.c.l.b16 %v1561
        %v1738 = vunpack.c.l.b16 %v1562
        %v1739 = vunpack.c.l.b16 %v1563
        %v1740 = vunpack.c.l.b16 %v1564
        %v1741 = vunpack.c.l.b16 %v1565
        %v1742 = vunpack.c.l.b16 %v1566
        %v1743 = vunpack.c.l.b16 %v1567
        %v1744 = vunpack.c.l.b16 %v1568
        %v1745 = vunpack.c.l.b16 %v1569
        %v1746 = vunpack.c.l.b16 %v1570
        %v1747 = vunpack.c.l.b16 %v1571
        %v1748 = vunpack.c.l.b16 %v1572
        %v1749 = vunpack.c.l.b16 %v1573
        %v1750 = vunpack.c.l.b16 %v1574
        %v1751 = vunpack.c.l.b16 %v1575
        %v1752 = vpack.c.b16 %v1737, %v1736
        %v1753 = vpack.c.b16 %v1739, %v1738
        %v1754 = vpack.c.b16 %v1741, %v1740
        %v1755 = vpack.c.b16 %v1743, %v1742
        %v1756 = vpack.c.b16 %v1745, %v1744
        %v1757 = vpack.c.b16 %v1747, %v1746
        %v1758 = vpack.c.b16 %v1749, %v1748
        %v1759 = vpack.c.b16 %v1751, %v1750
        %v1792 = vunpack.c.l.b16 %v1592
        %v1793 = vunpack.c.l.b16 %v1593
        %v1794 = vunpack.c.l.b16 %v1594
        %v1795 = vunpack.c.l.b16 %v1595
        %v1796 = vunpack.c.l.b16 %v1596
        %v1797 = vunpack.c.l.b16 %v1597
        %v1798 = vunpack.c.l.b16 %v1598
        %v1799 = vunpack.c.l.b16 %v1599
        %v1800 = vunpack.c.l.b16 %v1600
        %v1801 = vunpack.c.l.b16 %v1601
        %v1802 = vunpack.c.l.b16 %v1602
        %v1803 = vunpack.c.l.b16 %v1603
        %v1804 = vunpack.c.l.b16 %v1604
        %v1805 = vunpack.c.l.b16 %v1605
        %v1806 = vunpack.c.l.b16 %v1606
        %v1807 = vunpack.c.l.b16 %v1607
        %v1808 = vunpack.c.l.b16 %v1608
        %v1809 = vunpack.c.l.b16 %v1609
        %v1810 = vunpack.c.l.b16 %v1610
        %v1811 = vunpack.c.l.b16 %v1611
        %v1812 = vunpack.c.l.b16 %v1612
        %v1813 = vunpack.c.l.b16 %v1613
        %v1814 = vunpack.c.l.b16 %v1614
        %v1815 = vunpack.c.l.b16 %v1615
        %v1816 = vunpack.c.l.b16 %v1616
        %v1817 = vunpack.c.l.b16 %v1617
        %v1818 = vunpack.c.l.b16 %v1618
        %v1819 = vunpack.c.l.b16 %v1619
        %v1820 = vunpack.c.l.b16 %v1620
        %v1821 = vunpack.c.l.b16 %v1621
        %v1822 = vunpack.c.l.b16 %v1622
        %v1823 = vunpack.c.l.b16 %v1623
        %v1824 = vpack.c.b16 %v1793, %v1792
        %v1825 = vpack.c.b16 %v1795, %v1794
        %v1826 = vpack.c.b16 %v1797, %v1796
        %v1827 = vpack.c.b16 %v1799, %v1798
        %v1828 = vpack.c.b16 %v1801, %v1800
        %v1829 = vpack.c.b16 %v1803, %v1802
        %v1830 = vpack.c.b16 %v1805, %v1804
        %v1831 = vpack.c.b16 %v1807, %v1806
        %v1832 = vpack.c.b16 %v1809, %v1808
        %v1833 = vpack.c.b16 %v1811, %v1810
        %v1834 = vpack.c.b16 %v1813, %v1812
        %v1835 = vpack.c.b16 %v1815, %v1814
        %v1836 = vpack.c.b16 %v1817, %v1816
        %v1837 = vpack.c.b16 %v1819, %v1818
        %v1838 = vpack.c.b16 %v1821, %v1820
        %v1839 = vpack.c.b16 %v1823, %v1822
        %vm1840 = vcmask 523264
        %v1842 = vsel %vm1840, %v1752, 0
        %v1845 = vsel %vm1840, %v1753, 0
        %v1848 = vsel %vm1840, %v1754, 0
        %v1851 = vsel %vm1840, %v1755, 0
        %v1854 = vsel %vm1840, %v1756, 0
        %v1857 = vsel %vm1840, %v1757, 0
        %v1860 = vsel %vm1840, %v1758, 0
        %v1863 = vsel %vm1840, %v1759, 0
        %v1866 = vsel %vm1840, %v1824, 0
        %v1869 = vsel %vm1840, %v1825, 0
        %v1872 = vsel %vm1840, %v1826, 0
        %v1875 = vsel %vm1840, %v1827, 0
        %v1878 = vsel %vm1840, %v1828, 0
        %v1881 = vsel %vm1840, %v1829, 0
        %v1884 = vsel %vm1840, %v1830, 0
        %v1887 = vsel %vm1840, %v1831, 0
        %v1890 = vsel %vm1840, %v1832, 0
        %v1893 = vsel %vm1840, %v1833, 0
        %v1896 = vsel %vm1840, %v1834, 0
        %v1899 = vsel %vm1840, %v1835, 0
        %v1902 = vsel %vm1840, %v1836, 0
        %v1905 = vsel %vm1840, %v1837, 0
        %v1908 = vsel %vm1840, %v1838, 0
        %v1911 = vsel %vm1840, %v1839, 0
        %1913 = vmatpush.bf16.xpose.msra.mxu0 %v1887
        %1914 = vmatpush.bf16.xpose.msra.mxu0 %v1884
        %1915 = vmatpush.bf16.xpose.msra.mxu0 %v1881
        %1916 = vmatpush.bf16.xpose.msra.mxu0 %v1878
        %1917 = vmatpush.bf16.xpose.msra.mxu0 %v1875
        %1918 = vmatpush.bf16.xpose.msra.mxu0 %v1872
        %1919 = vmatpush.bf16.xpose.msra.mxu0 %v1869
        %1920 = vmatpush.bf16.xpose.msra.mxu0 %v1866
        %1921 = vmatmul.bf16.gmra.mxu0 %v1842
        %v1922 = vpop.f32.mrf.mxu0
        %v1923 = vadd.f32 0.0, %v1922
        %v1924 = vpop.f32.mrf.mxu0
        %v1925 = vadd.f32 0.0, %v1924
        %1926 = vmatmul.bf16.gmra.mxu0 %v1845
        %v1927 = vpop.f32.mrf.mxu0
        %v1928 = vadd.f32 0.0, %v1927
        %v1929 = vpop.f32.mrf.mxu0
        %v1930 = vadd.f32 0.0, %v1929
        %1931 = vmatmul.bf16.gmra.mxu0 %v1848
        %v1932 = vpop.f32.mrf.mxu0
        %v1933 = vadd.f32 0.0, %v1932
        %v1934 = vpop.f32.mrf.mxu0
        %v1935 = vadd.f32 0.0, %v1934
        %1936 = vmatmul.bf16.gmra.mxu0 %v1851
        %v1937 = vpop.f32.mrf.mxu0
        %v1938 = vadd.f32 0.0, %v1937
        %v1939 = vpop.f32.mrf.mxu0
        %v1940 = vadd.f32 0.0, %v1939
        %1941 = vmatmul.bf16.gmra.mxu0 %v1854
        %v1942 = vpop.f32.mrf.mxu0
        %v1943 = vadd.f32 0.0, %v1942
        %v1944 = vpop.f32.mrf.mxu0
        %v1945 = vadd.f32 0.0, %v1944
        %1946 = vmatmul.bf16.gmra.mxu0 %v1857
        %v1947 = vpop.f32.mrf.mxu0
        %v1948 = vadd.f32 0.0, %v1947
        %v1949 = vpop.f32.mrf.mxu0
        %v1950 = vadd.f32 0.0, %v1949
        %1951 = vmatmul.bf16.gmra.mxu0 %v1860
        %v1952 = vpop.f32.mrf.mxu0
        %v1953 = vadd.f32 0.0, %v1952
        %v1954 = vpop.f32.mrf.mxu0
        %v1955 = vadd.f32 0.0, %v1954
        %1956 = vmatmul.bf16.gmra.mxu0 %v1863
        %v1957 = vpop.f32.mrf.mxu0
        %v1958 = vadd.f32 0.0, %v1957
        %v1959 = vpop.f32.mrf.mxu0
        %v1960 = vadd.f32 0.0, %v1959
        %1961 = vdwg.mxu0
        %1962 = vmatpush.bf16.xpose.msra.mxu0 %v1911
        %1963 = vmatpush.bf16.xpose.msra.mxu0 %v1908
        %1964 = vmatpush.bf16.xpose.msra.mxu0 %v1905
        %1965 = vmatpush.bf16.xpose.msra.mxu0 %v1902
        %1966 = vmatpush.bf16.xpose.msra.mxu0 %v1899
        %1967 = vmatpush.bf16.xpose.msra.mxu0 %v1896
        %1968 = vmatpush.bf16.xpose.msra.mxu0 %v1893
        %1969 = vmatpush.bf16.xpose.msra.mxu0 %v1890
        %1970 = vmatmul.bf16.gmra.mxu0 %v1842
        %v1971 = vpop.f32.mrf.mxu0
        %v1972 = vadd.f32 0.0, %v1971
        %v1973 = vpop.f32.mrf.mxu0
        %v1974 = vadd.f32 0.0, %v1973
        %1975 = vmatmul.bf16.gmra.mxu0 %v1845
        %v1976 = vpop.f32.mrf.mxu0
        %v1977 = vadd.f32 0.0, %v1976
        %v1978 = vpop.f32.mrf.mxu0
        %v1979 = vadd.f32 0.0, %v1978
        %1980 = vmatmul.bf16.gmra.mxu0 %v1848
        %v1981 = vpop.f32.mrf.mxu0
        %v1982 = vadd.f32 0.0, %v1981
        %v1983 = vpop.f32.mrf.mxu0
        %v1984 = vadd.f32 0.0, %v1983
        %1985 = vmatmul.bf16.gmra.mxu0 %v1851
        %v1986 = vpop.f32.mrf.mxu0
        %v1987 = vadd.f32 0.0, %v1986
        %v1988 = vpop.f32.mrf.mxu0
        %v1989 = vadd.f32 0.0, %v1988
        %1990 = vmatmul.bf16.gmra.mxu0 %v1854
        %v1991 = vpop.f32.mrf.mxu0
        %v1992 = vadd.f32 0.0, %v1991
        %v1993 = vpop.f32.mrf.mxu0
        %v1994 = vadd.f32 0.0, %v1993
        %1995 = vmatmul.bf16.gmra.mxu0 %v1857
        %v1996 = vpop.f32.mrf.mxu0
        %v1997 = vadd.f32 0.0, %v1996
        %v1998 = vpop.f32.mrf.mxu0
        %v1999 = vadd.f32 0.0, %v1998
        %2000 = vmatmul.bf16.gmra.mxu0 %v1860
        %v2001 = vpop.f32.mrf.mxu0
        %v2002 = vadd.f32 0.0, %v2001
        %v2003 = vpop.f32.mrf.mxu0
        %v2004 = vadd.f32 0.0, %v2003
        %2005 = vmatmul.bf16.gmra.mxu0 %v1863
        %v2006 = vpop.f32.mrf.mxu0
        %v2007 = vadd.f32 0.0, %v2006
        %v2008 = vpop.f32.mrf.mxu0
        %v2009 = vadd.f32 0.0, %v2008
        %2010 = vdwg.mxu0
        %v2027 = vunpack.c.l.b16 %v1576
        %v2028 = vunpack.c.l.b16 %v1577
        %v2029 = vunpack.c.l.b16 %v1578
        %v2030 = vunpack.c.l.b16 %v1579
        %v2031 = vunpack.c.l.b16 %v1580
        %v2032 = vunpack.c.l.b16 %v1581
        %v2033 = vunpack.c.l.b16 %v1582
        %v2034 = vunpack.c.l.b16 %v1583
        %v2035 = vunpack.c.l.b16 %v1584
        %v2036 = vunpack.c.l.b16 %v1585
        %v2037 = vunpack.c.l.b16 %v1586
        %v2038 = vunpack.c.l.b16 %v1587
        %v2039 = vunpack.c.l.b16 %v1588
        %v2040 = vunpack.c.l.b16 %v1589
        %v2041 = vunpack.c.l.b16 %v1590
        %v2042 = vunpack.c.l.b16 %v1591
        %v2043 = vpack.c.b16 %v2028, %v2027
        %v2044 = vpack.c.b16 %v2030, %v2029
        %v2045 = vpack.c.b16 %v2032, %v2031
        %v2046 = vpack.c.b16 %v2034, %v2033
        %v2047 = vpack.c.b16 %v2036, %v2035
        %v2048 = vpack.c.b16 %v2038, %v2037
        %v2049 = vpack.c.b16 %v2040, %v2039
        %v2050 = vpack.c.b16 %v2042, %v2041
        %v2083 = vunpack.c.l.b16 %v1624
        %v2084 = vunpack.c.l.b16 %v1625
        %v2085 = vunpack.c.l.b16 %v1626
        %v2086 = vunpack.c.l.b16 %v1627
        %v2087 = vunpack.c.l.b16 %v1628
        %v2088 = vunpack.c.l.b16 %v1629
        %v2089 = vunpack.c.l.b16 %v1630
        %v2090 = vunpack.c.l.b16 %v1631
        %v2091 = vunpack.c.l.b16 %v1632
        %v2092 = vunpack.c.l.b16 %v1633
        %v2093 = vunpack.c.l.b16 %v1634
        %v2094 = vunpack.c.l.b16 %v1635
        %v2095 = vunpack.c.l.b16 %v1636
        %v2096 = vunpack.c.l.b16 %v1637
        %v2097 = vunpack.c.l.b16 %v1638
        %v2098 = vunpack.c.l.b16 %v1639
        %v2099 = vunpack.c.l.b16 %v1640
        %v2100 = vunpack.c.l.b16 %v1641
        %v2101 = vunpack.c.l.b16 %v1642
        %v2102 = vunpack.c.l.b16 %v1643
        %v2103 = vunpack.c.l.b16 %v1644
        %v2104 = vunpack.c.l.b16 %v1645
        %v2105 = vunpack.c.l.b16 %v1646
        %v2106 = vunpack.c.l.b16 %v1647
        %v2107 = vunpack.c.l.b16 %v1648
        %v2108 = vunpack.c.l.b16 %v1649
        %v2109 = vunpack.c.l.b16 %v1650
        %v2110 = vunpack.c.l.b16 %v1651
        %v2111 = vunpack.c.l.b16 %v1652
        %v2112 = vunpack.c.l.b16 %v1653
        %v2113 = vunpack.c.l.b16 %v1654
        %v2114 = vunpack.c.l.b16 %v1655
        %v2115 = vpack.c.b16 %v2084, %v2083
        %v2116 = vpack.c.b16 %v2086, %v2085
        %v2117 = vpack.c.b16 %v2088, %v2087
        %v2118 = vpack.c.b16 %v2090, %v2089
        %v2119 = vpack.c.b16 %v2092, %v2091
        %v2120 = vpack.c.b16 %v2094, %v2093
        %v2121 = vpack.c.b16 %v2096, %v2095
        %v2122 = vpack.c.b16 %v2098, %v2097
        %v2123 = vpack.c.b16 %v2100, %v2099
        %v2124 = vpack.c.b16 %v2102, %v2101
        %v2125 = vpack.c.b16 %v2104, %v2103
        %v2126 = vpack.c.b16 %v2106, %v2105
        %v2127 = vpack.c.b16 %v2108, %v2107
        %v2128 = vpack.c.b16 %v2110, %v2109
        %v2129 = vpack.c.b16 %v2112, %v2111
        %v2130 = vpack.c.b16 %v2114, %v2113
        %v2132 = vsel %vm1840, %v2043, 0
        %v2135 = vsel %vm1840, %v2044, 0
        %v2138 = vsel %vm1840, %v2045, 0
        %v2141 = vsel %vm1840, %v2046, 0
        %v2144 = vsel %vm1840, %v2047, 0
        %v2147 = vsel %vm1840, %v2048, 0
        %v2150 = vsel %vm1840, %v2049, 0
        %v2153 = vsel %vm1840, %v2050, 0
        %v2156 = vsel %vm1840, %v2115, 0
        %v2159 = vsel %vm1840, %v2116, 0
        %v2162 = vsel %vm1840, %v2117, 0
        %v2165 = vsel %vm1840, %v2118, 0
        %v2168 = vsel %vm1840, %v2119, 0
        %v2171 = vsel %vm1840, %v2120, 0
        %v2174 = vsel %vm1840, %v2121, 0
        %v2177 = vsel %vm1840, %v2122, 0
        %v2180 = vsel %vm1840, %v2123, 0
        %v2183 = vsel %vm1840, %v2124, 0
        %v2186 = vsel %vm1840, %v2125, 0
        %v2189 = vsel %vm1840, %v2126, 0
        %v2192 = vsel %vm1840, %v2127, 0
        %v2195 = vsel %vm1840, %v2128, 0
        %v2198 = vsel %vm1840, %v2129, 0
        %v2201 = vsel %vm1840, %v2130, 0
        %2203 = vmatpush.bf16.xpose.msra.mxu0 %v2177
        %2204 = vmatpush.bf16.xpose.msra.mxu0 %v2174
        %2205 = vmatpush.bf16.xpose.msra.mxu0 %v2171
        %2206 = vmatpush.bf16.xpose.msra.mxu0 %v2168
        %2207 = vmatpush.bf16.xpose.msra.mxu0 %v2165
        %2208 = vmatpush.bf16.xpose.msra.mxu0 %v2162
        %2209 = vmatpush.bf16.xpose.msra.mxu0 %v2159
        %2210 = vmatpush.bf16.xpose.msra.mxu0 %v2156
        %2211 = vmatmul.bf16.gmra.mxu0 %v2132
        %v2212 = vpop.f32.mrf.mxu0
        %v2213 = vadd.f32 0.0, %v2212
        %v2214 = vpop.f32.mrf.mxu0
        %v2215 = vadd.f32 0.0, %v2214
        %2216 = vmatmul.bf16.gmra.mxu0 %v2135
        %v2217 = vpop.f32.mrf.mxu0
        %v2218 = vadd.f32 0.0, %v2217
        %v2219 = vpop.f32.mrf.mxu0
        %v2220 = vadd.f32 0.0, %v2219
        %2221 = vmatmul.bf16.gmra.mxu0 %v2138
        %v2222 = vpop.f32.mrf.mxu0
        %v2223 = vadd.f32 0.0, %v2222
        %v2224 = vpop.f32.mrf.mxu0
        %v2225 = vadd.f32 0.0, %v2224
        %2226 = vmatmul.bf16.gmra.mxu0 %v2141
        %v2227 = vpop.f32.mrf.mxu0
        %v2228 = vadd.f32 0.0, %v2227
        %v2229 = vpop.f32.mrf.mxu0
        %v2230 = vadd.f32 0.0, %v2229
        %2231 = vmatmul.bf16.gmra.mxu0 %v2144
        %v2232 = vpop.f32.mrf.mxu0
        %v2233 = vadd.f32 0.0, %v2232
        %v2234 = vpop.f32.mrf.mxu0
        %v2235 = vadd.f32 0.0, %v2234
        %2236 = vmatmul.bf16.gmra.mxu0 %v2147
        %v2237 = vpop.f32.mrf.mxu0
        %v2238 = vadd.f32 0.0, %v2237
        %v2239 = vpop.f32.mrf.mxu0
        %v2240 = vadd.f32 0.0, %v2239
        %2241 = vmatmul.bf16.gmra.mxu0 %v2150
        %v2242 = vpop.f32.mrf.mxu0
        %v2243 = vadd.f32 0.0, %v2242
        %v2244 = vpop.f32.mrf.mxu0
        %v2245 = vadd.f32 0.0, %v2244
        %2246 = vmatmul.bf16.gmra.mxu0 %v2153
        %v2247 = vpop.f32.mrf.mxu0
        %v2248 = vadd.f32 0.0, %v2247
        %v2249 = vpop.f32.mrf.mxu0
        %v2250 = vadd.f32 0.0, %v2249
        %2251 = vdwg.mxu0
        %2252 = vmatpush.bf16.xpose.msra.mxu0 %v2201
        %2253 = vmatpush.bf16.xpose.msra.mxu0 %v2198
        %2254 = vmatpush.bf16.xpose.msra.mxu0 %v2195
        %2255 = vmatpush.bf16.xpose.msra.mxu0 %v2192
        %2256 = vmatpush.bf16.xpose.msra.mxu0 %v2189
        %2257 = vmatpush.bf16.xpose.msra.mxu0 %v2186
        %2258 = vmatpush.bf16.xpose.msra.mxu0 %v2183
        %2259 = vmatpush.bf16.xpose.msra.mxu0 %v2180
        %2260 = vmatmul.bf16.gmra.mxu0 %v2132
        %v2261 = vpop.f32.mrf.mxu0
        %v2262 = vadd.f32 0.0, %v2261
        %v2263 = vpop.f32.mrf.mxu0
        %v2264 = vadd.f32 0.0, %v2263
        %2265 = vmatmul.bf16.gmra.mxu0 %v2135
        %v2266 = vpop.f32.mrf.mxu0
        %v2267 = vadd.f32 0.0, %v2266
        %v2268 = vpop.f32.mrf.mxu0
        %v2269 = vadd.f32 0.0, %v2268
        %2270 = vmatmul.bf16.gmra.mxu0 %v2138
        %v2271 = vpop.f32.mrf.mxu0
        %v2272 = vadd.f32 0.0, %v2271
        %v2273 = vpop.f32.mrf.mxu0
        %v2274 = vadd.f32 0.0, %v2273
        %2275 = vmatmul.bf16.gmra.mxu0 %v2141
        %v2276 = vpop.f32.mrf.mxu0
        %v2277 = vadd.f32 0.0, %v2276
        %v2278 = vpop.f32.mrf.mxu0
        %v2279 = vadd.f32 0.0, %v2278
        %2280 = vmatmul.bf16.gmra.mxu0 %v2144
        %v2281 = vpop.f32.mrf.mxu0
        %v2282 = vadd.f32 0.0, %v2281
        %v2283 = vpop.f32.mrf.mxu0
        %v2284 = vadd.f32 0.0, %v2283
        %2285 = vmatmul.bf16.gmra.mxu0 %v2147
        %v2286 = vpop.f32.mrf.mxu0
        %v2287 = vadd.f32 0.0, %v2286
        %v2288 = vpop.f32.mrf.mxu0
        %v2289 = vadd.f32 0.0, %v2288
        %2290 = vmatmul.bf16.gmra.mxu0 %v2150
        %v2291 = vpop.f32.mrf.mxu0
        %v2292 = vadd.f32 0.0, %v2291
        %v2293 = vpop.f32.mrf.mxu0
        %v2294 = vadd.f32 0.0, %v2293
        %2295 = vmatmul.bf16.gmra.mxu0 %v2153
        %v2296 = vpop.f32.mrf.mxu0
        %v2297 = vadd.f32 0.0, %v2296
        %v2298 = vpop.f32.mrf.mxu0
        %v2299 = vadd.f32 0.0, %v2298
        %2300 = vdwg.mxu0
        %v2301 = vmul.f32 %v1923, 0.125
        %v2302 = vmul.f32 %v1972, 0.125
        %v2303 = vmul.f32 %v1925, 0.125
        %v2304 = vmul.f32 %v1974, 0.125
        %v2305 = vmul.f32 %v1928, 0.125
        %v2306 = vmul.f32 %v1977, 0.125
        %v2307 = vmul.f32 %v1930, 0.125
        %v2308 = vmul.f32 %v1979, 0.125
        %v2309 = vmul.f32 %v1933, 0.125
        %v2310 = vmul.f32 %v1982, 0.125
        %v2311 = vmul.f32 %v1935, 0.125
        %v2312 = vmul.f32 %v1984, 0.125
        %v2313 = vmul.f32 %v1938, 0.125
        %v2314 = vmul.f32 %v1987, 0.125
        %v2315 = vmul.f32 %v1940, 0.125
        %v2316 = vmul.f32 %v1989, 0.125
        %v2317 = vmul.f32 %v1943, 0.125
        %v2318 = vmul.f32 %v1992, 0.125
        %v2319 = vmul.f32 %v1945, 0.125
        %v2320 = vmul.f32 %v1994, 0.125
        %v2321 = vmul.f32 %v1948, 0.125
        %v2322 = vmul.f32 %v1997, 0.125
        %v2323 = vmul.f32 %v1950, 0.125
        %v2324 = vmul.f32 %v1999, 0.125
        %v2325 = vmul.f32 %v1953, 0.125
        %v2326 = vmul.f32 %v2002, 0.125
        %v2327 = vmul.f32 %v1955, 0.125
        %v2328 = vmul.f32 %v2004, 0.125
        %v2329 = vmul.f32 %v1958, 0.125
        %v2330 = vmul.f32 %v2007, 0.125
        %v2331 = vmul.f32 %v1960, 0.125
        %v2332 = vmul.f32 %v2009, 0.125
        %v2333 = vmul.f32 %v2213, 0.125
        %v2334 = vmul.f32 %v2262, 0.125
        %v2335 = vmul.f32 %v2215, 0.125
        %v2336 = vmul.f32 %v2264, 0.125
        %v2337 = vmul.f32 %v2218, 0.125
        %v2338 = vmul.f32 %v2267, 0.125
        %v2339 = vmul.f32 %v2220, 0.125
        %v2340 = vmul.f32 %v2269, 0.125
        %v2341 = vmul.f32 %v2223, 0.125
        %v2342 = vmul.f32 %v2272, 0.125
        %v2343 = vmul.f32 %v2225, 0.125
        %v2344 = vmul.f32 %v2274, 0.125
        %v2345 = vmul.f32 %v2228, 0.125
        %v2346 = vmul.f32 %v2277, 0.125
        %v2347 = vmul.f32 %v2230, 0.125
        %v2348 = vmul.f32 %v2279, 0.125
        %v2349 = vmul.f32 %v2233, 0.125
        %v2350 = vmul.f32 %v2282, 0.125
        %v2351 = vmul.f32 %v2235, 0.125
        %v2352 = vmul.f32 %v2284, 0.125
        %v2353 = vmul.f32 %v2238, 0.125
        %v2354 = vmul.f32 %v2287, 0.125
        %v2355 = vmul.f32 %v2240, 0.125
        %v2356 = vmul.f32 %v2289, 0.125
        %v2357 = vmul.f32 %v2243, 0.125
        %v2358 = vmul.f32 %v2292, 0.125
        %v2359 = vmul.f32 %v2245, 0.125
        %v2360 = vmul.f32 %v2294, 0.125
        %v2361 = vmul.f32 %v2248, 0.125
        %v2362 = vmul.f32 %v2297, 0.125
        %v2363 = vmul.f32 %v2250, 0.125
        %v2364 = vmul.f32 %v2299, 0.125
        %v2365 = vld [vmem:[%s346] sm:$0x3]
        %vm2366 = vcmp.gt.f32.partialorder %v2365, 0.5
        %v2367 = vsel %vm2366, -1e+30, 0.0
        %v2369 = vperm.slane %v2367, 0
        %v2370 = vperm.slane %v2367, 1
        %v2373 = vadd.f32 %v2301, %v2369
        %v2374 = vadd.f32 %v2302, %v2370
        %v2375 = vadd.f32 %v2303, %v2369
        %v2376 = vadd.f32 %v2304, %v2370
        %v2377 = vadd.f32 %v2305, %v2369
        %v2378 = vadd.f32 %v2306, %v2370
        %v2379 = vadd.f32 %v2307, %v2369
        %v2380 = vadd.f32 %v2308, %v2370
        %v2381 = vadd.f32 %v2309, %v2369
        %v2382 = vadd.f32 %v2310, %v2370
        %v2383 = vadd.f32 %v2311, %v2369
        %v2384 = vadd.f32 %v2312, %v2370
        %v2385 = vadd.f32 %v2313, %v2369
        %v2386 = vadd.f32 %v2314, %v2370
        %v2387 = vadd.f32 %v2315, %v2369
        %v2388 = vadd.f32 %v2316, %v2370
        %v2389 = vadd.f32 %v2317, %v2369
        %v2390 = vadd.f32 %v2318, %v2370
        %v2391 = vadd.f32 %v2319, %v2369
        %v2392 = vadd.f32 %v2320, %v2370
        %v2393 = vadd.f32 %v2321, %v2369
        %v2394 = vadd.f32 %v2322, %v2370
        %v2395 = vadd.f32 %v2323, %v2369
        %v2396 = vadd.f32 %v2324, %v2370
        %v2397 = vadd.f32 %v2325, %v2369
        %v2398 = vadd.f32 %v2326, %v2370
        %v2399 = vadd.f32 %v2327, %v2369
        %v2400 = vadd.f32 %v2328, %v2370
        %v2401 = vadd.f32 %v2329, %v2369
        %v2402 = vadd.f32 %v2330, %v2370
        %v2403 = vadd.f32 %v2331, %v2369
        %v2404 = vadd.f32 %v2332, %v2370
        %v2405 = vadd.f32 %v2333, %v2369
        %v2406 = vadd.f32 %v2334, %v2370
        %v2407 = vadd.f32 %v2335, %v2369
        %v2408 = vadd.f32 %v2336, %v2370
        %v2409 = vadd.f32 %v2337, %v2369
        %v2410 = vadd.f32 %v2338, %v2370
        %v2411 = vadd.f32 %v2339, %v2369
        %v2412 = vadd.f32 %v2340, %v2370
        %v2413 = vadd.f32 %v2341, %v2369
        %v2414 = vadd.f32 %v2342, %v2370
        %v2415 = vadd.f32 %v2343, %v2369
        %v2416 = vadd.f32 %v2344, %v2370
        %v2417 = vadd.f32 %v2345, %v2369
        %v2418 = vadd.f32 %v2346, %v2370
        %v2419 = vadd.f32 %v2347, %v2369
        %v2420 = vadd.f32 %v2348, %v2370
        %v2421 = vadd.f32 %v2349, %v2369
        %v2422 = vadd.f32 %v2350, %v2370
        %v2423 = vadd.f32 %v2351, %v2369
        %v2424 = vadd.f32 %v2352, %v2370
        %v2425 = vadd.f32 %v2353, %v2369
        %v2426 = vadd.f32 %v2354, %v2370
        %v2427 = vadd.f32 %v2355, %v2369
        %v2428 = vadd.f32 %v2356, %v2370
        %v2429 = vadd.f32 %v2357, %v2369
        %v2430 = vadd.f32 %v2358, %v2370
        %v2431 = vadd.f32 %v2359, %v2369
        %v2432 = vadd.f32 %v2360, %v2370
        %v2433 = vadd.f32 %v2361, %v2369
        %v2434 = vadd.f32 %v2362, %v2370
        %v2435 = vadd.f32 %v2363, %v2369
        %v2436 = vadd.f32 %v2364, %v2370
        %v2437 = vmax.f32 %v2373, %v2374
        %2438 = vmax.xlane.f32.xlu0 %v2437
        %v2439 = vpop.xlane.xlu0 %2438
        %v2440 = vmax.f32 %v2375, %v2376
        %2441 = vmax.xlane.f32.xlu0 %v2440
        %v2442 = vpop.xlane.xlu0 %2441
        %v2443 = vmax.f32 %v2377, %v2378
        %2444 = vmax.xlane.f32.xlu0 %v2443
        %v2445 = vpop.xlane.xlu0 %2444
        %v2446 = vmax.f32 %v2379, %v2380
        %2447 = vmax.xlane.f32.xlu0 %v2446
        %v2448 = vpop.xlane.xlu0 %2447
        %v2449 = vmax.f32 %v2381, %v2382
        %2450 = vmax.xlane.f32.xlu0 %v2449
        %v2451 = vpop.xlane.xlu0 %2450
        %v2452 = vmax.f32 %v2383, %v2384
        %2453 = vmax.xlane.f32.xlu0 %v2452
        %v2454 = vpop.xlane.xlu0 %2453
        %v2455 = vmax.f32 %v2385, %v2386
        %2456 = vmax.xlane.f32.xlu0 %v2455
        %v2457 = vpop.xlane.xlu0 %2456
        %v2458 = vmax.f32 %v2387, %v2388
        %2459 = vmax.xlane.f32.xlu0 %v2458
        %v2460 = vpop.xlane.xlu0 %2459
        %v2461 = vmax.f32 %v2389, %v2390
        %2462 = vmax.xlane.f32.xlu0 %v2461
        %v2463 = vpop.xlane.xlu0 %2462
        %v2464 = vmax.f32 %v2391, %v2392
        %2465 = vmax.xlane.f32.xlu0 %v2464
        %v2466 = vpop.xlane.xlu0 %2465
        %v2467 = vmax.f32 %v2393, %v2394
        %2468 = vmax.xlane.f32.xlu0 %v2467
        %v2469 = vpop.xlane.xlu0 %2468
        %v2470 = vmax.f32 %v2395, %v2396
        %2471 = vmax.xlane.f32.xlu0 %v2470
        %v2472 = vpop.xlane.xlu0 %2471
        %v2473 = vmax.f32 %v2397, %v2398
        %2474 = vmax.xlane.f32.xlu0 %v2473
        %v2475 = vpop.xlane.xlu0 %2474
        %v2476 = vmax.f32 %v2399, %v2400
        %2477 = vmax.xlane.f32.xlu0 %v2476
        %v2478 = vpop.xlane.xlu0 %2477
        %v2479 = vmax.f32 %v2401, %v2402
        %2480 = vmax.xlane.f32.xlu0 %v2479
        %v2481 = vpop.xlane.xlu0 %2480
        %v2482 = vmax.f32 %v2403, %v2404
        %2483 = vmax.xlane.f32.xlu0 %v2482
        %v2484 = vpop.xlane.xlu0 %2483
        %v2485 = vmax.f32 %v2405, %v2406
        %2486 = vmax.xlane.f32.xlu0 %v2485
        %v2487 = vpop.xlane.xlu0 %2486
        %v2488 = vmax.f32 %v2407, %v2408
        %2489 = vmax.xlane.f32.xlu0 %v2488
        %v2490 = vpop.xlane.xlu0 %2489
        %v2491 = vmax.f32 %v2409, %v2410
        %2492 = vmax.xlane.f32.xlu0 %v2491
        %v2493 = vpop.xlane.xlu0 %2492
        %v2494 = vmax.f32 %v2411, %v2412
        %2495 = vmax.xlane.f32.xlu0 %v2494
        %v2496 = vpop.xlane.xlu0 %2495
        %v2497 = vmax.f32 %v2413, %v2414
        %2498 = vmax.xlane.f32.xlu0 %v2497
        %v2499 = vpop.xlane.xlu0 %2498
        %v2500 = vmax.f32 %v2415, %v2416
        %2501 = vmax.xlane.f32.xlu0 %v2500
        %v2502 = vpop.xlane.xlu0 %2501
        %v2503 = vmax.f32 %v2417, %v2418
        %2504 = vmax.xlane.f32.xlu0 %v2503
        %v2505 = vpop.xlane.xlu0 %2504
        %v2506 = vmax.f32 %v2419, %v2420
        %2507 = vmax.xlane.f32.xlu0 %v2506
        %v2508 = vpop.xlane.xlu0 %2507
        %v2509 = vmax.f32 %v2421, %v2422
        %2510 = vmax.xlane.f32.xlu0 %v2509
        %v2511 = vpop.xlane.xlu0 %2510
        %v2512 = vmax.f32 %v2423, %v2424
        %2513 = vmax.xlane.f32.xlu0 %v2512
        %v2514 = vpop.xlane.xlu0 %2513
        %v2515 = vmax.f32 %v2425, %v2426
        %2516 = vmax.xlane.f32.xlu0 %v2515
        %v2517 = vpop.xlane.xlu0 %2516
        %v2518 = vmax.f32 %v2427, %v2428
        %2519 = vmax.xlane.f32.xlu0 %v2518
        %v2520 = vpop.xlane.xlu0 %2519
        %v2521 = vmax.f32 %v2429, %v2430
        %2522 = vmax.xlane.f32.xlu0 %v2521
        %v2523 = vpop.xlane.xlu0 %2522
        %v2524 = vmax.f32 %v2431, %v2432
        %2525 = vmax.xlane.f32.xlu0 %v2524
        %v2526 = vpop.xlane.xlu0 %2525
        %v2527 = vmax.f32 %v2433, %v2434
        %2528 = vmax.xlane.f32.xlu0 %v2527
        %v2529 = vpop.xlane.xlu0 %2528
        %v2530 = vmax.f32 %v2435, %v2436
        %2531 = vmax.xlane.f32.xlu0 %v2530
        %v2532 = vpop.xlane.xlu0 %2531
        %v2533 = vsub.f32 %v2373, %v2439
        %v2534 = vsub.f32 %v2374, %v2439
        %v2535 = vsub.f32 %v2375, %v2442
        %v2536 = vsub.f32 %v2376, %v2442
        %v2537 = vsub.f32 %v2377, %v2445
        %v2538 = vsub.f32 %v2378, %v2445
        %v2539 = vsub.f32 %v2379, %v2448
        %v2540 = vsub.f32 %v2380, %v2448
        %v2541 = vsub.f32 %v2381, %v2451
        %v2542 = vsub.f32 %v2382, %v2451
        %v2543 = vsub.f32 %v2383, %v2454
        %v2544 = vsub.f32 %v2384, %v2454
        %v2545 = vsub.f32 %v2385, %v2457
        %v2546 = vsub.f32 %v2386, %v2457
        %v2547 = vsub.f32 %v2387, %v2460
        %v2548 = vsub.f32 %v2388, %v2460
        %v2549 = vsub.f32 %v2389, %v2463
        %v2550 = vsub.f32 %v2390, %v2463
        %v2551 = vsub.f32 %v2391, %v2466
        %v2552 = vsub.f32 %v2392, %v2466
        %v2553 = vsub.f32 %v2393, %v2469
        %v2554 = vsub.f32 %v2394, %v2469
        %v2555 = vsub.f32 %v2395, %v2472
        %v2556 = vsub.f32 %v2396, %v2472
        %v2557 = vsub.f32 %v2397, %v2475
        %v2558 = vsub.f32 %v2398, %v2475
        %v2559 = vsub.f32 %v2399, %v2478
        %v2560 = vsub.f32 %v2400, %v2478
        %v2561 = vsub.f32 %v2401, %v2481
        %v2562 = vsub.f32 %v2402, %v2481
        %v2563 = vsub.f32 %v2403, %v2484
        %v2564 = vsub.f32 %v2404, %v2484
        %v2565 = vsub.f32 %v2405, %v2487
        %v2566 = vsub.f32 %v2406, %v2487
        %v2567 = vsub.f32 %v2407, %v2490
        %v2568 = vsub.f32 %v2408, %v2490
        %v2569 = vsub.f32 %v2409, %v2493
        %v2570 = vsub.f32 %v2410, %v2493
        %v2571 = vsub.f32 %v2411, %v2496
        %v2572 = vsub.f32 %v2412, %v2496
        %v2573 = vsub.f32 %v2413, %v2499
        %v2574 = vsub.f32 %v2414, %v2499
        %v2575 = vsub.f32 %v2415, %v2502
        %v2576 = vsub.f32 %v2416, %v2502
        %v2577 = vsub.f32 %v2417, %v2505
        %v2578 = vsub.f32 %v2418, %v2505
        %v2579 = vsub.f32 %v2419, %v2508
        %v2580 = vsub.f32 %v2420, %v2508
        %v2581 = vsub.f32 %v2421, %v2511
        %v2582 = vsub.f32 %v2422, %v2511
        %v2583 = vsub.f32 %v2423, %v2514
        %v2584 = vsub.f32 %v2424, %v2514
        %v2585 = vsub.f32 %v2425, %v2517
        %v2586 = vsub.f32 %v2426, %v2517
        %v2587 = vsub.f32 %v2427, %v2520
        %v2588 = vsub.f32 %v2428, %v2520
        %v2589 = vsub.f32 %v2429, %v2523
        %v2590 = vsub.f32 %v2430, %v2523
        %v2591 = vsub.f32 %v2431, %v2526
        %v2592 = vsub.f32 %v2432, %v2526
        %v2593 = vsub.f32 %v2433, %v2529
        %v2594 = vsub.f32 %v2434, %v2529
        %v2595 = vsub.f32 %v2435, %v2532
        %v2596 = vsub.f32 %v2436, %v2532
        %v2597 = vmul.f32 %v2533, 1.442695
        %v2598 = vpow.pop %v2597
        %v2599 = vmul.f32 %v2534, 1.442695
        %v2600 = vpow.pop %v2599
        %v2601 = vmul.f32 %v2535, 1.442695
        %v2602 = vpow.pop %v2601
        %v2603 = vmul.f32 %v2536, 1.442695
        %v2604 = vpow.pop %v2603
        %v2605 = vmul.f32 %v2537, 1.442695
        %v2606 = vpow.pop %v2605
        %v2607 = vmul.f32 %v2538, 1.442695
        %v2608 = vpow.pop %v2607
        %v2609 = vmul.f32 %v2539, 1.442695
        %v2610 = vpow.pop %v2609
        %v2611 = vmul.f32 %v2540, 1.442695
        %v2612 = vpow.pop %v2611
        %v2613 = vmul.f32 %v2541, 1.442695
        %v2614 = vpow.pop %v2613
        %v2615 = vmul.f32 %v2542, 1.442695
        %v2616 = vpow.pop %v2615
        %v2617 = vmul.f32 %v2543, 1.442695
        %v2618 = vpow.pop %v2617
        %v2619 = vmul.f32 %v2544, 1.442695
        %v2620 = vpow.pop %v2619
        %v2621 = vmul.f32 %v2545, 1.442695
        %v2622 = vpow.pop %v2621
        %v2623 = vmul.f32 %v2546, 1.442695
        %v2624 = vpow.pop %v2623
        %v2625 = vmul.f32 %v2547, 1.442695
        %v2626 = vpow.pop %v2625
        %v2627 = vmul.f32 %v2548, 1.442695
        %v2628 = vpow.pop %v2627
        %v2629 = vmul.f32 %v2549, 1.442695
        %v2630 = vpow.pop %v2629
        %v2631 = vmul.f32 %v2550, 1.442695
        %v2632 = vpow.pop %v2631
        %v2633 = vmul.f32 %v2551, 1.442695
        %v2634 = vpow.pop %v2633
        %v2635 = vmul.f32 %v2552, 1.442695
        %v2636 = vpow.pop %v2635
        %v2637 = vmul.f32 %v2553, 1.442695
        %v2638 = vpow.pop %v2637
        %v2639 = vmul.f32 %v2554, 1.442695
        %v2640 = vpow.pop %v2639
        %v2641 = vmul.f32 %v2555, 1.442695
        %v2642 = vpow.pop %v2641
        %v2643 = vmul.f32 %v2556, 1.442695
        %v2644 = vpow.pop %v2643
        %v2645 = vmul.f32 %v2557, 1.442695
        %v2646 = vpow.pop %v2645
        %v2647 = vmul.f32 %v2558, 1.442695
        %v2648 = vpow.pop %v2647
        %v2649 = vmul.f32 %v2559, 1.442695
        %v2650 = vpow.pop %v2649
        %v2651 = vmul.f32 %v2560, 1.442695
        %v2652 = vpow.pop %v2651
        %v2653 = vmul.f32 %v2561, 1.442695
        %v2654 = vpow.pop %v2653
        %v2655 = vmul.f32 %v2562, 1.442695
        %v2656 = vpow.pop %v2655
        %v2657 = vmul.f32 %v2563, 1.442695
        %v2658 = vpow.pop %v2657
        %v2659 = vmul.f32 %v2564, 1.442695
        %v2660 = vpow.pop %v2659
        %v2661 = vmul.f32 %v2565, 1.442695
        %v2662 = vpow.pop %v2661
        %v2663 = vmul.f32 %v2566, 1.442695
        %v2664 = vpow.pop %v2663
        %v2665 = vmul.f32 %v2567, 1.442695
        %v2666 = vpow.pop %v2665
        %v2667 = vmul.f32 %v2568, 1.442695
        %v2668 = vpow.pop %v2667
        %v2669 = vmul.f32 %v2569, 1.442695
        %v2670 = vpow.pop %v2669
        %v2671 = vmul.f32 %v2570, 1.442695
        %v2672 = vpow.pop %v2671
        %v2673 = vmul.f32 %v2571, 1.442695
        %v2674 = vpow.pop %v2673
        %v2675 = vmul.f32 %v2572, 1.442695
        %v2676 = vpow.pop %v2675
        %v2677 = vmul.f32 %v2573, 1.442695
        %v2678 = vpow.pop %v2677
        %v2679 = vmul.f32 %v2574, 1.442695
        %v2680 = vpow.pop %v2679
        %v2681 = vmul.f32 %v2575, 1.442695
        %v2682 = vpow.pop %v2681
        %v2683 = vmul.f32 %v2576, 1.442695
        %v2684 = vpow.pop %v2683
        %v2685 = vmul.f32 %v2577, 1.442695
        %v2686 = vpow.pop %v2685
        %v2687 = vmul.f32 %v2578, 1.442695
        %v2688 = vpow.pop %v2687
        %v2689 = vmul.f32 %v2579, 1.442695
        %v2690 = vpow.pop %v2689
        %v2691 = vmul.f32 %v2580, 1.442695
        %v2692 = vpow.pop %v2691
        %v2693 = vmul.f32 %v2581, 1.442695
        %v2694 = vpow.pop %v2693
        %v2695 = vmul.f32 %v2582, 1.442695
        %v2696 = vpow.pop %v2695
        %v2697 = vmul.f32 %v2583, 1.442695
        %v2698 = vpow.pop %v2697
        %v2699 = vmul.f32 %v2584, 1.442695
        %v2700 = vpow.pop %v2699
        %v2701 = vmul.f32 %v2585, 1.442695
        %v2702 = vpow.pop %v2701
        %v2703 = vmul.f32 %v2586, 1.442695
        %v2704 = vpow.pop %v2703
        %v2705 = vmul.f32 %v2587, 1.442695
        %v2706 = vpow.pop %v2705
        %v2707 = vmul.f32 %v2588, 1.442695
        %v2708 = vpow.pop %v2707
        %v2709 = vmul.f32 %v2589, 1.442695
        %v2710 = vpow.pop %v2709
        %v2711 = vmul.f32 %v2590, 1.442695
        %v2712 = vpow.pop %v2711
        %v2713 = vmul.f32 %v2591, 1.442695
        %v2714 = vpow.pop %v2713
        %v2715 = vmul.f32 %v2592, 1.442695
        %v2716 = vpow.pop %v2715
        %v2717 = vmul.f32 %v2593, 1.442695
        %v2718 = vpow.pop %v2717
        %v2719 = vmul.f32 %v2594, 1.442695
        %v2720 = vpow.pop %v2719
        %v2721 = vmul.f32 %v2595, 1.442695
        %v2722 = vpow.pop %v2721
        %v2723 = vmul.f32 %v2596, 1.442695
        %v2724 = vpow.pop %v2723
        %v2725 = vadd.f32 %v2598, %v2600
        %2726 = vadd.xlane.f32.xlu0 %v2725
        %v2727 = vpop.xlane.xlu0 %2726
        %v2728 = vadd.f32 %v2602, %v2604
        %2729 = vadd.xlane.f32.xlu0 %v2728
        %v2730 = vpop.xlane.xlu0 %2729
        %v2731 = vadd.f32 %v2606, %v2608
        %2732 = vadd.xlane.f32.xlu0 %v2731
        %v2733 = vpop.xlane.xlu0 %2732
        %v2734 = vadd.f32 %v2610, %v2612
        %2735 = vadd.xlane.f32.xlu0 %v2734
        %v2736 = vpop.xlane.xlu0 %2735
        %v2737 = vadd.f32 %v2614, %v2616
        %2738 = vadd.xlane.f32.xlu0 %v2737
        %v2739 = vpop.xlane.xlu0 %2738
        %v2740 = vadd.f32 %v2618, %v2620
        %2741 = vadd.xlane.f32.xlu0 %v2740
        %v2742 = vpop.xlane.xlu0 %2741
        %v2743 = vadd.f32 %v2622, %v2624
        %2744 = vadd.xlane.f32.xlu0 %v2743
        %v2745 = vpop.xlane.xlu0 %2744
        %v2746 = vadd.f32 %v2626, %v2628
        %2747 = vadd.xlane.f32.xlu0 %v2746
        %v2748 = vpop.xlane.xlu0 %2747
        %v2749 = vadd.f32 %v2630, %v2632
        %2750 = vadd.xlane.f32.xlu0 %v2749
        %v2751 = vpop.xlane.xlu0 %2750
        %v2752 = vadd.f32 %v2634, %v2636
        %2753 = vadd.xlane.f32.xlu0 %v2752
        %v2754 = vpop.xlane.xlu0 %2753
        %v2755 = vadd.f32 %v2638, %v2640
        %2756 = vadd.xlane.f32.xlu0 %v2755
        %v2757 = vpop.xlane.xlu0 %2756
        %v2758 = vadd.f32 %v2642, %v2644
        %2759 = vadd.xlane.f32.xlu0 %v2758
        %v2760 = vpop.xlane.xlu0 %2759
        %v2761 = vadd.f32 %v2646, %v2648
        %2762 = vadd.xlane.f32.xlu0 %v2761
        %v2763 = vpop.xlane.xlu0 %2762
        %v2764 = vadd.f32 %v2650, %v2652
        %2765 = vadd.xlane.f32.xlu0 %v2764
        %v2766 = vpop.xlane.xlu0 %2765
        %v2767 = vadd.f32 %v2654, %v2656
        %2768 = vadd.xlane.f32.xlu0 %v2767
        %v2769 = vpop.xlane.xlu0 %2768
        %v2770 = vadd.f32 %v2658, %v2660
        %2771 = vadd.xlane.f32.xlu0 %v2770
        %v2772 = vpop.xlane.xlu0 %2771
        %v2773 = vadd.f32 %v2662, %v2664
        %2774 = vadd.xlane.f32.xlu0 %v2773
        %v2775 = vpop.xlane.xlu0 %2774
        %v2776 = vadd.f32 %v2666, %v2668
        %2777 = vadd.xlane.f32.xlu0 %v2776
        %v2778 = vpop.xlane.xlu0 %2777
        %v2779 = vadd.f32 %v2670, %v2672
        %2780 = vadd.xlane.f32.xlu0 %v2779
        %v2781 = vpop.xlane.xlu0 %2780
        %v2782 = vadd.f32 %v2674, %v2676
        %2783 = vadd.xlane.f32.xlu0 %v2782
        %v2784 = vpop.xlane.xlu0 %2783
        %v2785 = vadd.f32 %v2678, %v2680
        %2786 = vadd.xlane.f32.xlu0 %v2785
        %v2787 = vpop.xlane.xlu0 %2786
        %v2788 = vadd.f32 %v2682, %v2684
        %2789 = vadd.xlane.f32.xlu0 %v2788
        %v2790 = vpop.xlane.xlu0 %2789
        %v2791 = vadd.f32 %v2686, %v2688
        %2792 = vadd.xlane.f32.xlu0 %v2791
        %v2793 = vpop.xlane.xlu0 %2792
        %v2794 = vadd.f32 %v2690, %v2692
        %2795 = vadd.xlane.f32.xlu0 %v2794
        %v2796 = vpop.xlane.xlu0 %2795
        %v2797 = vadd.f32 %v2694, %v2696
        %2798 = vadd.xlane.f32.xlu0 %v2797
        %v2799 = vpop.xlane.xlu0 %2798
        %v2800 = vadd.f32 %v2698, %v2700
        %2801 = vadd.xlane.f32.xlu0 %v2800
        %v2802 = vpop.xlane.xlu0 %2801
        %v2803 = vadd.f32 %v2702, %v2704
        %2804 = vadd.xlane.f32.xlu0 %v2803
        %v2805 = vpop.xlane.xlu0 %2804
        %v2806 = vadd.f32 %v2706, %v2708
        %2807 = vadd.xlane.f32.xlu0 %v2806
        %v2808 = vpop.xlane.xlu0 %2807
        %v2809 = vadd.f32 %v2710, %v2712
        %2810 = vadd.xlane.f32.xlu0 %v2809
        %v2811 = vpop.xlane.xlu0 %2810
        %v2812 = vadd.f32 %v2714, %v2716
        %2813 = vadd.xlane.f32.xlu0 %v2812
        %v2814 = vpop.xlane.xlu0 %2813
        %v2815 = vadd.f32 %v2718, %v2720
        %2816 = vadd.xlane.f32.xlu0 %v2815
        %v2817 = vpop.xlane.xlu0 %2816
        %v2818 = vadd.f32 %v2722, %v2724
        %2819 = vadd.xlane.f32.xlu0 %v2818
        %v2820 = vpop.xlane.xlu0 %2819
        %v2821 = vrcp.pop %v2727
        %v2822 = vrcp.pop %v2730
        %v2823 = vrcp.pop %v2733
        %v2824 = vrcp.pop %v2736
        %v2825 = vrcp.pop %v2739
        %v2826 = vrcp.pop %v2742
        %v2827 = vrcp.pop %v2745
        %v2828 = vrcp.pop %v2748
        %v2829 = vrcp.pop %v2751
        %v2830 = vrcp.pop %v2754
        %v2831 = vrcp.pop %v2757
        %v2832 = vrcp.pop %v2760
        %v2833 = vrcp.pop %v2763
        %v2834 = vrcp.pop %v2766
        %v2835 = vrcp.pop %v2769
        %v2836 = vrcp.pop %v2772
        %v2837 = vrcp.pop %v2775
        %v2838 = vrcp.pop %v2778
        %v2839 = vrcp.pop %v2781
        %v2840 = vrcp.pop %v2784
        %v2841 = vrcp.pop %v2787
        %v2842 = vrcp.pop %v2790
        %v2843 = vrcp.pop %v2793
        %v2844 = vrcp.pop %v2796
        %v2845 = vrcp.pop %v2799
        %v2846 = vrcp.pop %v2802
        %v2847 = vrcp.pop %v2805
        %v2848 = vrcp.pop %v2808
        %v2849 = vrcp.pop %v2811
        %v2850 = vrcp.pop %v2814
        %v2851 = vrcp.pop %v2817
        %v2852 = vrcp.pop %v2820
        %v2853 = vmul.f32 %v2598, %v2821
        %v2854 = vmul.f32 %v2600, %v2821
        %v2855 = vmul.f32 %v2602, %v2822
        %v2856 = vmul.f32 %v2604, %v2822
        %v2857 = vmul.f32 %v2606, %v2823
        %v2858 = vmul.f32 %v2608, %v2823
        %v2859 = vmul.f32 %v2610, %v2824
        %v2860 = vmul.f32 %v2612, %v2824
        %v2861 = vmul.f32 %v2614, %v2825
        %v2862 = vmul.f32 %v2616, %v2825
        %v2863 = vmul.f32 %v2618, %v2826
        %v2864 = vmul.f32 %v2620, %v2826
        %v2865 = vmul.f32 %v2622, %v2827
        %v2866 = vmul.f32 %v2624, %v2827
        %v2867 = vmul.f32 %v2626, %v2828
        %v2868 = vmul.f32 %v2628, %v2828
        %v2869 = vmul.f32 %v2630, %v2829
        %v2870 = vmul.f32 %v2632, %v2829
        %v2871 = vmul.f32 %v2634, %v2830
        %v2872 = vmul.f32 %v2636, %v2830
        %v2873 = vmul.f32 %v2638, %v2831
        %v2874 = vmul.f32 %v2640, %v2831
        %v2875 = vmul.f32 %v2642, %v2832
        %v2876 = vmul.f32 %v2644, %v2832
        %v2877 = vmul.f32 %v2646, %v2833
        %v2878 = vmul.f32 %v2648, %v2833
        %v2879 = vmul.f32 %v2650, %v2834
        %v2880 = vmul.f32 %v2652, %v2834
        %v2881 = vmul.f32 %v2654, %v2835
        %v2882 = vmul.f32 %v2656, %v2835
        %v2883 = vmul.f32 %v2658, %v2836
        %v2884 = vmul.f32 %v2660, %v2836
        %v2885 = vmul.f32 %v2662, %v2837
        %v2886 = vmul.f32 %v2664, %v2837
        %v2887 = vmul.f32 %v2666, %v2838
        %v2888 = vmul.f32 %v2668, %v2838
        %v2889 = vmul.f32 %v2670, %v2839
        %v2890 = vmul.f32 %v2672, %v2839
        %v2891 = vmul.f32 %v2674, %v2840
        %v2892 = vmul.f32 %v2676, %v2840
        %v2893 = vmul.f32 %v2678, %v2841
        %v2894 = vmul.f32 %v2680, %v2841
        %v2895 = vmul.f32 %v2682, %v2842
        %v2896 = vmul.f32 %v2684, %v2842
        %v2897 = vmul.f32 %v2686, %v2843
        %v2898 = vmul.f32 %v2688, %v2843
        %v2899 = vmul.f32 %v2690, %v2844
        %v2900 = vmul.f32 %v2692, %v2844
        %v2901 = vmul.f32 %v2694, %v2845
        %v2902 = vmul.f32 %v2696, %v2845
        %v2903 = vmul.f32 %v2698, %v2846
        %v2904 = vmul.f32 %v2700, %v2846
        %v2905 = vmul.f32 %v2702, %v2847
        %v2906 = vmul.f32 %v2704, %v2847
        %v2907 = vmul.f32 %v2706, %v2848
        %v2908 = vmul.f32 %v2708, %v2848
        %v2909 = vmul.f32 %v2710, %v2849
        %v2910 = vmul.f32 %v2712, %v2849
        %v2911 = vmul.f32 %v2714, %v2850
        %v2912 = vmul.f32 %v2716, %v2850
        %v2913 = vmul.f32 %v2718, %v2851
        %v2914 = vmul.f32 %v2720, %v2851
        %v2915 = vmul.f32 %v2722, %v2852
        %v2916 = vmul.f32 %v2724, %v2852
        %v2917 = vpack.c.bf16 %v2854, %v2853
        %v2918 = vpack.c.bf16 %v2856, %v2855
        %v2919 = vpack.c.bf16 %v2858, %v2857
        %v2920 = vpack.c.bf16 %v2860, %v2859
        %v2921 = vpack.c.bf16 %v2862, %v2861
        %v2922 = vpack.c.bf16 %v2864, %v2863
        %v2923 = vpack.c.bf16 %v2866, %v2865
        %v2924 = vpack.c.bf16 %v2868, %v2867
        %v2925 = vpack.c.bf16 %v2870, %v2869
        %v2926 = vpack.c.bf16 %v2872, %v2871
        %v2927 = vpack.c.bf16 %v2874, %v2873
        %v2928 = vpack.c.bf16 %v2876, %v2875
        %v2929 = vpack.c.bf16 %v2878, %v2877
        %v2930 = vpack.c.bf16 %v2880, %v2879
        %v2931 = vpack.c.bf16 %v2882, %v2881
        %v2932 = vpack.c.bf16 %v2884, %v2883
        %v2933 = vpack.c.bf16 %v2886, %v2885
        %v2934 = vpack.c.bf16 %v2888, %v2887
        %v2935 = vpack.c.bf16 %v2890, %v2889
        %v2936 = vpack.c.bf16 %v2892, %v2891
        %v2937 = vpack.c.bf16 %v2894, %v2893
        %v2938 = vpack.c.bf16 %v2896, %v2895
        %v2939 = vpack.c.bf16 %v2898, %v2897
        %v2940 = vpack.c.bf16 %v2900, %v2899
        %v2941 = vpack.c.bf16 %v2902, %v2901
        %v2942 = vpack.c.bf16 %v2904, %v2903
        %v2943 = vpack.c.bf16 %v2906, %v2905
        %v2944 = vpack.c.bf16 %v2908, %v2907
        %v2945 = vpack.c.bf16 %v2910, %v2909
        %v2946 = vpack.c.bf16 %v2912, %v2911
        %v2947 = vpack.c.bf16 %v2914, %v2913
        %v2948 = vpack.c.bf16 %v2916, %v2915
        %2949 = vst [vmem:[%s397] sm:$0xff] %v2917
        %2950 = vst [vmem:[%s397 + $0x8] sm:$0xff] %v2918
        %2951 = vst [vmem:[%s397 + $0x10] sm:$0xff] %v2919
        %2952 = vst [vmem:[%s397 + $0x18] sm:$0xff] %v2920
        %2953 = vst [vmem:[%s397 + $0x20] sm:$0xff] %v2921
        %2954 = vst [vmem:[%s397 + $0x28] sm:$0xff] %v2922
        %2955 = vst [vmem:[%s397 + $0x30] sm:$0xff] %v2923
        %2956 = vst [vmem:[%s397 + $0x38] sm:$0xff] %v2924
        %2957 = vst [vmem:[%s397 + $0x40] sm:$0xff] %v2925
        %2958 = vst [vmem:[%s397 + $0x48] sm:$0xff] %v2926
        %2959 = vst [vmem:[%s397 + $0x50] sm:$0xff] %v2927
        %2960 = vst [vmem:[%s397 + $0x58] sm:$0xff] %v2928
        %2961 = vst [vmem:[%s397 + $0x60] sm:$0xff] %v2929
        %2962 = vst [vmem:[%s397 + $0x68] sm:$0xff] %v2930
        %2963 = vst [vmem:[%s397 + $0x70] sm:$0xff] %v2931
        %2964 = vst [vmem:[%s397 + $0x78] sm:$0xff] %v2932
        %s2965 = scalar_lea.vmem %s397, 128 [#allocation15]
        %2966 = vst [vmem:[%s2965] sm:$0xff] %v2933
        %2967 = vst [vmem:[%s2965 + $0x8] sm:$0xff] %v2934
        %2968 = vst [vmem:[%s2965 + $0x10] sm:$0xff] %v2935
        %2969 = vst [vmem:[%s2965 + $0x18] sm:$0xff] %v2936
        %2970 = vst [vmem:[%s2965 + $0x20] sm:$0xff] %v2937
        %2971 = vst [vmem:[%s2965 + $0x28] sm:$0xff] %v2938
        %2972 = vst [vmem:[%s2965 + $0x30] sm:$0xff] %v2939
        %2973 = vst [vmem:[%s2965 + $0x38] sm:$0xff] %v2940
        %2974 = vst [vmem:[%s2965 + $0x40] sm:$0xff] %v2941
        %2975 = vst [vmem:[%s2965 + $0x48] sm:$0xff] %v2942
        %2976 = vst [vmem:[%s2965 + $0x50] sm:$0xff] %v2943
        %2977 = vst [vmem:[%s2965 + $0x58] sm:$0xff] %v2944
        %2978 = vst [vmem:[%s2965 + $0x60] sm:$0xff] %v2945
        %2979 = vst [vmem:[%s2965 + $0x68] sm:$0xff] %v2946
        %2980 = vst [vmem:[%s2965 + $0x70] sm:$0xff] %v2947
        %2981 = vst [vmem:[%s2965 + $0x78] sm:$0xff] %v2948
        %v2998 = vunpack.c.l.b16 %v2917
        %v2999 = vunpack.c.h.b16 %v2917
        %v3000 = vunpack.c.l.b16 %v2918
        %v3001 = vunpack.c.h.b16 %v2918
        %v3002 = vunpack.c.l.b16 %v2919
        %v3003 = vunpack.c.h.b16 %v2919
        %v3004 = vunpack.c.l.b16 %v2920
        %v3005 = vunpack.c.h.b16 %v2920
        %v3006 = vunpack.c.l.b16 %v2921
        %v3007 = vunpack.c.h.b16 %v2921
        %v3008 = vunpack.c.l.b16 %v2922
        %v3009 = vunpack.c.h.b16 %v2922
        %v3010 = vunpack.c.l.b16 %v2923
        %v3011 = vunpack.c.h.b16 %v2923
        %v3012 = vunpack.c.l.b16 %v2924
        %v3013 = vunpack.c.h.b16 %v2924
        %v3014 = vunpack.c.l.b16 %v2925
        %v3015 = vunpack.c.h.b16 %v2925
        %v3016 = vunpack.c.l.b16 %v2926
        %v3017 = vunpack.c.h.b16 %v2926
        %v3018 = vunpack.c.l.b16 %v2927
        %v3019 = vunpack.c.h.b16 %v2927
        %v3020 = vunpack.c.l.b16 %v2928
        %v3021 = vunpack.c.h.b16 %v2928
        %v3022 = vunpack.c.l.b16 %v2929
        %v3023 = vunpack.c.h.b16 %v2929
        %v3024 = vunpack.c.l.b16 %v2930
        %v3025 = vunpack.c.h.b16 %v2930
        %v3026 = vunpack.c.l.b16 %v2931
        %v3027 = vunpack.c.h.b16 %v2931
        %v3028 = vunpack.c.l.b16 %v2932
        %v3029 = vunpack.c.h.b16 %v2932
        %v3030 = vpack.c.b16 %v3000, %v2998
        %v3031 = vpack.c.b16 %v3001, %v2999
        %v3032 = vpack.c.b16 %v3004, %v3002
        %v3033 = vpack.c.b16 %v3005, %v3003
        %v3034 = vpack.c.b16 %v3008, %v3006
        %v3035 = vpack.c.b16 %v3009, %v3007
        %v3036 = vpack.c.b16 %v3012, %v3010
        %v3037 = vpack.c.b16 %v3013, %v3011
        %v3038 = vpack.c.b16 %v3016, %v3014
        %v3039 = vpack.c.b16 %v3017, %v3015
        %v3040 = vpack.c.b16 %v3020, %v3018
        %v3041 = vpack.c.b16 %v3021, %v3019
        %v3042 = vpack.c.b16 %v3024, %v3022
        %v3043 = vpack.c.b16 %v3025, %v3023
        %v3044 = vpack.c.b16 %v3028, %v3026
        %v3045 = vpack.c.b16 %v3029, %v3027
        %v3094 = vunpack.c.l.b16 %v1656
        %v3095 = vunpack.c.l.b16 %v1657
        %v3096 = vunpack.c.l.b16 %v1658
        %v3097 = vunpack.c.l.b16 %v1659
        %v3098 = vunpack.c.l.b16 %v1660
        %v3099 = vunpack.c.l.b16 %v1661
        %v3100 = vunpack.c.l.b16 %v1662
        %v3101 = vunpack.c.l.b16 %v1663
        %v3102 = vunpack.c.l.b16 %v1664
        %v3103 = vunpack.c.l.b16 %v1665
        %v3104 = vunpack.c.l.b16 %v1666
        %v3105 = vunpack.c.l.b16 %v1667
        %v3106 = vunpack.c.l.b16 %v1668
        %v3107 = vunpack.c.l.b16 %v1669
        %v3108 = vunpack.c.l.b16 %v1670
        %v3109 = vunpack.c.l.b16 %v1671
        %v3110 = vunpack.c.l.b16 %v1672
        %v3111 = vunpack.c.l.b16 %v1673
        %v3112 = vunpack.c.l.b16 %v1674
        %v3113 = vunpack.c.l.b16 %v1675
        %v3114 = vunpack.c.l.b16 %v1676
        %v3115 = vunpack.c.l.b16 %v1677
        %v3116 = vunpack.c.l.b16 %v1678
        %v3117 = vunpack.c.l.b16 %v1679
        %v3118 = vunpack.c.l.b16 %v1680
        %v3119 = vunpack.c.l.b16 %v1681
        %v3120 = vunpack.c.l.b16 %v1682
        %v3121 = vunpack.c.l.b16 %v1683
        %v3122 = vunpack.c.l.b16 %v1684
        %v3123 = vunpack.c.l.b16 %v1685
        %v3124 = vunpack.c.l.b16 %v1686
        %v3125 = vunpack.c.l.b16 %v1687
        %v3126 = vpack.c.b16 %v3095, %v3094
        %v3127 = vpack.c.b16 %v3097, %v3096
        %v3128 = vpack.c.b16 %v3099, %v3098
        %v3129 = vpack.c.b16 %v3101, %v3100
        %v3130 = vpack.c.b16 %v3103, %v3102
        %v3131 = vpack.c.b16 %v3105, %v3104
        %v3132 = vpack.c.b16 %v3107, %v3106
        %v3133 = vpack.c.b16 %v3109, %v3108
        %v3134 = vpack.c.b16 %v3111, %v3110
        %v3135 = vpack.c.b16 %v3113, %v3112
        %v3136 = vpack.c.b16 %v3115, %v3114
        %v3137 = vpack.c.b16 %v3117, %v3116
        %v3138 = vpack.c.b16 %v3119, %v3118
        %v3139 = vpack.c.b16 %v3121, %v3120
        %v3140 = vpack.c.b16 %v3123, %v3122
        %v3141 = vpack.c.b16 %v3125, %v3124
        %3158 = vmatpush.bf16.msra.mxu0 %v3133
        %3159 = vmatpush.bf16.msra.mxu0 %v3132
        %3160 = vmatpush.bf16.msra.mxu0 %v3131
        %3161 = vmatpush.bf16.msra.mxu0 %v3130
        %3162 = vmatpush.bf16.msra.mxu0 %v3129
        %3163 = vmatpush.bf16.msra.mxu0 %v3128
        %3164 = vmatpush.bf16.msra.mxu0 %v3127
        %3165 = vmatpush.bf16.msra.mxu0 %v3126
        %3166 = vmatmul.bf16.gmra.mxu0 %v3030
        %v3167 = vpop.f32.mrf.mxu0
        %v3168 = vadd.f32 0.0, %v3167
        %v3169 = vpop.f32.mrf.mxu0
        %v3170 = vadd.f32 0.0, %v3169
        %3171 = vmatmul.bf16.gmra.mxu0 %v3032
        %v3172 = vpop.f32.mrf.mxu0
        %v3173 = vadd.f32 0.0, %v3172
        %v3174 = vpop.f32.mrf.mxu0
        %v3175 = vadd.f32 0.0, %v3174
        %3176 = vmatmul.bf16.gmra.mxu0 %v3034
        %v3177 = vpop.f32.mrf.mxu0
        %v3178 = vadd.f32 0.0, %v3177
        %v3179 = vpop.f32.mrf.mxu0
        %v3180 = vadd.f32 0.0, %v3179
        %3181 = vmatmul.bf16.gmra.mxu0 %v3036
        %v3182 = vpop.f32.mrf.mxu0
        %v3183 = vadd.f32 0.0, %v3182
        %v3184 = vpop.f32.mrf.mxu0
        %v3185 = vadd.f32 0.0, %v3184
        %3186 = vmatmul.bf16.gmra.mxu0 %v3038
        %v3187 = vpop.f32.mrf.mxu0
        %v3188 = vadd.f32 0.0, %v3187
        %v3189 = vpop.f32.mrf.mxu0
        %v3190 = vadd.f32 0.0, %v3189
        %3191 = vmatmul.bf16.gmra.mxu0 %v3040
        %v3192 = vpop.f32.mrf.mxu0
        %v3193 = vadd.f32 0.0, %v3192
        %v3194 = vpop.f32.mrf.mxu0
        %v3195 = vadd.f32 0.0, %v3194
        %3196 = vmatmul.bf16.gmra.mxu0 %v3042
        %v3197 = vpop.f32.mrf.mxu0
        %v3198 = vadd.f32 0.0, %v3197
        %v3199 = vpop.f32.mrf.mxu0
        %v3200 = vadd.f32 0.0, %v3199
        %3201 = vmatmul.bf16.gmra.mxu0 %v3044
        %v3202 = vpop.f32.mrf.mxu0
        %v3203 = vadd.f32 0.0, %v3202
        %v3204 = vpop.f32.mrf.mxu0
        %v3205 = vadd.f32 0.0, %v3204
        %3206 = vdwg.mxu0
        %3207 = vmatpush.bf16.msra.mxu0 %v3141
        %3208 = vmatpush.bf16.msra.mxu0 %v3140
        %3209 = vmatpush.bf16.msra.mxu0 %v3139
        %3210 = vmatpush.bf16.msra.mxu0 %v3138
        %3211 = vmatpush.bf16.msra.mxu0 %v3137
        %3212 = vmatpush.bf16.msra.mxu0 %v3136
        %3213 = vmatpush.bf16.msra.mxu0 %v3135
        %3214 = vmatpush.bf16.msra.mxu0 %v3134
        %3215 = vmatmul.bf16.gmra.mxu0 %v3031
        %v3216 = vpop.f32.mrf.mxu0
        %v3217 = vadd.f32 %v3168, %v3216
        %v3218 = vpop.f32.mrf.mxu0
        %v3219 = vadd.f32 %v3170, %v3218
        %3220 = vmatmul.bf16.gmra.mxu0 %v3033
        %v3221 = vpop.f32.mrf.mxu0
        %v3222 = vadd.f32 %v3173, %v3221
        %v3223 = vpop.f32.mrf.mxu0
        %v3224 = vadd.f32 %v3175, %v3223
        %3225 = vmatmul.bf16.gmra.mxu0 %v3035
        %v3226 = vpop.f32.mrf.mxu0
        %v3227 = vadd.f32 %v3178, %v3226
        %v3228 = vpop.f32.mrf.mxu0
        %v3229 = vadd.f32 %v3180, %v3228
        %3230 = vmatmul.bf16.gmra.mxu0 %v3037
        %v3231 = vpop.f32.mrf.mxu0
        %v3232 = vadd.f32 %v3183, %v3231
        %v3233 = vpop.f32.mrf.mxu0
        %v3234 = vadd.f32 %v3185, %v3233
        %3235 = vmatmul.bf16.gmra.mxu0 %v3039
        %v3236 = vpop.f32.mrf.mxu0
        %v3237 = vadd.f32 %v3188, %v3236
        %v3238 = vpop.f32.mrf.mxu0
        %v3239 = vadd.f32 %v3190, %v3238
        %3240 = vmatmul.bf16.gmra.mxu0 %v3041
        %v3241 = vpop.f32.mrf.mxu0
        %v3242 = vadd.f32 %v3193, %v3241
        %v3243 = vpop.f32.mrf.mxu0
        %v3244 = vadd.f32 %v3195, %v3243
        %3245 = vmatmul.bf16.gmra.mxu0 %v3043
        %v3246 = vpop.f32.mrf.mxu0
        %v3247 = vadd.f32 %v3198, %v3246
        %v3248 = vpop.f32.mrf.mxu0
        %v3249 = vadd.f32 %v3200, %v3248
        %3250 = vmatmul.bf16.gmra.mxu0 %v3045
        %v3251 = vpop.f32.mrf.mxu0
        %v3252 = vadd.f32 %v3203, %v3251
        %v3253 = vpop.f32.mrf.mxu0
        %v3254 = vadd.f32 %v3205, %v3253
        %3255 = vdwg.mxu0
        %v3272 = vunpack.c.l.b16 %v2933
        %v3273 = vunpack.c.h.b16 %v2933
        %v3274 = vunpack.c.l.b16 %v2934
        %v3275 = vunpack.c.h.b16 %v2934
        %v3276 = vunpack.c.l.b16 %v2935
        %v3277 = vunpack.c.h.b16 %v2935
        %v3278 = vunpack.c.l.b16 %v2936
        %v3279 = vunpack.c.h.b16 %v2936
        %v3280 = vunpack.c.l.b16 %v2937
        %v3281 = vunpack.c.h.b16 %v2937
        %v3282 = vunpack.c.l.b16 %v2938
        %v3283 = vunpack.c.h.b16 %v2938
        %v3284 = vunpack.c.l.b16 %v2939
        %v3285 = vunpack.c.h.b16 %v2939
        %v3286 = vunpack.c.l.b16 %v2940
        %v3287 = vunpack.c.h.b16 %v2940
        %v3288 = vunpack.c.l.b16 %v2941
        %v3289 = vunpack.c.h.b16 %v2941
        %v3290 = vunpack.c.l.b16 %v2942
        %v3291 = vunpack.c.h.b16 %v2942
        %v3292 = vunpack.c.l.b16 %v2943
        %v3293 = vunpack.c.h.b16 %v2943
        %v3294 = vunpack.c.l.b16 %v2944
        %v3295 = vunpack.c.h.b16 %v2944
        %v3296 = vunpack.c.l.b16 %v2945
        %v3297 = vunpack.c.h.b16 %v2945
        %v3298 = vunpack.c.l.b16 %v2946
        %v3299 = vunpack.c.h.b16 %v2946
        %v3300 = vunpack.c.l.b16 %v2947
        %v3301 = vunpack.c.h.b16 %v2947
        %v3302 = vunpack.c.l.b16 %v2948
        %v3303 = vunpack.c.h.b16 %v2948
        %v3304 = vpack.c.b16 %v3274, %v3272
        %v3305 = vpack.c.b16 %v3275, %v3273
        %v3306 = vpack.c.b16 %v3278, %v3276
        %v3307 = vpack.c.b16 %v3279, %v3277
        %v3308 = vpack.c.b16 %v3282, %v3280
        %v3309 = vpack.c.b16 %v3283, %v3281
        %v3310 = vpack.c.b16 %v3286, %v3284
        %v3311 = vpack.c.b16 %v3287, %v3285
        %v3312 = vpack.c.b16 %v3290, %v3288
        %v3313 = vpack.c.b16 %v3291, %v3289
        %v3314 = vpack.c.b16 %v3294, %v3292
        %v3315 = vpack.c.b16 %v3295, %v3293
        %v3316 = vpack.c.b16 %v3298, %v3296
        %v3317 = vpack.c.b16 %v3299, %v3297
        %v3318 = vpack.c.b16 %v3302, %v3300
        %v3319 = vpack.c.b16 %v3303, %v3301
        %v3368 = vunpack.c.l.b16 %v1688
        %v3369 = vunpack.c.l.b16 %v1689
        %v3370 = vunpack.c.l.b16 %v1690
        %v3371 = vunpack.c.l.b16 %v1691
        %v3372 = vunpack.c.l.b16 %v1692
        %v3373 = vunpack.c.l.b16 %v1693
        %v3374 = vunpack.c.l.b16 %v1694
        %v3375 = vunpack.c.l.b16 %v1695
        %v3376 = vunpack.c.l.b16 %v1696
        %v3377 = vunpack.c.l.b16 %v1697
        %v3378 = vunpack.c.l.b16 %v1698
        %v3379 = vunpack.c.l.b16 %v1699
        %v3380 = vunpack.c.l.b16 %v1700
        %v3381 = vunpack.c.l.b16 %v1701
        %v3382 = vunpack.c.l.b16 %v1702
        %v3383 = vunpack.c.l.b16 %v1703
        %v3384 = vunpack.c.l.b16 %v1704
        %v3385 = vunpack.c.l.b16 %v1705
        %v3386 = vunpack.c.l.b16 %v1706
        %v3387 = vunpack.c.l.b16 %v1707
        %v3388 = vunpack.c.l.b16 %v1708
        %v3389 = vunpack.c.l.b16 %v1709
        %v3390 = vunpack.c.l.b16 %v1710
        %v3391 = vunpack.c.l.b16 %v1711
        %v3392 = vunpack.c.l.b16 %v1712
        %v3393 = vunpack.c.l.b16 %v1713
        %v3394 = vunpack.c.l.b16 %v1714
        %v3395 = vunpack.c.l.b16 %v1715
        %v3396 = vunpack.c.l.b16 %v1716
        %v3397 = vunpack.c.l.b16 %v1717
        %v3398 = vunpack.c.l.b16 %v1718
        %v3399 = vunpack.c.l.b16 %v1719
        %v3400 = vpack.c.b16 %v3369, %v3368
        %v3401 = vpack.c.b16 %v3371, %v3370
        %v3402 = vpack.c.b16 %v3373, %v3372
        %v3403 = vpack.c.b16 %v3375, %v3374
        %v3404 = vpack.c.b16 %v3377, %v3376
        %v3405 = vpack.c.b16 %v3379, %v3378
        %v3406 = vpack.c.b16 %v3381, %v3380
        %v3407 = vpack.c.b16 %v3383, %v3382
        %v3408 = vpack.c.b16 %v3385, %v3384
        %v3409 = vpack.c.b16 %v3387, %v3386
        %v3410 = vpack.c.b16 %v3389, %v3388
        %v3411 = vpack.c.b16 %v3391, %v3390
        %v3412 = vpack.c.b16 %v3393, %v3392
        %v3413 = vpack.c.b16 %v3395, %v3394
        %v3414 = vpack.c.b16 %v3397, %v3396
        %v3415 = vpack.c.b16 %v3399, %v3398
        %3432 = vmatpush.bf16.msra.mxu0 %v3407
        %3433 = vmatpush.bf16.msra.mxu0 %v3406
        %3434 = vmatpush.bf16.msra.mxu0 %v3405
        %3435 = vmatpush.bf16.msra.mxu0 %v3404
        %3436 = vmatpush.bf16.msra.mxu0 %v3403
        %3437 = vmatpush.bf16.msra.mxu0 %v3402
        %3438 = vmatpush.bf16.msra.mxu0 %v3401
        %3439 = vmatpush.bf16.msra.mxu0 %v3400
        %3440 = vmatmul.bf16.gmra.mxu0 %v3304
        %v3441 = vpop.f32.mrf.mxu0
        %v3442 = vadd.f32 0.0, %v3441
        %v3443 = vpop.f32.mrf.mxu0
        %v3444 = vadd.f32 0.0, %v3443
        %3445 = vmatmul.bf16.gmra.mxu0 %v3306
        %v3446 = vpop.f32.mrf.mxu0
        %v3447 = vadd.f32 0.0, %v3446
        %v3448 = vpop.f32.mrf.mxu0
        %v3449 = vadd.f32 0.0, %v3448
        %3450 = vmatmul.bf16.gmra.mxu0 %v3308
        %v3451 = vpop.f32.mrf.mxu0
        %v3452 = vadd.f32 0.0, %v3451
        %v3453 = vpop.f32.mrf.mxu0
        %v3454 = vadd.f32 0.0, %v3453
        %3455 = vmatmul.bf16.gmra.mxu0 %v3310
        %v3456 = vpop.f32.mrf.mxu0
        %v3457 = vadd.f32 0.0, %v3456
        %v3458 = vpop.f32.mrf.mxu0
        %v3459 = vadd.f32 0.0, %v3458
        %3460 = vmatmul.bf16.gmra.mxu0 %v3312
        %v3461 = vpop.f32.mrf.mxu0
        %v3462 = vadd.f32 0.0, %v3461
        %v3463 = vpop.f32.mrf.mxu0
        %v3464 = vadd.f32 0.0, %v3463
        %3465 = vmatmul.bf16.gmra.mxu0 %v3314
        %v3466 = vpop.f32.mrf.mxu0
        %v3467 = vadd.f32 0.0, %v3466
        %v3468 = vpop.f32.mrf.mxu0
        %v3469 = vadd.f32 0.0, %v3468
        %3470 = vmatmul.bf16.gmra.mxu0 %v3316
        %v3471 = vpop.f32.mrf.mxu0
        %v3472 = vadd.f32 0.0, %v3471
        %v3473 = vpop.f32.mrf.mxu0
        %v3474 = vadd.f32 0.0, %v3473
        %3475 = vmatmul.bf16.gmra.mxu0 %v3318
        %v3476 = vpop.f32.mrf.mxu0
        %v3477 = vadd.f32 0.0, %v3476
        %v3478 = vpop.f32.mrf.mxu0
        %v3479 = vadd.f32 0.0, %v3478
        %3480 = vdwg.mxu0
        %3481 = vmatpush.bf16.msra.mxu0 %v3415
        %3482 = vmatpush.bf16.msra.mxu0 %v3414
        %3483 = vmatpush.bf16.msra.mxu0 %v3413
        %3484 = vmatpush.bf16.msra.mxu0 %v3412
        %3485 = vmatpush.bf16.msra.mxu0 %v3411
        %3486 = vmatpush.bf16.msra.mxu0 %v3410
        %3487 = vmatpush.bf16.msra.mxu0 %v3409
        %3488 = vmatpush.bf16.msra.mxu0 %v3408
        %3489 = vmatmul.bf16.gmra.mxu0 %v3305
        %v3490 = vpop.f32.mrf.mxu0
        %v3491 = vadd.f32 %v3442, %v3490
        %v3492 = vpop.f32.mrf.mxu0
        %v3493 = vadd.f32 %v3444, %v3492
        %3494 = vmatmul.bf16.gmra.mxu0 %v3307
        %v3495 = vpop.f32.mrf.mxu0
        %v3496 = vadd.f32 %v3447, %v3495
        %v3497 = vpop.f32.mrf.mxu0
        %v3498 = vadd.f32 %v3449, %v3497
        %3499 = vmatmul.bf16.gmra.mxu0 %v3309
        %v3500 = vpop.f32.mrf.mxu0
        %v3501 = vadd.f32 %v3452, %v3500
        %v3502 = vpop.f32.mrf.mxu0
        %v3503 = vadd.f32 %v3454, %v3502
        %3504 = vmatmul.bf16.gmra.mxu0 %v3311
        %v3505 = vpop.f32.mrf.mxu0
        %v3506 = vadd.f32 %v3457, %v3505
        %v3507 = vpop.f32.mrf.mxu0
        %v3508 = vadd.f32 %v3459, %v3507
        %3509 = vmatmul.bf16.gmra.mxu0 %v3313
        %v3510 = vpop.f32.mrf.mxu0
        %v3511 = vadd.f32 %v3462, %v3510
        %v3512 = vpop.f32.mrf.mxu0
        %v3513 = vadd.f32 %v3464, %v3512
        %3514 = vmatmul.bf16.gmra.mxu0 %v3315
        %v3515 = vpop.f32.mrf.mxu0
        %v3516 = vadd.f32 %v3467, %v3515
        %v3517 = vpop.f32.mrf.mxu0
        %v3518 = vadd.f32 %v3469, %v3517
        %3519 = vmatmul.bf16.gmra.mxu0 %v3317
        %v3520 = vpop.f32.mrf.mxu0
        %v3521 = vadd.f32 %v3472, %v3520
        %v3522 = vpop.f32.mrf.mxu0
        %v3523 = vadd.f32 %v3474, %v3522
        %3524 = vmatmul.bf16.gmra.mxu0 %v3319
        %v3525 = vpop.f32.mrf.mxu0
        %v3526 = vadd.f32 %v3477, %v3525
        %v3527 = vpop.f32.mrf.mxu0
        %v3528 = vadd.f32 %v3479, %v3527
        %3529 = vdwg.mxu0
        %v3530 = vpack.c.bf16 %v3217, %v3217
        %v3531 = vpack.c.bf16 %v3219, %v3219
        %v3532 = vpack.c.bf16 %v3222, %v3222
        %v3533 = vpack.c.bf16 %v3224, %v3224
        %v3534 = vpack.c.bf16 %v3227, %v3227
        %v3535 = vpack.c.bf16 %v3229, %v3229
        %v3536 = vpack.c.bf16 %v3232, %v3232
        %v3537 = vpack.c.bf16 %v3234, %v3234
        %v3538 = vpack.c.bf16 %v3237, %v3237
        %v3539 = vpack.c.bf16 %v3239, %v3239
        %v3540 = vpack.c.bf16 %v3242, %v3242
        %v3541 = vpack.c.bf16 %v3244, %v3244
        %v3542 = vpack.c.bf16 %v3247, %v3247
        %v3543 = vpack.c.bf16 %v3249, %v3249
        %v3544 = vpack.c.bf16 %v3252, %v3252
        %v3545 = vpack.c.bf16 %v3254, %v3254
        %vm3546 = vcmask 519168
        %3547 = vst.msk [vmem:[#allocation5] sm:$0xf] %vm3546, %v3530
        %3548 = vst.msk [vmem:[#allocation5 + $0x4] sm:$0xf] %vm3546, %v3531
        %3549 = vst.msk [vmem:[#allocation5 + $0x8] sm:$0xf] %vm3546, %v3532
        %3550 = vst.msk [vmem:[#allocation5 + $0xc] sm:$0xf] %vm3546, %v3533
        %3551 = vst.msk [vmem:[#allocation5 + $0x10] sm:$0xf] %vm3546, %v3534
        %3552 = vst.msk [vmem:[#allocation5 + $0x14] sm:$0xf] %vm3546, %v3535
        %3553 = vst.msk [vmem:[#allocation5 + $0x18] sm:$0xf] %vm3546, %v3536
        %3554 = vst.msk [vmem:[#allocation5 + $0x1c] sm:$0xf] %vm3546, %v3537
        %3555 = vst.msk [vmem:[#allocation5 + $0x20] sm:$0xf] %vm3546, %v3538
        %3556 = vst.msk [vmem:[#allocation5 + $0x24] sm:$0xf] %vm3546, %v3539
        %3557 = vst.msk [vmem:[#allocation5 + $0x28] sm:$0xf] %vm3546, %v3540
        %3558 = vst.msk [vmem:[#allocation5 + $0x2c] sm:$0xf] %vm3546, %v3541
        %3559 = vst.msk [vmem:[#allocation5 + $0x30] sm:$0xf] %vm3546, %v3542
        %3560 = vst.msk [vmem:[#allocation5 + $0x34] sm:$0xf] %vm3546, %v3543
        %3561 = vst.msk [vmem:[#allocation5 + $0x38] sm:$0xf] %vm3546, %v3544
        %3562 = vst.msk [vmem:[#allocation5 + $0x3c] sm:$0xf] %vm3546, %v3545
        %v3563 = vpack.c.bf16 %v3491, %v3491
        %v3564 = vpack.c.bf16 %v3493, %v3493
        %v3565 = vpack.c.bf16 %v3496, %v3496
        %v3566 = vpack.c.bf16 %v3498, %v3498
        %v3567 = vpack.c.bf16 %v3501, %v3501
        %v3568 = vpack.c.bf16 %v3503, %v3503
        %v3569 = vpack.c.bf16 %v3506, %v3506
        %v3570 = vpack.c.bf16 %v3508, %v3508
        %v3571 = vpack.c.bf16 %v3511, %v3511
        %v3572 = vpack.c.bf16 %v3513, %v3513
        %v3573 = vpack.c.bf16 %v3516, %v3516
        %v3574 = vpack.c.bf16 %v3518, %v3518
        %v3575 = vpack.c.bf16 %v3521, %v3521
        %v3576 = vpack.c.bf16 %v3523, %v3523
        %v3577 = vpack.c.bf16 %v3526, %v3526
        %v3578 = vpack.c.bf16 %v3528, %v3528
        %3595 = vrot.lane.b32.xlu0 %v3563, 64
        %v3596 = vpop.permute.xlu0 %3595
        %3597 = vrot.lane.b32.xlu0 %v3564, 64
        %v3598 = vpop.permute.xlu0 %3597
        %3599 = vrot.lane.b32.xlu0 %v3565, 64
        %v3600 = vpop.permute.xlu0 %3599
        %3601 = vrot.lane.b32.xlu0 %v3566, 64
        %v3602 = vpop.permute.xlu0 %3601
        %3603 = vrot.lane.b32.xlu0 %v3567, 64
        %v3604 = vpop.permute.xlu0 %3603
        %3605 = vrot.lane.b32.xlu0 %v3568, 64
        %v3606 = vpop.permute.xlu0 %3605
        %3607 = vrot.lane.b32.xlu0 %v3569, 64
        %v3608 = vpop.permute.xlu0 %3607
        %3609 = vrot.lane.b32.xlu0 %v3570, 64
        %v3610 = vpop.permute.xlu0 %3609
        %3611 = vrot.lane.b32.xlu0 %v3571, 64
        %v3612 = vpop.permute.xlu0 %3611
        %3613 = vrot.lane.b32.xlu0 %v3572, 64
        %v3614 = vpop.permute.xlu0 %3613
        %3615 = vrot.lane.b32.xlu0 %v3573, 64
        %v3616 = vpop.permute.xlu0 %3615
        %3617 = vrot.lane.b32.xlu0 %v3574, 64
        %v3618 = vpop.permute.xlu0 %3617
        %3619 = vrot.lane.b32.xlu0 %v3575, 64
        %v3620 = vpop.permute.xlu0 %3619
        %3621 = vrot.lane.b32.xlu0 %v3576, 64
        %v3622 = vpop.permute.xlu0 %3621
        %3623 = vrot.lane.b32.xlu0 %v3577, 64
        %v3624 = vpop.permute.xlu0 %3623
        %3625 = vrot.lane.b32.xlu0 %v3578, 64
        %v3626 = vpop.permute.xlu0 %3625
        %vm3643 = vcmask 1043968
        %3644 = vst.msk [vmem:[#allocation5] sm:$0xf] %vm3643, %v3596
        %3645 = vst.msk [vmem:[#allocation5 + $0x4] sm:$0xf] %vm3643, %v3598
        %3646 = vst.msk [vmem:[#allocation5 + $0x8] sm:$0xf] %vm3643, %v3600
        %3647 = vst.msk [vmem:[#allocation5 + $0xc] sm:$0xf] %vm3643, %v3602
        %3648 = vst.msk [vmem:[#allocation5 + $0x10] sm:$0xf] %vm3643, %v3604
        %3649 = vst.msk [vmem:[#allocation5 + $0x14] sm:$0xf] %vm3643, %v3606
        %3650 = vst.msk [vmem:[#allocation5 + $0x18] sm:$0xf] %vm3643, %v3608
        %3651 = vst.msk [vmem:[#allocation5 + $0x1c] sm:$0xf] %vm3643, %v3610
        %3652 = vst.msk [vmem:[#allocation5 + $0x20] sm:$0xf] %vm3643, %v3612
        %3653 = vst.msk [vmem:[#allocation5 + $0x24] sm:$0xf] %vm3643, %v3614
        %3654 = vst.msk [vmem:[#allocation5 + $0x28] sm:$0xf] %vm3643, %v3616
        %3655 = vst.msk [vmem:[#allocation5 + $0x2c] sm:$0xf] %vm3643, %v3618
        %3656 = vst.msk [vmem:[#allocation5 + $0x30] sm:$0xf] %vm3643, %v3620
        %3657 = vst.msk [vmem:[#allocation5 + $0x34] sm:$0xf] %vm3643, %v3622
        %3658 = vst.msk [vmem:[#allocation5 + $0x38] sm:$0xf] %vm3643, %v3624
        %3659 = vst.msk [vmem:[#allocation5 + $0x3c] sm:$0xf] %vm3643, %v3626
        %v3660 = vld [vmem:[#allocation5] sm:$0xf]
        %v3661 = vld [vmem:[#allocation5 + $0x4] sm:$0xf]
        %v3662 = vld [vmem:[#allocation5 + $0x8] sm:$0xf]
        %v3663 = vld [vmem:[#allocation5 + $0xc] sm:$0xf]
        %v3664 = vld [vmem:[#allocation5 + $0x10] sm:$0xf]
        %v3665 = vld [vmem:[#allocation5 + $0x14] sm:$0xf]
        %v3666 = vld [vmem:[#allocation5 + $0x18] sm:$0xf]
        %v3667 = vld [vmem:[#allocation5 + $0x1c] sm:$0xf]
        %v3668 = vld [vmem:[#allocation5 + $0x20] sm:$0xf]
        %v3669 = vld [vmem:[#allocation5 + $0x24] sm:$0xf]
        %v3670 = vld [vmem:[#allocation5 + $0x28] sm:$0xf]
        %v3671 = vld [vmem:[#allocation5 + $0x2c] sm:$0xf]
        %v3672 = vld [vmem:[#allocation5 + $0x30] sm:$0xf]
        %v3673 = vld [vmem:[#allocation5 + $0x34] sm:$0xf]
        %v3674 = vld [vmem:[#allocation5 + $0x38] sm:$0xf]
        %v3675 = vld [vmem:[#allocation5 + $0x3c] sm:$0xf]
        %v3676 = vld [vmem:[#allocation12] sm:$0xf]
        %v3677 = vld [vmem:[#allocation12 + $0x4] sm:$0xf]
        %v3678 = vld [vmem:[#allocation12 + $0x8] sm:$0xf]
        %v3679 = vld [vmem:[#allocation12 + $0xc] sm:$0xf]
        %v3680 = vld [vmem:[#allocation12 + $0x10] sm:$0xf]
        %v3681 = vld [vmem:[#allocation12 + $0x14] sm:$0xf]
        %v3682 = vld [vmem:[#allocation12 + $0x18] sm:$0xf]
        %v3683 = vld [vmem:[#allocation12 + $0x1c] sm:$0xf]
        %v3684 = vld [vmem:[#allocation12 + $0x20] sm:$0xf]
        %v3685 = vld [vmem:[#allocation12 + $0x24] sm:$0xf]
        %v3686 = vld [vmem:[#allocation12 + $0x28] sm:$0xf]
        %v3687 = vld [vmem:[#allocation12 + $0x2c] sm:$0xf]
        %v3688 = vld [vmem:[#allocation12 + $0x30] sm:$0xf]
        %v3689 = vld [vmem:[#allocation12 + $0x34] sm:$0xf]
        %v3690 = vld [vmem:[#allocation12 + $0x38] sm:$0xf]
        %v3691 = vld [vmem:[#allocation12 + $0x3c] sm:$0xf]
        %s3692 = scalar_lea.vmem %s336, %s1555 [#allocation6]
        %v3693 = vld [vmem:[%s3692] sm:$0xff]
        %v3694 = vld [vmem:[%s3692 + $0x8] sm:$0xff]
        %v3695 = vld [vmem:[%s3692 + $0x10] sm:$0xff]
        %v3696 = vld [vmem:[%s3692 + $0x18] sm:$0xff]
        %v3697 = vld [vmem:[%s3692 + $0x20] sm:$0xff]
        %v3698 = vld [vmem:[%s3692 + $0x28] sm:$0xff]
        %v3699 = vld [vmem:[%s3692 + $0x30] sm:$0xff]
        %v3700 = vld [vmem:[%s3692 + $0x38] sm:$0xff]
        %v3701 = vld [vmem:[%s3692 + $0x40] sm:$0xff]
        %v3702 = vld [vmem:[%s3692 + $0x48] sm:$0xff]
        %v3703 = vld [vmem:[%s3692 + $0x50] sm:$0xff]
        %v3704 = vld [vmem:[%s3692 + $0x58] sm:$0xff]
        %v3705 = vld [vmem:[%s3692 + $0x60] sm:$0xff]
        %v3706 = vld [vmem:[%s3692 + $0x68] sm:$0xff]
        %v3707 = vld [vmem:[%s3692 + $0x70] sm:$0xff]
        %v3708 = vld [vmem:[%s3692 + $0x78] sm:$0xff]
        %v3725 = vunpack.c.l.b16 %v3660
        %v3726 = vunpack.c.l.b16 %v3661
        %v3727 = vunpack.c.l.b16 %v3662
        %v3728 = vunpack.c.l.b16 %v3663
        %v3729 = vunpack.c.l.b16 %v3664
        %v3730 = vunpack.c.l.b16 %v3665
        %v3731 = vunpack.c.l.b16 %v3666
        %v3732 = vunpack.c.l.b16 %v3667
        %v3733 = vunpack.c.l.b16 %v3668
        %v3734 = vunpack.c.l.b16 %v3669
        %v3735 = vunpack.c.l.b16 %v3670
        %v3736 = vunpack.c.l.b16 %v3671
        %v3737 = vunpack.c.l.b16 %v3672
        %v3738 = vunpack.c.l.b16 %v3673
        %v3739 = vunpack.c.l.b16 %v3674
        %v3740 = vunpack.c.l.b16 %v3675
        %v3741 = vpack.c.b16 %v3726, %v3725
        %v3742 = vpack.c.b16 %v3728, %v3727
        %v3743 = vpack.c.b16 %v3730, %v3729
        %v3744 = vpack.c.b16 %v3732, %v3731
        %v3745 = vpack.c.b16 %v3734, %v3733
        %v3746 = vpack.c.b16 %v3736, %v3735
        %v3747 = vpack.c.b16 %v3738, %v3737
        %v3748 = vpack.c.b16 %v3740, %v3739
        %v3773 = vunpack.c.l.b16 %v3676
        %v3774 = vunpack.c.l.b16 %v3677
        %v3775 = vunpack.c.l.b16 %v3678
        %v3776 = vunpack.c.l.b16 %v3679
        %v3777 = vunpack.c.l.b16 %v3680
        %v3778 = vunpack.c.l.b16 %v3681
        %v3779 = vunpack.c.l.b16 %v3682
        %v3780 = vunpack.c.l.b16 %v3683
        %v3781 = vunpack.c.l.b16 %v3684
        %v3782 = vunpack.c.l.b16 %v3685
        %v3783 = vunpack.c.l.b16 %v3686
        %v3784 = vunpack.c.l.b16 %v3687
        %v3785 = vunpack.c.l.b16 %v3688
        %v3786 = vunpack.c.l.b16 %v3689
        %v3787 = vunpack.c.l.b16 %v3690
        %v3788 = vunpack.c.l.b16 %v3691
        %v3789 = vpack.c.b16 %v3774, %v3773
        %v3790 = vpack.c.b16 %v3776, %v3775
        %v3791 = vpack.c.b16 %v3778, %v3777
        %v3792 = vpack.c.b16 %v3780, %v3779
        %v3793 = vpack.c.b16 %v3782, %v3781
        %v3794 = vpack.c.b16 %v3784, %v3783
        %v3795 = vpack.c.b16 %v3786, %v3785
        %v3796 = vpack.c.b16 %v3788, %v3787
        %3805 = vmatpush.bf16.msra.mxu0 %v3796
        %3806 = vmatpush.bf16.msra.mxu0 %v3795
        %3807 = vmatpush.bf16.msra.mxu0 %v3794
        %3808 = vmatpush.bf16.msra.mxu0 %v3793
        %3809 = vmatpush.bf16.msra.mxu0 %v3792
        %3810 = vmatpush.bf16.msra.mxu0 %v3791
        %3811 = vmatpush.bf16.msra.mxu0 %v3790
        %3812 = vmatpush.bf16.msra.mxu0 %v3789
        %3813 = vmatmul.bf16.gmra.mxu0 %v3741
        %v3814 = vpop.f32.mrf.mxu0
        %v3815 = vadd.f32 %v3693, %v3814
        %v3816 = vpop.f32.mrf.mxu0
        %v3817 = vadd.f32 %v3694, %v3816
        %3818 = vmatmul.bf16.gmra.mxu0 %v3742
        %v3819 = vpop.f32.mrf.mxu0
        %v3820 = vadd.f32 %v3695, %v3819
        %v3821 = vpop.f32.mrf.mxu0
        %v3822 = vadd.f32 %v3696, %v3821
        %3823 = vmatmul.bf16.gmra.mxu0 %v3743
        %v3824 = vpop.f32.mrf.mxu0
        %v3825 = vadd.f32 %v3697, %v3824
        %v3826 = vpop.f32.mrf.mxu0
        %v3827 = vadd.f32 %v3698, %v3826
        %3828 = vmatmul.bf16.gmra.mxu0 %v3744
        %v3829 = vpop.f32.mrf.mxu0
        %v3830 = vadd.f32 %v3699, %v3829
        %v3831 = vpop.f32.mrf.mxu0
        %v3832 = vadd.f32 %v3700, %v3831
        %3833 = vmatmul.bf16.gmra.mxu0 %v3745
        %v3834 = vpop.f32.mrf.mxu0
        %v3835 = vadd.f32 %v3701, %v3834
        %v3836 = vpop.f32.mrf.mxu0
        %v3837 = vadd.f32 %v3702, %v3836
        %3838 = vmatmul.bf16.gmra.mxu0 %v3746
        %v3839 = vpop.f32.mrf.mxu0
        %v3840 = vadd.f32 %v3703, %v3839
        %v3841 = vpop.f32.mrf.mxu0
        %v3842 = vadd.f32 %v3704, %v3841
        %3843 = vmatmul.bf16.gmra.mxu0 %v3747
        %v3844 = vpop.f32.mrf.mxu0
        %v3845 = vadd.f32 %v3705, %v3844
        %v3846 = vpop.f32.mrf.mxu0
        %v3847 = vadd.f32 %v3706, %v3846
        %3848 = vmatmul.bf16.gmra.mxu0 %v3748
        %v3849 = vpop.f32.mrf.mxu0
        %v3850 = vadd.f32 %v3707, %v3849
        %v3851 = vpop.f32.mrf.mxu0
        %v3852 = vadd.f32 %v3708, %v3851
        %3853 = vdwg.mxu0
        %3854 = vadd.xlane.f32.xlu0 %v3815
        %v3855 = vpop.xlane.xlu0 %3854
        %3856 = vadd.xlane.f32.xlu0 %v3817
        %v3857 = vpop.xlane.xlu0 %3856
        %3858 = vadd.xlane.f32.xlu0 %v3820
        %v3859 = vpop.xlane.xlu0 %3858
        %3860 = vadd.xlane.f32.xlu0 %v3822
        %v3861 = vpop.xlane.xlu0 %3860
        %3862 = vadd.xlane.f32.xlu0 %v3825
        %v3863 = vpop.xlane.xlu0 %3862
        %3864 = vadd.xlane.f32.xlu0 %v3827
        %v3865 = vpop.xlane.xlu0 %3864
        %3866 = vadd.xlane.f32.xlu0 %v3830
        %v3867 = vpop.xlane.xlu0 %3866
        %3868 = vadd.xlane.f32.xlu0 %v3832
        %v3869 = vpop.xlane.xlu0 %3868
        %3870 = vadd.xlane.f32.xlu0 %v3835
        %v3871 = vpop.xlane.xlu0 %3870
        %3872 = vadd.xlane.f32.xlu0 %v3837
        %v3873 = vpop.xlane.xlu0 %3872
        %3874 = vadd.xlane.f32.xlu0 %v3840
        %v3875 = vpop.xlane.xlu0 %3874
        %3876 = vadd.xlane.f32.xlu0 %v3842
        %v3877 = vpop.xlane.xlu0 %3876
        %3878 = vadd.xlane.f32.xlu0 %v3845
        %v3879 = vpop.xlane.xlu0 %3878
        %3880 = vadd.xlane.f32.xlu0 %v3847
        %v3881 = vpop.xlane.xlu0 %3880
        %3882 = vadd.xlane.f32.xlu0 %v3850
        %v3883 = vpop.xlane.xlu0 %3882
        %3884 = vadd.xlane.f32.xlu0 %v3852
        %v3885 = vpop.xlane.xlu0 %3884
        %v3886 = vrcp.pop 128.0
        %v3887 = vmul.f32 128.0, %v3886
        %v3888 = vsub.f32 1.0, %v3887
        %v3889 = vmul.f32 %v3886, %v3888
        %v3890 = vadd.f32 %v3886, %v3889
        %vm3891 = vweird.f32 %v3886
        %v3892 = vsel %vm3891, %v3886, %v3890
        %v3893 = vmul.f32 %v3855, %v3892
        %v3894 = vmul.f32 %v3857, %v3892
        %v3895 = vmul.f32 %v3859, %v3892
        %v3896 = vmul.f32 %v3861, %v3892
        %v3897 = vmul.f32 %v3863, %v3892
        %v3898 = vmul.f32 %v3865, %v3892
        %v3899 = vmul.f32 %v3867, %v3892
        %v3900 = vmul.f32 %v3869, %v3892
        %v3901 = vmul.f32 %v3871, %v3892
        %v3902 = vmul.f32 %v3873, %v3892
        %v3903 = vmul.f32 %v3875, %v3892
        %v3904 = vmul.f32 %v3877, %v3892
        %v3905 = vmul.f32 %v3879, %v3892
        %v3906 = vmul.f32 %v3881, %v3892
        %v3907 = vmul.f32 %v3883, %v3892
        %v3908 = vmul.f32 %v3885, %v3892
        %v3909 = vsub.f32 %v3815, %v3893
        %v3910 = vsub.f32 %v3817, %v3894
        %v3911 = vsub.f32 %v3820, %v3895
        %v3912 = vsub.f32 %v3822, %v3896
        %v3913 = vsub.f32 %v3825, %v3897
        %v3914 = vsub.f32 %v3827, %v3898
        %v3915 = vsub.f32 %v3830, %v3899
        %v3916 = vsub.f32 %v3832, %v3900
        %v3917 = vsub.f32 %v3835, %v3901
        %v3918 = vsub.f32 %v3837, %v3902
        %v3919 = vsub.f32 %v3840, %v3903
        %v3920 = vsub.f32 %v3842, %v3904
        %v3921 = vsub.f32 %v3845, %v3905
        %v3922 = vsub.f32 %v3847, %v3906
        %v3923 = vsub.f32 %v3850, %v3907
        %v3924 = vsub.f32 %v3852, %v3908
        %v3925 = vmul.f32 %v3909, %v3909
        %v3926 = vmul.f32 %v3910, %v3910
        %v3927 = vmul.f32 %v3911, %v3911
        %v3928 = vmul.f32 %v3912, %v3912
        %v3929 = vmul.f32 %v3913, %v3913
        %v3930 = vmul.f32 %v3914, %v3914
        %v3931 = vmul.f32 %v3915, %v3915
        %v3932 = vmul.f32 %v3916, %v3916
        %v3933 = vmul.f32 %v3917, %v3917
        %v3934 = vmul.f32 %v3918, %v3918
        %v3935 = vmul.f32 %v3919, %v3919
        %v3936 = vmul.f32 %v3920, %v3920
        %v3937 = vmul.f32 %v3921, %v3921
        %v3938 = vmul.f32 %v3922, %v3922
        %v3939 = vmul.f32 %v3923, %v3923
        %v3940 = vmul.f32 %v3924, %v3924
        %3941 = vadd.xlane.f32.xlu0 %v3925
        %v3942 = vpop.xlane.xlu0 %3941
        %3943 = vadd.xlane.f32.xlu0 %v3926
        %v3944 = vpop.xlane.xlu0 %3943
        %3945 = vadd.xlane.f32.xlu0 %v3927
        %v3946 = vpop.xlane.xlu0 %3945
        %3947 = vadd.xlane.f32.xlu0 %v3928
        %v3948 = vpop.xlane.xlu0 %3947
        %3949 = vadd.xlane.f32.xlu0 %v3929
        %v3950 = vpop.xlane.xlu0 %3949
        %3951 = vadd.xlane.f32.xlu0 %v3930
        %v3952 = vpop.xlane.xlu0 %3951
        %3953 = vadd.xlane.f32.xlu0 %v3931
        %v3954 = vpop.xlane.xlu0 %3953
        %3955 = vadd.xlane.f32.xlu0 %v3932
        %v3956 = vpop.xlane.xlu0 %3955
        %3957 = vadd.xlane.f32.xlu0 %v3933
        %v3958 = vpop.xlane.xlu0 %3957
        %3959 = vadd.xlane.f32.xlu0 %v3934
        %v3960 = vpop.xlane.xlu0 %3959
        %3961 = vadd.xlane.f32.xlu0 %v3935
        %v3962 = vpop.xlane.xlu0 %3961
        %3963 = vadd.xlane.f32.xlu0 %v3936
        %v3964 = vpop.xlane.xlu0 %3963
        %3965 = vadd.xlane.f32.xlu0 %v3937
        %v3966 = vpop.xlane.xlu0 %3965
        %3967 = vadd.xlane.f32.xlu0 %v3938
        %v3968 = vpop.xlane.xlu0 %3967
        %3969 = vadd.xlane.f32.xlu0 %v3939
        %v3970 = vpop.xlane.xlu0 %3969
        %3971 = vadd.xlane.f32.xlu0 %v3940
        %v3972 = vpop.xlane.xlu0 %3971
        %v3973 = vmul.f32 %v3942, %v3892
        %v3974 = vmul.f32 %v3944, %v3892
        %v3975 = vmul.f32 %v3946, %v3892
        %v3976 = vmul.f32 %v3948, %v3892
        %v3977 = vmul.f32 %v3950, %v3892
        %v3978 = vmul.f32 %v3952, %v3892
        %v3979 = vmul.f32 %v3954, %v3892
        %v3980 = vmul.f32 %v3956, %v3892
        %v3981 = vmul.f32 %v3958, %v3892
        %v3982 = vmul.f32 %v3960, %v3892
        %v3983 = vmul.f32 %v3962, %v3892
        %v3984 = vmul.f32 %v3964, %v3892
        %v3985 = vmul.f32 %v3966, %v3892
        %v3986 = vmul.f32 %v3968, %v3892
        %v3987 = vmul.f32 %v3970, %v3892
        %v3988 = vmul.f32 %v3972, %v3892
        %v3989 = vadd.f32 %v3973, 1e-05
        %v3990 = vadd.f32 %v3974, 1e-05
        %v3991 = vadd.f32 %v3975, 1e-05
        %v3992 = vadd.f32 %v3976, 1e-05
        %v3993 = vadd.f32 %v3977, 1e-05
        %v3994 = vadd.f32 %v3978, 1e-05
        %v3995 = vadd.f32 %v3979, 1e-05
        %v3996 = vadd.f32 %v3980, 1e-05
        %v3997 = vadd.f32 %v3981, 1e-05
        %v3998 = vadd.f32 %v3982, 1e-05
        %v3999 = vadd.f32 %v3983, 1e-05
        %v4000 = vadd.f32 %v3984, 1e-05
        %v4001 = vadd.f32 %v3985, 1e-05
        %v4002 = vadd.f32 %v3986, 1e-05
        %v4003 = vadd.f32 %v3987, 1e-05
        %v4004 = vadd.f32 %v3988, 1e-05
        %v4005 = vrsqrt.pop %v3989
        %v4006 = vmul.f32 %v4005, %v3989
        %v4007 = vmul.f32 %v4006, %v4005
        %v4008 = vmul.f32 0.5, %v4007
        %v4009 = vsub.f32 1.5, %v4008
        %v4010 = vmul.f32 %v4005, %v4009
        %vm4011 = vweird.f32 %v3989
        %vm4012 = vweird.f32 %v4005
        %vm4013 = vmor %vm4011, %vm4012
        %v4014 = vsel %vm4013, %v4005, %v4010
        %v4015 = vrsqrt.pop %v3990
        %v4016 = vmul.f32 %v4015, %v3990
        %v4017 = vmul.f32 %v4016, %v4015
        %v4018 = vmul.f32 0.5, %v4017
        %v4019 = vsub.f32 1.5, %v4018
        %v4020 = vmul.f32 %v4015, %v4019
        %vm4021 = vweird.f32 %v3990
        %vm4022 = vweird.f32 %v4015
        %vm4023 = vmor %vm4021, %vm4022
        %v4024 = vsel %vm4023, %v4015, %v4020
        %v4025 = vrsqrt.pop %v3991
        %v4026 = vmul.f32 %v4025, %v3991
        %v4027 = vmul.f32 %v4026, %v4025
        %v4028 = vmul.f32 0.5, %v4027
        %v4029 = vsub.f32 1.5, %v4028
        %v4030 = vmul.f32 %v4025, %v4029
        %vm4031 = vweird.f32 %v3991
        %vm4032 = vweird.f32 %v4025
        %vm4033 = vmor %vm4031, %vm4032
        %v4034 = vsel %vm4033, %v4025, %v4030
        %v4035 = vrsqrt.pop %v3992
        %v4036 = vmul.f32 %v4035, %v3992
        %v4037 = vmul.f32 %v4036, %v4035
        %v4038 = vmul.f32 0.5, %v4037
        %v4039 = vsub.f32 1.5, %v4038
        %v4040 = vmul.f32 %v4035, %v4039
        %vm4041 = vweird.f32 %v3992
        %vm4042 = vweird.f32 %v4035
        %vm4043 = vmor %vm4041, %vm4042
        %v4044 = vsel %vm4043, %v4035, %v4040
        %v4045 = vrsqrt.pop %v3993
        %v4046 = vmul.f32 %v4045, %v3993
        %v4047 = vmul.f32 %v4046, %v4045
        %v4048 = vmul.f32 0.5, %v4047
        %v4049 = vsub.f32 1.5, %v4048
        %v4050 = vmul.f32 %v4045, %v4049
        %vm4051 = vweird.f32 %v3993
        %vm4052 = vweird.f32 %v4045
        %vm4053 = vmor %vm4051, %vm4052
        %v4054 = vsel %vm4053, %v4045, %v4050
        %v4055 = vrsqrt.pop %v3994
        %v4056 = vmul.f32 %v4055, %v3994
        %v4057 = vmul.f32 %v4056, %v4055
        %v4058 = vmul.f32 0.5, %v4057
        %v4059 = vsub.f32 1.5, %v4058
        %v4060 = vmul.f32 %v4055, %v4059
        %vm4061 = vweird.f32 %v3994
        %vm4062 = vweird.f32 %v4055
        %vm4063 = vmor %vm4061, %vm4062
        %v4064 = vsel %vm4063, %v4055, %v4060
        %v4065 = vrsqrt.pop %v3995
        %v4066 = vmul.f32 %v4065, %v3995
        %v4067 = vmul.f32 %v4066, %v4065
        %v4068 = vmul.f32 0.5, %v4067
        %v4069 = vsub.f32 1.5, %v4068
        %v4070 = vmul.f32 %v4065, %v4069
        %vm4071 = vweird.f32 %v3995
        %vm4072 = vweird.f32 %v4065
        %vm4073 = vmor %vm4071, %vm4072
        %v4074 = vsel %vm4073, %v4065, %v4070
        %v4075 = vrsqrt.pop %v3996
        %v4076 = vmul.f32 %v4075, %v3996
        %v4077 = vmul.f32 %v4076, %v4075
        %v4078 = vmul.f32 0.5, %v4077
        %v4079 = vsub.f32 1.5, %v4078
        %v4080 = vmul.f32 %v4075, %v4079
        %vm4081 = vweird.f32 %v3996
        %vm4082 = vweird.f32 %v4075
        %vm4083 = vmor %vm4081, %vm4082
        %v4084 = vsel %vm4083, %v4075, %v4080
        %v4085 = vrsqrt.pop %v3997
        %v4086 = vmul.f32 %v4085, %v3997
        %v4087 = vmul.f32 %v4086, %v4085
        %v4088 = vmul.f32 0.5, %v4087
        %v4089 = vsub.f32 1.5, %v4088
        %v4090 = vmul.f32 %v4085, %v4089
        %vm4091 = vweird.f32 %v3997
        %vm4092 = vweird.f32 %v4085
        %vm4093 = vmor %vm4091, %vm4092
        %v4094 = vsel %vm4093, %v4085, %v4090
        %v4095 = vrsqrt.pop %v3998
        %v4096 = vmul.f32 %v4095, %v3998
        %v4097 = vmul.f32 %v4096, %v4095
        %v4098 = vmul.f32 0.5, %v4097
        %v4099 = vsub.f32 1.5, %v4098
        %v4100 = vmul.f32 %v4095, %v4099
        %vm4101 = vweird.f32 %v3998
        %vm4102 = vweird.f32 %v4095
        %vm4103 = vmor %vm4101, %vm4102
        %v4104 = vsel %vm4103, %v4095, %v4100
        %v4105 = vrsqrt.pop %v3999
        %v4106 = vmul.f32 %v4105, %v3999
        %v4107 = vmul.f32 %v4106, %v4105
        %v4108 = vmul.f32 0.5, %v4107
        %v4109 = vsub.f32 1.5, %v4108
        %v4110 = vmul.f32 %v4105, %v4109
        %vm4111 = vweird.f32 %v3999
        %vm4112 = vweird.f32 %v4105
        %vm4113 = vmor %vm4111, %vm4112
        %v4114 = vsel %vm4113, %v4105, %v4110
        %v4115 = vrsqrt.pop %v4000
        %v4116 = vmul.f32 %v4115, %v4000
        %v4117 = vmul.f32 %v4116, %v4115
        %v4118 = vmul.f32 0.5, %v4117
        %v4119 = vsub.f32 1.5, %v4118
        %v4120 = vmul.f32 %v4115, %v4119
        %vm4121 = vweird.f32 %v4000
        %vm4122 = vweird.f32 %v4115
        %vm4123 = vmor %vm4121, %vm4122
        %v4124 = vsel %vm4123, %v4115, %v4120
        %v4125 = vrsqrt.pop %v4001
        %v4126 = vmul.f32 %v4125, %v4001
        %v4127 = vmul.f32 %v4126, %v4125
        %v4128 = vmul.f32 0.5, %v4127
        %v4129 = vsub.f32 1.5, %v4128
        %v4130 = vmul.f32 %v4125, %v4129
        %vm4131 = vweird.f32 %v4001
        %vm4132 = vweird.f32 %v4125
        %vm4133 = vmor %vm4131, %vm4132
        %v4134 = vsel %vm4133, %v4125, %v4130
        %v4135 = vrsqrt.pop %v4002
        %v4136 = vmul.f32 %v4135, %v4002
        %v4137 = vmul.f32 %v4136, %v4135
        %v4138 = vmul.f32 0.5, %v4137
        %v4139 = vsub.f32 1.5, %v4138
        %v4140 = vmul.f32 %v4135, %v4139
        %vm4141 = vweird.f32 %v4002
        %vm4142 = vweird.f32 %v4135
        %vm4143 = vmor %vm4141, %vm4142
        %v4144 = vsel %vm4143, %v4135, %v4140
        %v4145 = vrsqrt.pop %v4003
        %v4146 = vmul.f32 %v4145, %v4003
        %v4147 = vmul.f32 %v4146, %v4145
        %v4148 = vmul.f32 0.5, %v4147
        %v4149 = vsub.f32 1.5, %v4148
        %v4150 = vmul.f32 %v4145, %v4149
        %vm4151 = vweird.f32 %v4003
        %vm4152 = vweird.f32 %v4145
        %vm4153 = vmor %vm4151, %vm4152
        %v4154 = vsel %vm4153, %v4145, %v4150
        %v4155 = vrsqrt.pop %v4004
        %v4156 = vmul.f32 %v4155, %v4004
        %v4157 = vmul.f32 %v4156, %v4155
        %v4158 = vmul.f32 0.5, %v4157
        %v4159 = vsub.f32 1.5, %v4158
        %v4160 = vmul.f32 %v4155, %v4159
        %vm4161 = vweird.f32 %v4004
        %vm4162 = vweird.f32 %v4155
        %vm4163 = vmor %vm4161, %vm4162
        %v4164 = vsel %vm4163, %v4155, %v4160
        %v4165 = vmul.f32 %v3909, %v4014
        %v4166 = vmul.f32 %v3910, %v4024
        %v4167 = vmul.f32 %v3911, %v4034
        %v4168 = vmul.f32 %v3912, %v4044
        %v4169 = vmul.f32 %v3913, %v4054
        %v4170 = vmul.f32 %v3914, %v4064
        %v4171 = vmul.f32 %v3915, %v4074
        %v4172 = vmul.f32 %v3916, %v4084
        %v4173 = vmul.f32 %v3917, %v4094
        %v4174 = vmul.f32 %v3918, %v4104
        %v4175 = vmul.f32 %v3919, %v4114
        %v4176 = vmul.f32 %v3920, %v4124
        %v4177 = vmul.f32 %v3921, %v4134
        %v4178 = vmul.f32 %v3922, %v4144
        %v4179 = vmul.f32 %v3923, %v4154
        %v4180 = vmul.f32 %v3924, %v4164
        %v4181 = vld [vmem:[%s4] sm:$0x1]
        %v4183 = vperm.slane %v4181, 0
        %v4185 = vmul.f32 %v4165, %v4183
        %v4186 = vmul.f32 %v4166, %v4183
        %v4187 = vmul.f32 %v4167, %v4183
        %v4188 = vmul.f32 %v4168, %v4183
        %v4189 = vmul.f32 %v4169, %v4183
        %v4190 = vmul.f32 %v4170, %v4183
        %v4191 = vmul.f32 %v4171, %v4183
        %v4192 = vmul.f32 %v4172, %v4183
        %v4193 = vmul.f32 %v4173, %v4183
        %v4194 = vmul.f32 %v4174, %v4183
        %v4195 = vmul.f32 %v4175, %v4183
        %v4196 = vmul.f32 %v4176, %v4183
        %v4197 = vmul.f32 %v4177, %v4183
        %v4198 = vmul.f32 %v4178, %v4183
        %v4199 = vmul.f32 %v4179, %v4183
        %v4200 = vmul.f32 %v4180, %v4183
        %v4201 = vld [vmem:[%s5] sm:$0x1]
        %v4203 = vperm.slane %v4201, 0
        %v4205 = vadd.f32 %v4185, %v4203
        %v4206 = vadd.f32 %v4186, %v4203
        %v4207 = vadd.f32 %v4187, %v4203
        %v4208 = vadd.f32 %v4188, %v4203
        %v4209 = vadd.f32 %v4189, %v4203
        %v4210 = vadd.f32 %v4190, %v4203
        %v4211 = vadd.f32 %v4191, %v4203
        %v4212 = vadd.f32 %v4192, %v4203
        %v4213 = vadd.f32 %v4193, %v4203
        %v4214 = vadd.f32 %v4194, %v4203
        %v4215 = vadd.f32 %v4195, %v4203
        %v4216 = vadd.f32 %v4196, %v4203
        %v4217 = vadd.f32 %v4197, %v4203
        %v4218 = vadd.f32 %v4198, %v4203
        %v4219 = vadd.f32 %v4199, %v4203
        %v4220 = vadd.f32 %v4200, %v4203
        %4221 = vst [vmem:[%s390] sm:$0xff] %v4205
        %4222 = vst [vmem:[%s390 + $0x8] sm:$0xff] %v4206
        %4223 = vst [vmem:[%s390 + $0x10] sm:$0xff] %v4207
        %4224 = vst [vmem:[%s390 + $0x18] sm:$0xff] %v4208
        %4225 = vst [vmem:[%s390 + $0x20] sm:$0xff] %v4209
        %4226 = vst [vmem:[%s390 + $0x28] sm:$0xff] %v4210
        %4227 = vst [vmem:[%s390 + $0x30] sm:$0xff] %v4211
        %4228 = vst [vmem:[%s390 + $0x38] sm:$0xff] %v4212
        %4229 = vst [vmem:[%s390 + $0x40] sm:$0xff] %v4213
        %4230 = vst [vmem:[%s390 + $0x48] sm:$0xff] %v4214
        %4231 = vst [vmem:[%s390 + $0x50] sm:$0xff] %v4215
        %4232 = vst [vmem:[%s390 + $0x58] sm:$0xff] %v4216
        %4233 = vst [vmem:[%s390 + $0x60] sm:$0xff] %v4217
        %4234 = vst [vmem:[%s390 + $0x68] sm:$0xff] %v4218
        %4235 = vst [vmem:[%s390 + $0x70] sm:$0xff] %v4219
        %4236 = vst [vmem:[%s390 + $0x78] sm:$0xff] %v4220
        %s4237 = sand.u32 %s190, 1
        %s4238 = scalar_lea.sflag [#allocation8], %s4237
        %s4239 = sand.u32 %s190, 1
        %s4240 = smul.addr %s4239, 128
        %s4241 = scalar_lea.vmem [#allocation14], %s4240
        %s4242 = sand.u32 %s218, 1
        %s4243 = scalar_lea.sflag [#allocation16], %s4242
        %s4244 = sand.u32 %s218, 1
        %s4245 = smul.addr %s4244, 256
        %s4246 = scalar_lea.vmem [#allocation15], %s4245
        // Predicated region
        $region65: #{tpu_custom_call.1} parent=43 // pred_check
          %p4247 = pneg %p200
        $region66: #{tpu_custom_call.1} parent=43 // pred_check_branch
          %4249 = sbr.rel (%p4247) target = $region68
        $region67: #{tpu_custom_call.1} parent=43 // pred_region
          %s4250 = smul.u32 16, %s37
          %4252 = vsyncadd %s4238, 0
          %s4253 = smul.addr %s36, 32
          %s4254 = sadd.s32 %s4250, %s4253
          %s4255 = smul.addr %s4254, 8
          %s4256 = scalar_lea.hbm %s6, %s4255
          %s4257 = sshll.u32 %s4241, 4
          %s4258 = int_to_ptr.vmem [resolvable:$true] %s4257
          %s4259 = sshll.u32 %s4256, 4
          %s4260 = int_to_ptr.hbm [resolvable:$true] %s4259
          %4265 = dma.vmem_to_hbm [thread:$0]  %s4258, 2048, %s4260, %s4238, 128, 128, 8
        $region68: #{tpu_custom_call.1} parent=43 // pred_fallthru
          _
        // Predicated region
        $region69: #{tpu_custom_call.1} parent=43 // pred_check
          %p4266 = pneg %p228
        $region70: #{tpu_custom_call.1} parent=43 // pred_check_branch
          %4268 = sbr.rel (%p4266) target = $region72
        $region71: #{tpu_custom_call.1} parent=43 // pred_region
          #allocation18 [shape = 'u32[6]{0}', space=smem, size = 0x18, scoped, tag = 'DMA stride descriptor']
          %s4269 = smul.u32 16, %s37
          %4271 = vsyncadd %s4243, 0
          %s4272 = smul.addr %s4269, 2
          %s4273 = smul.addr %s36, 64
          %s4274 = sadd.s32 %s4272, %s4273
          %s4275 = smul.addr %s4274, 4
          %s4276 = scalar_lea.hbm %s7, %s4275
          %s4278 = sshll.u32 1, 14
          %s4279 = sxor.u32 4294967295, %s4278
          %s4282 = sshll.u32 7, 18
          %s4283 = sxor.u32 4294967295, %s4282
          %s4284 = sand.u32 0, %s4283
          %s4286 = sor.u32 %s4284, 0
          %s4287 = sshll.u32 %s4246, 4
          %s4288 = int_to_ptr.vmem [resolvable:$true] %s4287
          %s4289 = sshll.u32 %s4276, 4
          %s4290 = int_to_ptr.hbm [resolvable:$true] %s4289
          %4296 = sst [smem:[#allocation18]] 2048
          %s4297 = scalar_lea.smem [#allocation18], 1
          %4298 = sst [smem:[%s4297]] 8192
          %s4299 = scalar_lea.smem [#allocation18], 2
          %4300 = sst [smem:[%s4299]] 16
          %s4301 = scalar_lea.smem [#allocation18], 3
          %4302 = sst [smem:[%s4301]] 128
          %s4303 = scalar_lea.smem [#allocation18], 4
          %4304 = sst [smem:[%s4303]] 128
          %s4305 = scalar_lea.smem [#allocation18], 5
          %4306 = sst [smem:[%s4305]] 8
          %4308 = dma.general %s4288, 4096, %s4290, %s4243, [#allocation17], [#allocation18], %s4286, 0
        $region72: #{tpu_custom_call.1} parent=43 // pred_fallthru
          _
      $region44: #{tpu_custom_call.1} parent=5 // pred_fallthru
        _
      %p4309 = scmp.le.s32.totalorder 2, %s27
      // Predicated region
      $region73: #{tpu_custom_call.1} parent=5 // pred_check
        %p4310 = pneg %p4309
      $region74: #{tpu_custom_call.1} parent=5 // pred_check_branch
        %4312 = sbr.rel (%p4310) target = $region76
      $region75: #{tpu_custom_call.1} parent=5 // pred_region
        %s4313 = ssub.s32 %s27, 2
        // Predicated region
        $region77: #{tpu_custom_call.1} parent=75 // pred_check
          %p4314 = pneg %p206
        $region78: #{tpu_custom_call.1} parent=75 // pred_check_branch
          %4316 = sbr.rel (%p4314) target = $region80
        $region79: #{tpu_custom_call.1} parent=75 // pred_region
          %s4317 = sand.u32 %s191, 1
          %s4318 = scalar_lea.sflag [#allocation8], %s4317
          %s4319 = sand.u32 %s191, 1
          %s4320 = smul.addr %s4319, 128
          %s4321 = scalar_lea.vmem [#allocation14], %s4320
          %4323 = dma.done %s4318, 2048
        $region80: #{tpu_custom_call.1} parent=75 // pred_fallthru
          _
        // Predicated region
        $region81: #{tpu_custom_call.1} parent=75 // pred_check
          %p4324 = pneg %p234
        $region82: #{tpu_custom_call.1} parent=75 // pred_check_branch
          %4326 = sbr.rel (%p4324) target = $region84
        $region83: #{tpu_custom_call.1} parent=75 // pred_region
          %s4327 = sand.u32 %s219, 1
          %s4328 = scalar_lea.sflag [#allocation16], %s4327
          %s4329 = sand.u32 %s219, 1
          %s4330 = smul.addr %s4329, 256
          %s4331 = scalar_lea.vmem [#allocation15], %s4330
          %4333 = dma.done %s4328, 4096
        $region84: #{tpu_custom_call.1} parent=75 // pred_fallthru
          _
      $region76: #{tpu_custom_call.1} parent=5 // pred_fallthru
        _
    $region6: #{tpu_custom_call.1} parent=1 // loop_footer
      %s31 = sadd.s32 1, %s27
    $region7: #{tpu_custom_call.1} parent=1 // loop_footer_branch
      %26 = sbr.rel target = $region3
    $region8: #{tpu_custom_call.1} parent=1 // loop_exit
      _
    %4334 = vsyncpa [#allocation7], 1
    %s4335 = scalar_lea.sflag [#allocation7], 1
    %4336 = vsyncpa %s4335, 1
    %4337 = vsyncpa [#allocation10], 1
    %s4338 = scalar_lea.sflag [#allocation10], 1
    %4339 = vsyncpa %s4338, 1
    %4340 = vsyncpa [#allocation13], 1
    %4341 = vsyncpa [#allocation8], 1
    %s4342 = scalar_lea.sflag [#allocation8], 1
    %4343 = vsyncpa %s4342, 1
    %4344 = vsyncpa [#allocation16], 1
    %s4345 = scalar_lea.sflag [#allocation16], 1
    %4346 = vsyncpa %s4345, 1

</llo_original>
